<compile_context>
chip_gen: v5e
topology: v5e:2x2
jax: 0.10.0
libtpu: 0.0.40
codegen_flags: <defaults>
</compile_context>

<pallas_src>
import jax
import jax.numpy as jnp
from jax.experimental import pallas as pl
from jax.experimental.pallas import tpu as pltpu

BN_EPS = 1e-3  # change_default_args(eps=0.001)(nn.BatchNorm2d)

# TODO(synk): BatchNorm is implemented in inference mode (running stats); training-mode
# batch statistics are not modeled (the PyTorch forward's `training` arg is unused too).


def _round_up(x, m):
    return ((x + m - 1) // m) * m


def rcnn_kernel(x_ref, w1_ref, b1_ref, w2_ref, b2_ref, wh_ref, bh_ref, out_ref):
    # fc_layer1 (1x1 conv, BN folded into weights) + ReLU.  bf16 MXU, f32 accumulate.
    h1 = jnp.dot(x_ref[...], w1_ref[...], preferred_element_type=jnp.float32)
    h1 = jnp.maximum(h1 + b1_ref[...], 0.0).astype(jnp.bfloat16)

    # fc_layer2 (1x1 conv, BN folded) + ReLU
    h2 = jnp.dot(h1, w2_ref[...], preferred_element_type=jnp.float32)
    h2 = jnp.maximum(h2 + b2_ref[...], 0.0).astype(jnp.bfloat16)

    # fused heads: [conv_box | conv_cls | conv_dir_cls] -> one 128-lane-padded matmul,
    # f32 bias add + lane-dense f32 store.
    out_ref[...] = (jnp.dot(h2, wh_ref[...], preferred_element_type=jnp.float32)
                    + bh_ref[...])


def init_params(key, input_channels, num_class, box_code_size,
                encode_background_as_zeros=True):
    F = 7 * 7 * input_channels
    num_cls = num_class if encode_background_as_zeros else num_class + 1
    ks = jax.random.split(key, 16)

    def w(k, i, o):
        return jax.random.normal(k, (i, o), jnp.float32) / jnp.sqrt(jnp.float32(i))

    params = {
        'w1': w(ks[0], F, 1024),
        'b1': 0.01 * jax.random.normal(ks[1], (1, 1024)),
        'g1': 1.0 + 0.1 * jax.random.normal(ks[2], (1, 1024)),
        'be1': 0.1 * jax.random.normal(ks[3], (1, 1024)),
        'm1': 0.1 * jax.random.normal(ks[4], (1, 1024)),
        'v1': 1.0 + 0.5 * jnp.abs(jax.random.normal(ks[5], (1, 1024))),
        'w2': w(ks[6], 1024, 512),
        'b2': 0.01 * jax.random.normal(ks[7], (1, 512)),
        'g2': 1.0 + 0.1 * jax.random.normal(ks[8], (1, 512)),
        'be2': 0.1 * jax.random.normal(ks[9], (1, 512)),
        'm2': 0.1 * jax.random.normal(ks[10], (1, 512)),
        'v2': 1.0 + 0.5 * jnp.abs(jax.random.normal(ks[11], (1, 512))),
        'wb': w(ks[12], 512, box_code_size),
        'bb': jnp.zeros((1, box_code_size)),
        'wc': w(ks[13], 512, num_cls),
        'bc': jnp.zeros((1, num_cls)),
        'wd': w(ks[14], 512, 2),
        'bd': jnp.zeros((1, 2)),
    }
    return {k: v.astype(jnp.float32) for k, v in params.items()}


def rcnn_forward(fuse_props, near_props, params, input_channels, tm=512):
    # props = cat([near, fuse], dim=1).view(-1, 7*7*C, 1, 1)
    if near_props is not None:
        props = jnp.concatenate([near_props, fuse_props], axis=1)
    else:
        props = fuse_props
    F = 7 * 7 * input_channels
    x = props.reshape(-1, F).astype(jnp.float32)
    M = x.shape[0]
    p = params

    # ---- fold BatchNorm into the conv weights/biases (wrapper-side, traced once) ----
    s1 = p['g1'] * jax.lax.rsqrt(p['v1'] + BN_EPS)          # (1, 1024)
    w1f = p['w1'] * s1                                      # (F, 1024)
    b1f = (p['b1'] - p['m1']) * s1 + p['be1']               # (1, 1024)
    s2 = p['g2'] * jax.lax.rsqrt(p['v2'] + BN_EPS)          # (1, 512)
    w2f = p['w2'] * s2                                      # (1024, 512)
    b2f = (p['b2'] - p['m2']) * s2 + p['be2']               # (1, 512)

    # ---- fuse the three heads into one matmul, padded to 128 output lanes ----
    box_dim = p['wb'].shape[1]
    cls_dim = p['wc'].shape[1]
    dir_dim = p['wd'].shape[1]
    head_dim = box_dim + cls_dim + dir_dim
    HP = _round_up(head_dim, 128)
    wh = jnp.pad(jnp.concatenate([p['wb'], p['wc'], p['wd']], axis=1),
                 ((0, 0), (0, HP - head_dim)))              # (512, HP)
    bh = jnp.pad(jnp.concatenate([p['bb'], p['bc'], p['bd']], axis=1),
                 ((0, 0), (0, HP - head_dim)))              # (1, HP)

    # ---- pad contraction dim F to a multiple of 128 ----
    Fp = _round_up(F, 128)
    if Fp != F:
        x = jnp.pad(x, ((0, 0), (0, Fp - F)))
        w1f = jnp.pad(w1f, ((0, Fp - F), (0, 0)))
    # TODO(synk): for very large F (49*C >= ~8k) on v7x (64 MiB VMEM), split Fp into a
    # second "arbitrary" grid axis with a VMEM f32 accumulator instead of holding all of w1.

    # ---- bf16 MXU operands; biases stay f32 (f32 accumulate + bias + ReLU in-kernel) ----
    x = x.astype(jnp.bfloat16)
    w1f = w1f.astype(jnp.bfloat16)
    w2f = w2f.astype(jnp.bfloat16)
    wh = wh.astype(jnp.bfloat16)

    # ---- row tile: amortize per-step overhead, avoid over-padding tiny batches,
    #      and keep >=2 grid steps for large M so both v7x TensorCores get work ----
    TM = max(16, min(tm, _round_up(M, 16)))
    if M >= 256 and _round_up(M, TM) // TM < 2:
        TM = max(128, _round_up(pl.cdiv(M, 2), 16))
    Mp = _round_up(M, TM)
    if Mp != M:
        x = jnp.pad(x, ((0, Mp - M), (0, 0)))

    param_list = [w1f, b1f, w2f, b2f, wh, bh]

    flops = 2 * Mp * (Fp * 1024 + 1024 * 512 + 512 * HP)
    bytes_accessed = (2 * (Mp * Fp + Fp * 1024 + 1024 * 512 + 512 * HP)   # bf16
                      + 4 * (1024 + 512 + HP + Mp * HP))                  # f32

    # VMEM budget (params counted as if double-buffered so the limit is safe either way).
    vmem_bytes = (2 * TM * Fp * 2                                  # streamed x tiles (bf16)
                  + 2 * TM * HP * 4                                # streamed out tiles (f32)
                  + 2 * (Fp * 1024 + 1024 * 512 + 512 * HP) * 2    # bf16 weights
                  + 2 * (1024 + 512 + HP) * 4                      # f32 biases
                  + TM * (1024 + 512) * (4 + 2))                   # h1/h2 f32 + bf16 copies
    vmem_limit = min(int(vmem_bytes * 1.3) + (4 << 20), 128 << 20)

    def call(single_buffer_params):
        if single_buffer_params:
            # Constant weights/biases: index_map is always (0, 0) -> single-buffer them.
            param_specs = [pl.BlockSpec(a.shape, lambda i: (0, 0),
                                        pipeline_mode=pl.Buffered(1))
                           for a in param_list]
        else:
            param_specs = [pl.BlockSpec(a.shape, lambda i: (0, 0)) for a in param_list]
        return pl.pallas_call(
            rcnn_kernel,
            grid=(Mp // TM,),
            in_specs=[pl.BlockSpec((TM, Fp), lambda i: (i, 0))] + param_specs,
            out_specs=pl.BlockSpec((TM, HP), lambda i: (i, 0)),
            out_shape=jax.ShapeDtypeStruct((Mp, HP), jnp.float32),
            compiler_params=pltpu.CompilerParams(
                dimension_semantics=("parallel",),
                vmem_limit_bytes=vmem_limit),
            cost_estimate=pl.CostEstimate(flops=flops, transcendentals=0,
                                          bytes_accessed=bytes_accessed),
        )(x, *param_list)

    try:
        out = call(True)
    except Exception:
        # pipeline_mode=pl.Buffered(1) not supported on this JAX build; fall back to
        # default double-buffered params (correctness identical, slightly more VMEM).
        out = call(False)

    out = out[:M]                                            # drop padded rows
    box = out[:, :box_dim][None]                             # (1, M, box_code_size)
    cls_ = out[:, box_dim:box_dim + cls_dim][None]           # (1, M, num_cls)
    dircls = out[:, box_dim + cls_dim:head_dim][None]        # (1, M, 2)
    return {'box_preds': box, 'cls_preds': cls_, 'dir_cls_preds': dircls}


def rcnn_reference(fuse_props, near_props, params, input_channels):
    """Pure-JAX f32 reference mirroring the PyTorch forward (eval-mode BN, unfolded)."""
    if near_props is not None:
        props = jnp.concatenate([near_props, fuse_props], axis=1)
    else:
        props = fuse_props
    x = props.reshape(-1, 7 * 7 * input_channels).astype(jnp.float32)
    p = params

    def bn(h, g, be, m, v):
        return (h - m) * g / jnp.sqrt(v + BN_EPS) + be

    h1 = jnp.maximum(bn(x @ p['w1'] + p['b1'], p['g1'], p['be1'], p['m1'], p['v1']), 0.0)
    h2 = jnp.maximum(bn(h1 @ p['w2'] + p['b2'], p['g2'], p['be2'], p['m2'], p['v2']), 0.0)
    return {
        'box_preds': (h2 @ p['wb'] + p['bb'])[None],
        'cls_preds': (h2 @ p['wc'] + p['bc'])[None],
        'dir_cls_preds': (h2 @ p['wd'] + p['bd'])[None],
    }


if __name__ == "__main__":
    key = jax.random.PRNGKey(0)
    k_fuse, k_near, k_params = jax.random.split(key, 3)

    # Module config (small but consistent with the forward pass)
    input_channels = 4
    num_class = 3
    box_code_size = 7
    n_props = 4   # after concat+view -> M = 2 * n_props = 8 flattened proposals

    fuse_props = jax.random.normal(k_fuse, (n_props, input_channels, 7, 7), jnp.float32)
    near_props = jax.random.normal(k_near, (n_props, input_channels, 7, 7), jnp.float32)

    params = init_params(k_params, input_channels, num_class, box_code_size,
                         encode_background_as_zeros=True)

    out = rcnn_forward(fuse_props, near_props, params, input_channels)
    out = jax.block_until_ready(out)

    ref = rcnn_reference(fuse_props, near_props, params, input_channels)
    # bf16 MXU operands (f32 accumulate) -> ~1e-2 relative error vs. the f32 reference.
    for name in ('box_preds', 'cls_preds', 'dir_cls_preds'):
        assert out[name].shape == ref[name].shape, (name, out[name].shape, ref[name].shape)
        assert jnp.allclose(out[name], ref[name], rtol=3e-2, atol=3e-2), name

    print("KERNEL_OK")
</pallas_src>

<mosaic_0001>
module attributes {stable_mosaic.version = 11 : i64} {
  func.func @rcnn_kernel(%arg0: i32, %arg1: memref<16x256xbf16, #tpu.memory_space<vmem>>, %arg2: memref<256x1024xbf16, #tpu.memory_space<vmem>>, %arg3: memref<1x1024xf32, #tpu.memory_space<vmem>>, %arg4: memref<1024x512xbf16, #tpu.memory_space<vmem>>, %arg5: memref<1x512xf32, #tpu.memory_space<vmem>>, %arg6: memref<512x128xbf16, #tpu.memory_space<vmem>>, %arg7: memref<1x128xf32, #tpu.memory_space<vmem>>, %arg8: memref<16x128xf32, #tpu.memory_space<vmem>>) attributes {dimension_semantics = [#tpu.dimension_semantics<parallel>], iteration_bounds = array<i64: 1>, scalar_prefetch = 0 : i64, scratch_operands = 0 : i64, tpu.core_type = #tpu.core_type<tc>, window_params = [{transform_indices = @transform_0, window_bounds = array<i64: 16, 256>}, {pipeline_mode = #tpu.pipeline_mode<synchronous>, transform_indices = @transform_1, window_bounds = array<i64: 256, 1024>}, {pipeline_mode = #tpu.pipeline_mode<synchronous>, transform_indices = @transform_2, window_bounds = array<i64: 1, 1024>}, {pipeline_mode = #tpu.pipeline_mode<synchronous>, transform_indices = @transform_3, window_bounds = array<i64: 1024, 512>}, {pipeline_mode = #tpu.pipeline_mode<synchronous>, transform_indices = @transform_4, window_bounds = array<i64: 1, 512>}, {pipeline_mode = #tpu.pipeline_mode<synchronous>, transform_indices = @transform_5, window_bounds = array<i64: 512, 128>}, {pipeline_mode = #tpu.pipeline_mode<synchronous>, transform_indices = @transform_6, window_bounds = array<i64: 1, 128>}, {transform_indices = @transform_7, window_bounds = array<i64: 16, 128>}]} {
    %c0 = arith.constant 0 : index
    %c0_0 = arith.constant 0 : index
    %0 = vector.load %arg1[%c0, %c0_0] : memref<16x256xbf16, #tpu.memory_space<vmem>>, vector<16x256xbf16>
    %c0_1 = arith.constant 0 : index
    %c0_2 = arith.constant 0 : index
    %1 = vector.load %arg2[%c0_1, %c0_2] : memref<256x1024xbf16, #tpu.memory_space<vmem>>, vector<256x1024xbf16>
    %cst = arith.constant dense<0.000000e+00> : vector<16x1024xf32>
    %2 = tpu.matmul %0, %1, %cst {dimension_numbers = #tpu.dot_dimension_numbers<[1], [0], [0], [1], [0, 0, 1, 1], [], []>} : vector<16x256xbf16>, vector<256x1024xbf16>, vector<16x1024xf32> -> vector<16x1024xf32>
    %c0_3 = arith.constant 0 : index
    %c0_4 = arith.constant 0 : index
    %3 = vector.load %arg3[%c0_3, %c0_4] : memref<1x1024xf32, #tpu.memory_space<vmem>>, vector<1x1024xf32>
    %4 = vector.broadcast %3 : vector<1x1024xf32> to vector<16x1024xf32>
    %5 = arith.addf %2, %4 : vector<16x1024xf32>
    %cst_5 = arith.constant 0.000000e+00 : f32
    %6 = vector.broadcast %cst_5 : f32 to vector<16x1024xf32>
    %7 = arith.maximumf %5, %6 : vector<16x1024xf32>
    %8 = arith.truncf %7 : vector<16x1024xf32> to vector<16x1024xbf16>
    %c0_6 = arith.constant 0 : index
    %c0_7 = arith.constant 0 : index
    %9 = vector.load %arg4[%c0_6, %c0_7] : memref<1024x512xbf16, #tpu.memory_space<vmem>>, vector<1024x512xbf16>
    %cst_8 = arith.constant dense<0.000000e+00> : vector<16x512xf32>
    %10 = tpu.matmul %8, %9, %cst_8 {dimension_numbers = #tpu.dot_dimension_numbers<[1], [0], [0], [1], [0, 0, 1, 1], [], []>} : vector<16x1024xbf16>, vector<1024x512xbf16>, vector<16x512xf32> -> vector<16x512xf32>
    %c0_9 = arith.constant 0 : index
    %c0_10 = arith.constant 0 : index
    %11 = vector.load %arg5[%c0_9, %c0_10] : memref<1x512xf32, #tpu.memory_space<vmem>>, vector<1x512xf32>
    %12 = vector.broadcast %11 : vector<1x512xf32> to vector<16x512xf32>
    %13 = arith.addf %10, %12 : vector<16x512xf32>
    %cst_11 = arith.constant 0.000000e+00 : f32
    %14 = vector.broadcast %cst_11 : f32 to vector<16x512xf32>
    %15 = arith.maximumf %13, %14 : vector<16x512xf32>
    %16 = arith.truncf %15 : vector<16x512xf32> to vector<16x512xbf16>
    %c0_12 = arith.constant 0 : index
    %c0_13 = arith.constant 0 : index
    %17 = vector.load %arg6[%c0_12, %c0_13] : memref<512x128xbf16, #tpu.memory_space<vmem>>, vector<512x128xbf16>
    %cst_14 = arith.constant dense<0.000000e+00> : vector<16x128xf32>
    %18 = tpu.matmul %16, %17, %cst_14 {dimension_numbers = #tpu.dot_dimension_numbers<[1], [0], [0], [1], [0, 0, 1, 1], [], []>} : vector<16x512xbf16>, vector<512x128xbf16>, vector<16x128xf32> -> vector<16x128xf32>
    %c0_15 = arith.constant 0 : index
    %c0_16 = arith.constant 0 : index
    %19 = vector.load %arg7[%c0_15, %c0_16] : memref<1x128xf32, #tpu.memory_space<vmem>>, vector<1x128xf32>
    %20 = vector.broadcast %19 : vector<1x128xf32> to vector<16x128xf32>
    %21 = arith.addf %18, %20 : vector<16x128xf32>
    %c0_17 = arith.constant 0 : index
    %c0_18 = arith.constant 0 : index
    %22 = vector.load %arg8[%c0_17, %c0_18] : memref<16x128xf32, #tpu.memory_space<vmem>>, vector<16x128xf32>
    tpu.vector_store %arg8[%c0_17, %c0_18], %21 {strides = array<i32>} : memref<16x128xf32, #tpu.memory_space<vmem>>, vector<16x128xf32>,
    return
  }
  func.func @transform_0(%arg0: i32) -> (i32, i32) {
    %c0_i32 = arith.constant 0 : i32
    %c0_i32_0 = arith.constant 0 : i32
    return %arg0, %c0_i32 : i32, i32
  }
  func.func @transform_1(%arg0: i32) -> (i32, i32) {
    %c0_i32 = arith.constant 0 : i32
    %c0_i32_0 = arith.constant 0 : i32
    %c0_i32_1 = arith.constant 0 : i32
    return %c0_i32, %c0_i32_0 : i32, i32
  }
  func.func @transform_2(%arg0: i32) -> (i32, i32) {
    %c0_i32 = arith.constant 0 : i32
    %c0_i32_0 = arith.constant 0 : i32
    %c0_i32_1 = arith.constant 0 : i32
    return %c0_i32, %c0_i32_0 : i32, i32
  }
  func.func @transform_3(%arg0: i32) -> (i32, i32) {
    %c0_i32 = arith.constant 0 : i32
    %c0_i32_0 = arith.constant 0 : i32
    %c0_i32_1 = arith.constant 0 : i32
    return %c0_i32, %c0_i32_0 : i32, i32
  }
  func.func @transform_4(%arg0: i32) -> (i32, i32) {
    %c0_i32 = arith.constant 0 : i32
    %c0_i32_0 = arith.constant 0 : i32
    %c0_i32_1 = arith.constant 0 : i32
    return %c0_i32, %c0_i32_0 : i32, i32
  }
  func.func @transform_5(%arg0: i32) -> (i32, i32) {
    %c0_i32 = arith.constant 0 : i32
    %c0_i32_0 = arith.constant 0 : i32
    %c0_i32_1 = arith.constant 0 : i32
    return %c0_i32, %c0_i32_0 : i32, i32
  }
  func.func @transform_6(%arg0: i32) -> (i32, i32) {
    %c0_i32 = arith.constant 0 : i32
    %c0_i32_0 = arith.constant 0 : i32
    %c0_i32_1 = arith.constant 0 : i32
    return %c0_i32, %c0_i32_0 : i32, i32
  }
  func.func @transform_7(%arg0: i32) -> (i32, i32) {
    %c0_i32 = arith.constant 0 : i32
    %c0_i32_0 = arith.constant 0 : i32
    return %arg0, %c0_i32 : i32, i32
  }
}

module attributes {stable_mosaic.version = 11 : i64} {
  func.func @rcnn_kernel(%arg0: i32, %arg1: memref<16x256xbf16, #tpu.memory_space<vmem>>, %arg2: memref<256x1024xbf16, #tpu.memory_space<vmem>>, %arg3: memref<1x1024xf32, #tpu.memory_space<vmem>>, %arg4: memref<1024x512xbf16, #tpu.memory_space<vmem>>, %arg5: memref<1x512xf32, #tpu.memory_space<vmem>>, %arg6: memref<512x128xbf16, #tpu.memory_space<vmem>>, %arg7: memref<1x128xf32, #tpu.memory_space<vmem>>, %arg8: memref<16x128xf32, #tpu.memory_space<vmem>>) attributes {dimension_semantics = [#tpu.dimension_semantics<parallel>], iteration_bounds = array<i64: 1>, scalar_prefetch = 0 : i64, scratch_operands = 0 : i64, tpu.core_type = #tpu.core_type<tc>, window_params = [{transform_indices = @transform_0, window_bounds = array<i64: 16, 256>}, {pipeline_mode = #tpu.pipeline_mode<synchronous>, transform_indices = @transform_1, window_bounds = array<i64: 256, 1024>}, {pipeline_mode = #tpu.pipeline_mode<synchronous>, transform_indices = @transform_2, window_bounds = array<i64: 1, 1024>}, {pipeline_mode = #tpu.pipeline_mode<synchronous>, transform_indices = @transform_3, window_bounds = array<i64: 1024, 512>}, {pipeline_mode = #tpu.pipeline_mode<synchronous>, transform_indices = @transform_4, window_bounds = array<i64: 1, 512>}, {pipeline_mode = #tpu.pipeline_mode<synchronous>, transform_indices = @transform_5, window_bounds = array<i64: 512, 128>}, {pipeline_mode = #tpu.pipeline_mode<synchronous>, transform_indices = @transform_6, window_bounds = array<i64: 1, 128>}, {transform_indices = @transform_7, window_bounds = array<i64: 16, 128>}]} {
    %c0 = arith.constant 0 : index
    %c0_0 = arith.constant 0 : index
    %0 = vector.load %arg1[%c0, %c0_0] : memref<16x256xbf16, #tpu.memory_space<vmem>>, vector<16x256xbf16>
    %c0_1 = arith.constant 0 : index
    %c0_2 = arith.constant 0 : index
    %1 = vector.load %arg2[%c0_1, %c0_2] : memref<256x1024xbf16, #tpu.memory_space<vmem>>, vector<256x1024xbf16>
    %cst = arith.constant dense<0.000000e+00> : vector<16x1024xf32>
    %2 = tpu.matmul %0, %1, %cst {dimension_numbers = #tpu.dot_dimension_numbers<[1], [0], [0], [1], [0, 0, 1, 1], [], []>} : vector<16x256xbf16>, vector<256x1024xbf16>, vector<16x1024xf32> -> vector<16x1024xf32>
    %c0_3 = arith.constant 0 : index
    %c0_4 = arith.constant 0 : index
    %3 = vector.load %arg3[%c0_3, %c0_4] : memref<1x1024xf32, #tpu.memory_space<vmem>>, vector<1x1024xf32>
    %4 = vector.broadcast %3 : vector<1x1024xf32> to vector<16x1024xf32>
    %5 = arith.addf %2, %4 : vector<16x1024xf32>
    %cst_5 = arith.constant 0.000000e+00 : f32
    %6 = vector.broadcast %cst_5 : f32 to vector<16x1024xf32>
    %7 = arith.maximumf %5, %6 : vector<16x1024xf32>
    %8 = arith.truncf %7 : vector<16x1024xf32> to vector<16x1024xbf16>
    %c0_6 = arith.constant 0 : index
    %c0_7 = arith.constant 0 : index
    %9 = vector.load %arg4[%c0_6, %c0_7] : memref<1024x512xbf16, #tpu.memory_space<vmem>>, vector<1024x512xbf16>
    %cst_8 = arith.constant dense<0.000000e+00> : vector<16x512xf32>
    %10 = tpu.matmul %8, %9, %cst_8 {dimension_numbers = #tpu.dot_dimension_numbers<[1], [0], [0], [1], [0, 0, 1, 1], [], []>} : vector<16x1024xbf16>, vector<1024x512xbf16>, vector<16x512xf32> -> vector<16x512xf32>
    %c0_9 = arith.constant 0 : index
    %c0_10 = arith.constant 0 : index
    %11 = vector.load %arg5[%c0_9, %c0_10] : memref<1x512xf32, #tpu.memory_space<vmem>>, vector<1x512xf32>
    %12 = vector.broadcast %11 : vector<1x512xf32> to vector<16x512xf32>
    %13 = arith.addf %10, %12 : vector<16x512xf32>
    %cst_11 = arith.constant 0.000000e+00 : f32
    %14 = vector.broadcast %cst_11 : f32 to vector<16x512xf32>
    %15 = arith.maximumf %13, %14 : vector<16x512xf32>
    %16 = arith.truncf %15 : vector<16x512xf32> to vector<16x512xbf16>
    %c0_12 = arith.constant 0 : index
    %c0_13 = arith.constant 0 : index
    %17 = vector.load %arg6[%c0_12, %c0_13] : memref<512x128xbf16, #tpu.memory_space<vmem>>, vector<512x128xbf16>
    %cst_14 = arith.constant dense<0.000000e+00> : vector<16x128xf32>
    %18 = tpu.matmul %16, %17, %cst_14 {dimension_numbers = #tpu.dot_dimension_numbers<[1], [0], [0], [1], [0, 0, 1, 1], [], []>} : vector<16x512xbf16>, vector<512x128xbf16>, vector<16x128xf32> -> vector<16x128xf32>
    %c0_15 = arith.constant 0 : index
    %c0_16 = arith.constant 0 : index
    %19 = vector.load %arg7[%c0_15, %c0_16] : memref<1x128xf32, #tpu.memory_space<vmem>>, vector<1x128xf32>
    %20 = vector.broadcast %19 : vector<1x128xf32> to vector<16x128xf32>
    %21 = arith.addf %18, %20 : vector<16x128xf32>
    %c0_17 = arith.constant 0 : index
    %c0_18 = arith.constant 0 : index
    %22 = vector.load %arg8[%c0_17, %c0_18] : memref<16x128xf32, #tpu.memory_space<vmem>>, vector<16x128xf32>
    tpu.vector_store %arg8[%c0_17, %c0_18], %21 {strides = array<i32>} : memref<16x128xf32, #tpu.memory_space<vmem>>, vector<16x128xf32>,
    return
  }
  func.func @transform_0(%arg0: i32) -> (i32, i32) {
    %c0_i32 = arith.constant 0 : i32
    %c0_i32_0 = arith.constant 0 : i32
    return %arg0, %c0_i32 : i32, i32
  }
  func.func @transform_1(%arg0: i32) -> (i32, i32) {
    %c0_i32 = arith.constant 0 : i32
    %c0_i32_0 = arith.constant 0 : i32
    %c0_i32_1 = arith.constant 0 : i32
    return %c0_i32, %c0_i32_0 : i32, i32
  }
  func.func @transform_2(%arg0: i32) -> (i32, i32) {
    %c0_i32 = arith.constant 0 : i32
    %c0_i32_0 = arith.constant 0 : i32
    %c0_i32_1 = arith.constant 0 : i32
    return %c0_i32, %c0_i32_0 : i32, i32
  }
  func.func @transform_3(%arg0: i32) -> (i32, i32) {
    %c0_i32 = arith.constant 0 : i32
    %c0_i32_0 = arith.constant 0 : i32
    %c0_i32_1 = arith.constant 0 : i32
    return %c0_i32, %c0_i32_0 : i32, i32
  }
  func.func @transform_4(%arg0: i32) -> (i32, i32) {
    %c0_i32 = arith.constant 0 : i32
    %c0_i32_0 = arith.constant 0 : i32
    %c0_i32_1 = arith.constant 0 : i32
    return %c0_i32, %c0_i32_0 : i32, i32
  }
  func.func @transform_5(%arg0: i32) -> (i32, i32) {
    %c0_i32 = arith.constant 0 : i32
    %c0_i32_0 = arith.constant 0 : i32
    %c0_i32_1 = arith.constant 0 : i32
    return %c0_i32, %c0_i32_0 : i32, i32
  }
  func.func @transform_6(%arg0: i32) -> (i32, i32) {
    %c0_i32 = arith.constant 0 : i32
    %c0_i32_0 = arith.constant 0 : i32
    %c0_i32_1 = arith.constant 0 : i32
    return %c0_i32, %c0_i32_0 : i32, i32
  }
  func.func @transform_7(%arg0: i32) -> (i32, i32) {
    %c0_i32 = arith.constant 0 : i32
    %c0_i32_0 = arith.constant 0 : i32
    return %arg0, %c0_i32 : i32, i32
  }
}

</mosaic_0001>

<llo_original>
// kernel: tpu_custom_call.1
$region0: #{tpu_custom_call.1}
  #allocation0 [shape = 'u32[]', space=smem, size = 0x4, offset = 0x4, fixed_abs, tag = 'smem constant byte address 0x4 - core index']
  #allocation1 [shape = 'u32[72,128]{1,0:T(1,128)}', space=vmem, size = 0x9000, scoped, tag = 'internal scratch']
  %s0 = inlined_call_operand.hbm [shape: bf16[16,256], index: 0, kind: input, shape index: {}]
  %s1 = inlined_call_operand.hbm [shape: bf16[256,1024], index: 1, kind: input, shape index: {}]
  %s2 = inlined_call_operand.hbm [shape: f32[1,1024], index: 2, kind: input, shape index: {}]
  %s3 = inlined_call_operand.hbm [shape: bf16[1024,512], index: 3, kind: input, shape index: {}]
  %s4 = inlined_call_operand.hbm [shape: f32[1,512], index: 4, kind: input, shape index: {}]
  %s5 = inlined_call_operand.hbm [shape: bf16[512,128], index: 5, kind: input, shape index: {}]
  %s6 = inlined_call_operand.vmem [shape: f32[1,128], index: 6, kind: input, shape index: {}]
  %s7 = inlined_call_operand.hbm [shape: f32[16,128], index: 7, kind: output, shape index: {}]
  %s8 = sld [smem:[#allocation0]]
  $region62: #{tpu_custom_call.1} parent=0
    _
  %s10 = ssub.s32 1, %s8
  %s11 = scalar_select 0, %s10, %s8
  $region1: #{tpu_custom_call.1} parent=0
    #allocation2 [shape = 'u8[8192]{0}', space=vmem, size = 0x2000, scoped, tag = 'input window, operand 0, single buffered']
    #allocation3 [shape = 's32[1]{0}', space=sflag, size = 0x4, scoped, tag = 'scoped memory for tpu_custom_call.1']
    #allocation4 [shape = 's32[1]{0}', space=sflag, size = 0x4, scoped, tag = 'scoped memory for tpu_custom_call.1']
    #allocation5 [shape = 'u8[524288]{0}', space=vmem, size = 0x80000, scoped, tag = 'input window, operand 1, single buffered']
    #allocation6 [shape = 's32[1]{0}', space=sflag, size = 0x4, scoped, tag = 'scoped memory for tpu_custom_call.1']
    #allocation7 [shape = 'u8[4096]{0}', space=vmem, size = 0x1000, scoped, tag = 'input window, operand 2, single buffered']
    #allocation8 [shape = 'u8[1048576]{0}', space=vmem, size = 0x100000, scoped, tag = 'input window, operand 3, single buffered']
    #allocation9 [shape = 's32[1]{0}', space=sflag, size = 0x4, scoped, tag = 'scoped memory for tpu_custom_call.1']
    #allocation10 [shape = 'u8[2048]{0}', space=vmem, size = 0x800, scoped, tag = 'input window, operand 4, single buffered']
    #allocation11 [shape = 'u8[131072]{0}', space=vmem, size = 0x20000, scoped, tag = 'input window, operand 5, single buffered']
    #allocation12 [shape = 's32[1]{0}', space=sflag, size = 0x4, scoped, tag = 'scoped memory for tpu_custom_call.1']
    #allocation13 [shape = 'u8[8192]{0}', space=vmem, size = 0x2000, scoped, tag = 'output window, operand 0, single buffered']
    %12 = vsyncpa [#allocation3], 0
    %13 = vsyncpa [#allocation6], 0
    %14 = vsyncpa [#allocation9], 0
    %15 = vsyncpa [#allocation12], 0
    %16 = vsyncpa [#allocation4], 0
    // Predicated region
    $region2: #{tpu_custom_call.1} parent=1 // pred_check
      _
    $region3: #{tpu_custom_call.1} parent=1 // pred_check_branch
      %18 = sbr.rel (0) target = $region5
    $region4: #{tpu_custom_call.1} parent=1 // pred_region
      %20 = vsyncadd [#allocation3], 0
      %s21 = sshll.u32 %s0, 4
      %s22 = int_to_ptr.hbm [resolvable:$true] %s21
      %s23 = sshll.u32 [#allocation2], 4
      %s24 = int_to_ptr.vmem [resolvable:$true] %s23
      %29 = dma.hbm_to_vmem [thread:$0]  %s22, 256, %s24, [#allocation3], 128, 128, 8
    $region5: #{tpu_custom_call.1} parent=1 // pred_fallthru
      _
    // Predicated region
    $region6: #{tpu_custom_call.1} parent=1 // pred_check
      _
    $region7: #{tpu_custom_call.1} parent=1 // pred_check_branch
      %31 = sbr.rel (0) target = $region9
    $region8: #{tpu_custom_call.1} parent=1 // pred_region
      %33 = vsyncadd [#allocation6], 0
      %s34 = sshll.u32 %s1, 4
      %s35 = int_to_ptr.hbm [resolvable:$true] %s34
      %s36 = sshll.u32 [#allocation5], 4
      %s37 = int_to_ptr.vmem [resolvable:$true] %s36
      %42 = dma.hbm_to_vmem [thread:$0]  %s35, 16384, %s37, [#allocation6], 512, 512, 32
    $region9: #{tpu_custom_call.1} parent=1 // pred_fallthru
      _
    // Predicated region
    $region10: #{tpu_custom_call.1} parent=1 // pred_check
      _
    $region11: #{tpu_custom_call.1} parent=1 // pred_check_branch
      %44 = sbr.rel (0) target = $region13
    $region12: #{tpu_custom_call.1} parent=1 // pred_region
      %46 = vsyncadd [#allocation6], 0
      %s48 = sshll.u32 %s2, 4
      %s49 = int_to_ptr.hbm [resolvable:$true] %s48
      %s50 = sshll.u32 [#allocation7], 4
      %s51 = int_to_ptr.vmem [resolvable:$true] %s50
      %53 = dma.hbm_to_vmem [thread:$0]  %s49, 128, %s51, [#allocation6]
    $region13: #{tpu_custom_call.1} parent=1 // pred_fallthru
      _
    // Predicated region
    $region14: #{tpu_custom_call.1} parent=1 // pred_check
      _
    $region15: #{tpu_custom_call.1} parent=1 // pred_check_branch
      %55 = sbr.rel (0) target = $region17
    $region16: #{tpu_custom_call.1} parent=1 // pred_region
      %57 = vsyncadd [#allocation9], 0
      %s58 = sshll.u32 %s3, 4
      %s59 = int_to_ptr.hbm [resolvable:$true] %s58
      %s60 = sshll.u32 [#allocation8], 4
      %s61 = int_to_ptr.vmem [resolvable:$true] %s60
      %66 = dma.hbm_to_vmem [thread:$0]  %s59, 32768, %s61, [#allocation9], 256, 256, 16
    $region17: #{tpu_custom_call.1} parent=1 // pred_fallthru
      _
    // Predicated region
    $region18: #{tpu_custom_call.1} parent=1 // pred_check
      _
    $region19: #{tpu_custom_call.1} parent=1 // pred_check_branch
      %68 = sbr.rel (0) target = $region21
    $region20: #{tpu_custom_call.1} parent=1 // pred_region
      %70 = vsyncadd [#allocation9], 0
      %s72 = sshll.u32 %s4, 4
      %s73 = int_to_ptr.hbm [resolvable:$true] %s72
      %s74 = sshll.u32 [#allocation10], 4
      %s75 = int_to_ptr.vmem [resolvable:$true] %s74
      %77 = dma.hbm_to_vmem [thread:$0]  %s73, 64, %s75, [#allocation9]
    $region21: #{tpu_custom_call.1} parent=1 // pred_fallthru
      _
    // Predicated region
    $region22: #{tpu_custom_call.1} parent=1 // pred_check
      _
    $region23: #{tpu_custom_call.1} parent=1 // pred_check_branch
      %79 = sbr.rel (0) target = $region25
    $region24: #{tpu_custom_call.1} parent=1 // pred_region
      %81 = vsyncadd [#allocation12], 0
      %s82 = sshll.u32 %s5, 4
      %s83 = int_to_ptr.hbm [resolvable:$true] %s82
      %s84 = sshll.u32 [#allocation11], 4
      %s85 = int_to_ptr.vmem [resolvable:$true] %s84
      %90 = dma.hbm_to_vmem [thread:$0]  %s83, 4096, %s85, [#allocation12], 64, 64, 4
    $region25: #{tpu_custom_call.1} parent=1 // pred_fallthru
      _
    // Predicated region
    $region26: #{tpu_custom_call.1} parent=1 // pred_check
      _
    $region27: #{tpu_custom_call.1} parent=1 // pred_check_branch
      %92 = sbr.rel (0) target = $region29
    $region28: #{tpu_custom_call.1} parent=1 // pred_region
      _
    $region29: #{tpu_custom_call.1} parent=1 // pred_fallthru
      _
    // Predicated region
    $region30: #{tpu_custom_call.1} parent=1 // pred_check
      _
    $region31: #{tpu_custom_call.1} parent=1 // pred_check_branch
      %94 = sbr.rel (0) target = $region33
    $region32: #{tpu_custom_call.1} parent=1 // pred_region
      %96 = dma.done [#allocation3], 256
    $region33: #{tpu_custom_call.1} parent=1 // pred_fallthru
      _
    // Predicated region
    $region34: #{tpu_custom_call.1} parent=1 // pred_check
      _
    $region35: #{tpu_custom_call.1} parent=1 // pred_check_branch
      %98 = sbr.rel (0) target = $region37
    $region36: #{tpu_custom_call.1} parent=1 // pred_region
      %100 = dma.done [#allocation6], 16384
    $region37: #{tpu_custom_call.1} parent=1 // pred_fallthru
      _
    // Predicated region
    $region38: #{tpu_custom_call.1} parent=1 // pred_check
      _
    $region39: #{tpu_custom_call.1} parent=1 // pred_check_branch
      %102 = sbr.rel (0) target = $region41
    $region40: #{tpu_custom_call.1} parent=1 // pred_region
      %104 = dma.done [#allocation6], 128
    $region41: #{tpu_custom_call.1} parent=1 // pred_fallthru
      _
    // Predicated region
    $region42: #{tpu_custom_call.1} parent=1 // pred_check
      _
    $region43: #{tpu_custom_call.1} parent=1 // pred_check_branch
      %106 = sbr.rel (0) target = $region45
    $region44: #{tpu_custom_call.1} parent=1 // pred_region
      %108 = dma.done [#allocation9], 32768
    $region45: #{tpu_custom_call.1} parent=1 // pred_fallthru
      _
    // Predicated region
    $region46: #{tpu_custom_call.1} parent=1 // pred_check
      _
    $region47: #{tpu_custom_call.1} parent=1 // pred_check_branch
      %110 = sbr.rel (0) target = $region49
    $region48: #{tpu_custom_call.1} parent=1 // pred_region
      %112 = dma.done [#allocation9], 64
    $region49: #{tpu_custom_call.1} parent=1 // pred_fallthru
      _
    // Predicated region
    $region50: #{tpu_custom_call.1} parent=1 // pred_check
      _
    $region51: #{tpu_custom_call.1} parent=1 // pred_check_branch
      %114 = sbr.rel (0) target = $region53
    $region52: #{tpu_custom_call.1} parent=1 // pred_region
      %116 = dma.done [#allocation12], 4096
    $region53: #{tpu_custom_call.1} parent=1 // pred_fallthru
      _
    %v117 = vld [vmem:[#allocation2] sm:$0xff]
    %v118 = vld [vmem:[#allocation2 + $0x8] sm:$0xff]
    %v119 = vld [vmem:[#allocation5] sm:$0xff]
    %v120 = vld [vmem:[#allocation5 + $0x8] sm:$0xff]
    %v121 = vld [vmem:[#allocation5 + $0x10] sm:$0xff]
    %v122 = vld [vmem:[#allocation5 + $0x18] sm:$0xff]
    %v123 = vld [vmem:[#allocation5 + $0x20] sm:$0xff]
    %v124 = vld [vmem:[#allocation5 + $0x28] sm:$0xff]
    %v125 = vld [vmem:[#allocation5 + $0x30] sm:$0xff]
    %v126 = vld [vmem:[#allocation5 + $0x38] sm:$0xff]
    %v127 = vld [vmem:[#allocation5 + $0x40] sm:$0xff]
    %v128 = vld [vmem:[#allocation5 + $0x48] sm:$0xff]
    %v129 = vld [vmem:[#allocation5 + $0x50] sm:$0xff]
    %v130 = vld [vmem:[#allocation5 + $0x58] sm:$0xff]
    %v131 = vld [vmem:[#allocation5 + $0x60] sm:$0xff]
    %v132 = vld [vmem:[#allocation5 + $0x68] sm:$0xff]
    %v133 = vld [vmem:[#allocation5 + $0x70] sm:$0xff]
    %v134 = vld [vmem:[#allocation5 + $0x78] sm:$0xff]
    %v135 = vld [vmem:[#allocation5 + $0x80] sm:$0xff]
    %v136 = vld [vmem:[#allocation5 + $0x88] sm:$0xff]
    %v137 = vld [vmem:[#allocation5 + $0x90] sm:$0xff]
    %v138 = vld [vmem:[#allocation5 + $0x98] sm:$0xff]
    %v139 = vld [vmem:[#allocation5 + $0xa0] sm:$0xff]
    %v140 = vld [vmem:[#allocation5 + $0xa8] sm:$0xff]
    %v141 = vld [vmem:[#allocation5 + $0xb0] sm:$0xff]
    %v142 = vld [vmem:[#allocation5 + $0xb8] sm:$0xff]
    %v143 = vld [vmem:[#allocation5 + $0xc0] sm:$0xff]
    %v144 = vld [vmem:[#allocation5 + $0xc8] sm:$0xff]
    %v145 = vld [vmem:[#allocation5 + $0xd0] sm:$0xff]
    %v146 = vld [vmem:[#allocation5 + $0xd8] sm:$0xff]
    %v147 = vld [vmem:[#allocation5 + $0xe0] sm:$0xff]
    %v148 = vld [vmem:[#allocation5 + $0xe8] sm:$0xff]
    %v149 = vld [vmem:[#allocation5 + $0xf0] sm:$0xff]
    %v150 = vld [vmem:[#allocation5 + $0xf8] sm:$0xff]
    %v151 = vld [vmem:[#allocation5 + $0x100] sm:$0xff]
    %v152 = vld [vmem:[#allocation5 + $0x108] sm:$0xff]
    %v153 = vld [vmem:[#allocation5 + $0x110] sm:$0xff]
    %v154 = vld [vmem:[#allocation5 + $0x118] sm:$0xff]
    %v155 = vld [vmem:[#allocation5 + $0x120] sm:$0xff]
    %v156 = vld [vmem:[#allocation5 + $0x128] sm:$0xff]
    %v157 = vld [vmem:[#allocation5 + $0x130] sm:$0xff]
    %v158 = vld [vmem:[#allocation5 + $0x138] sm:$0xff]
    %v159 = vld [vmem:[#allocation5 + $0x140] sm:$0xff]
    %v160 = vld [vmem:[#allocation5 + $0x148] sm:$0xff]
    %v161 = vld [vmem:[#allocation5 + $0x150] sm:$0xff]
    %v162 = vld [vmem:[#allocation5 + $0x158] sm:$0xff]
    %v163 = vld [vmem:[#allocation5 + $0x160] sm:$0xff]
    %v164 = vld [vmem:[#allocation5 + $0x168] sm:$0xff]
    %v165 = vld [vmem:[#allocation5 + $0x170] sm:$0xff]
    %v166 = vld [vmem:[#allocation5 + $0x178] sm:$0xff]
    %v167 = vld [vmem:[#allocation5 + $0x180] sm:$0xff]
    %v168 = vld [vmem:[#allocation5 + $0x188] sm:$0xff]
    %v169 = vld [vmem:[#allocation5 + $0x190] sm:$0xff]
    %v170 = vld [vmem:[#allocation5 + $0x198] sm:$0xff]
    %v171 = vld [vmem:[#allocation5 + $0x1a0] sm:$0xff]
    %v172 = vld [vmem:[#allocation5 + $0x1a8] sm:$0xff]
    %v173 = vld [vmem:[#allocation5 + $0x1b0] sm:$0xff]
    %v174 = vld [vmem:[#allocation5 + $0x1b8] sm:$0xff]
    %v175 = vld [vmem:[#allocation5 + $0x1c0] sm:$0xff]
    %v176 = vld [vmem:[#allocation5 + $0x1c8] sm:$0xff]
    %v177 = vld [vmem:[#allocation5 + $0x1d0] sm:$0xff]
    %v178 = vld [vmem:[#allocation5 + $0x1d8] sm:$0xff]
    %v179 = vld [vmem:[#allocation5 + $0x1e0] sm:$0xff]
    %v180 = vld [vmem:[#allocation5 + $0x1e8] sm:$0xff]
    %v181 = vld [vmem:[#allocation5 + $0x1f0] sm:$0xff]
    %v182 = vld [vmem:[#allocation5 + $0x1f8] sm:$0xff]
    %v183 = vld [vmem:[#allocation5 + $0x200] sm:$0xff]
    %v184 = vld [vmem:[#allocation5 + $0x208] sm:$0xff]
    %v185 = vld [vmem:[#allocation5 + $0x210] sm:$0xff]
    %v186 = vld [vmem:[#allocation5 + $0x218] sm:$0xff]
    %v187 = vld [vmem:[#allocation5 + $0x220] sm:$0xff]
    %v188 = vld [vmem:[#allocation5 + $0x228] sm:$0xff]
    %v189 = vld [vmem:[#allocation5 + $0x230] sm:$0xff]
    %v190 = vld [vmem:[#allocation5 + $0x238] sm:$0xff]
    %v191 = vld [vmem:[#allocation5 + $0x240] sm:$0xff]
    %v192 = vld [vmem:[#allocation5 + $0x248] sm:$0xff]
    %v193 = vld [vmem:[#allocation5 + $0x250] sm:$0xff]
    %v194 = vld [vmem:[#allocation5 + $0x258] sm:$0xff]
    %v195 = vld [vmem:[#allocation5 + $0x260] sm:$0xff]
    %v196 = vld [vmem:[#allocation5 + $0x268] sm:$0xff]
    %v197 = vld [vmem:[#allocation5 + $0x270] sm:$0xff]
    %v198 = vld [vmem:[#allocation5 + $0x278] sm:$0xff]
    %v199 = vld [vmem:[#allocation5 + $0x280] sm:$0xff]
    %v200 = vld [vmem:[#allocation5 + $0x288] sm:$0xff]
    %v201 = vld [vmem:[#allocation5 + $0x290] sm:$0xff]
    %v202 = vld [vmem:[#allocation5 + $0x298] sm:$0xff]
    %v203 = vld [vmem:[#allocation5 + $0x2a0] sm:$0xff]
    %v204 = vld [vmem:[#allocation5 + $0x2a8] sm:$0xff]
    %v205 = vld [vmem:[#allocation5 + $0x2b0] sm:$0xff]
    %v206 = vld [vmem:[#allocation5 + $0x2b8] sm:$0xff]
    %v207 = vld [vmem:[#allocation5 + $0x2c0] sm:$0xff]
    %v208 = vld [vmem:[#allocation5 + $0x2c8] sm:$0xff]
    %v209 = vld [vmem:[#allocation5 + $0x2d0] sm:$0xff]
    %v210 = vld [vmem:[#allocation5 + $0x2d8] sm:$0xff]
    %v211 = vld [vmem:[#allocation5 + $0x2e0] sm:$0xff]
    %v212 = vld [vmem:[#allocation5 + $0x2e8] sm:$0xff]
    %v213 = vld [vmem:[#allocation5 + $0x2f0] sm:$0xff]
    %v214 = vld [vmem:[#allocation5 + $0x2f8] sm:$0xff]
    %v215 = vld [vmem:[#allocation5 + $0x300] sm:$0xff]
    %v216 = vld [vmem:[#allocation5 + $0x308] sm:$0xff]
    %v217 = vld [vmem:[#allocation5 + $0x310] sm:$0xff]
    %v218 = vld [vmem:[#allocation5 + $0x318] sm:$0xff]
    %v219 = vld [vmem:[#allocation5 + $0x320] sm:$0xff]
    %v220 = vld [vmem:[#allocation5 + $0x328] sm:$0xff]
    %v221 = vld [vmem:[#allocation5 + $0x330] sm:$0xff]
    %v222 = vld [vmem:[#allocation5 + $0x338] sm:$0xff]
    %v223 = vld [vmem:[#allocation5 + $0x340] sm:$0xff]
    %v224 = vld [vmem:[#allocation5 + $0x348] sm:$0xff]
    %v225 = vld [vmem:[#allocation5 + $0x350] sm:$0xff]
    %v226 = vld [vmem:[#allocation5 + $0x358] sm:$0xff]
    %v227 = vld [vmem:[#allocation5 + $0x360] sm:$0xff]
    %v228 = vld [vmem:[#allocation5 + $0x368] sm:$0xff]
    %v229 = vld [vmem:[#allocation5 + $0x370] sm:$0xff]
    %v230 = vld [vmem:[#allocation5 + $0x378] sm:$0xff]
    %v231 = vld [vmem:[#allocation5 + $0x380] sm:$0xff]
    %v232 = vld [vmem:[#allocation5 + $0x388] sm:$0xff]
    %v233 = vld [vmem:[#allocation5 + $0x390] sm:$0xff]
    %v234 = vld [vmem:[#allocation5 + $0x398] sm:$0xff]
    %v235 = vld [vmem:[#allocation5 + $0x3a0] sm:$0xff]
    %v236 = vld [vmem:[#allocation5 + $0x3a8] sm:$0xff]
    %v237 = vld [vmem:[#allocation5 + $0x3b0] sm:$0xff]
    %v238 = vld [vmem:[#allocation5 + $0x3b8] sm:$0xff]
    %v239 = vld [vmem:[#allocation5 + $0x3c0] sm:$0xff]
    %v240 = vld [vmem:[#allocation5 + $0x3c8] sm:$0xff]
    %v241 = vld [vmem:[#allocation5 + $0x3d0] sm:$0xff]
    %v242 = vld [vmem:[#allocation5 + $0x3d8] sm:$0xff]
    %v243 = vld [vmem:[#allocation5 + $0x3e0] sm:$0xff]
    %v244 = vld [vmem:[#allocation5 + $0x3e8] sm:$0xff]
    %v245 = vld [vmem:[#allocation5 + $0x3f0] sm:$0xff]
    %v246 = vld [vmem:[#allocation5 + $0x3f8] sm:$0xff]
    %v247 = vld [vmem:[#allocation7] sm:$0xff]
    %v249 = vperm.slane %v247, 0
    %v250 = vperm.slane %v247, 1
    %v251 = vperm.slane %v247, 2
    %v252 = vperm.slane %v247, 3
    %v253 = vperm.slane %v247, 4
    %v254 = vperm.slane %v247, 5
    %v255 = vperm.slane %v247, 6
    %v256 = vperm.slane %v247, 7
    %v267 = vunpack.c.l.b16 %v117
    %v268 = vunpack.c.h.b16 %v117
    %v269 = vunpack.c.l.b16 %v118
    %v270 = vunpack.c.h.b16 %v118
    %v271 = vpack.c.b16 %v269, %v267
    %v272 = vpack.c.b16 %v270, %v268
    %v403 = vunpack.c.l.b16 %v119
    %v404 = vunpack.c.h.b16 %v119
    %v405 = vunpack.c.l.b16 %v120
    %v406 = vunpack.c.h.b16 %v120
    %v407 = vunpack.c.l.b16 %v121
    %v408 = vunpack.c.h.b16 %v121
    %v409 = vunpack.c.l.b16 %v122
    %v410 = vunpack.c.h.b16 %v122
    %v411 = vunpack.c.l.b16 %v123
    %v412 = vunpack.c.h.b16 %v123
    %v413 = vunpack.c.l.b16 %v124
    %v414 = vunpack.c.h.b16 %v124
    %v415 = vunpack.c.l.b16 %v125
    %v416 = vunpack.c.h.b16 %v125
    %v417 = vunpack.c.l.b16 %v126
    %v418 = vunpack.c.h.b16 %v126
    %v419 = vunpack.c.l.b16 %v127
    %v420 = vunpack.c.h.b16 %v127
    %v421 = vunpack.c.l.b16 %v128
    %v422 = vunpack.c.h.b16 %v128
    %v423 = vunpack.c.l.b16 %v129
    %v424 = vunpack.c.h.b16 %v129
    %v425 = vunpack.c.l.b16 %v130
    %v426 = vunpack.c.h.b16 %v130
    %v427 = vunpack.c.l.b16 %v131
    %v428 = vunpack.c.h.b16 %v131
    %v429 = vunpack.c.l.b16 %v132
    %v430 = vunpack.c.h.b16 %v132
    %v431 = vunpack.c.l.b16 %v133
    %v432 = vunpack.c.h.b16 %v133
    %v433 = vunpack.c.l.b16 %v134
    %v434 = vunpack.c.h.b16 %v134
    %v435 = vunpack.c.l.b16 %v135
    %v436 = vunpack.c.h.b16 %v135
    %v437 = vunpack.c.l.b16 %v136
    %v438 = vunpack.c.h.b16 %v136
    %v439 = vunpack.c.l.b16 %v137
    %v440 = vunpack.c.h.b16 %v137
    %v441 = vunpack.c.l.b16 %v138
    %v442 = vunpack.c.h.b16 %v138
    %v443 = vunpack.c.l.b16 %v139
    %v444 = vunpack.c.h.b16 %v139
    %v445 = vunpack.c.l.b16 %v140
    %v446 = vunpack.c.h.b16 %v140
    %v447 = vunpack.c.l.b16 %v141
    %v448 = vunpack.c.h.b16 %v141
    %v449 = vunpack.c.l.b16 %v142
    %v450 = vunpack.c.h.b16 %v142
    %v451 = vunpack.c.l.b16 %v143
    %v452 = vunpack.c.h.b16 %v143
    %v453 = vunpack.c.l.b16 %v144
    %v454 = vunpack.c.h.b16 %v144
    %v455 = vunpack.c.l.b16 %v145
    %v456 = vunpack.c.h.b16 %v145
    %v457 = vunpack.c.l.b16 %v146
    %v458 = vunpack.c.h.b16 %v146
    %v459 = vunpack.c.l.b16 %v147
    %v460 = vunpack.c.h.b16 %v147
    %v461 = vunpack.c.l.b16 %v148
    %v462 = vunpack.c.h.b16 %v148
    %v463 = vunpack.c.l.b16 %v149
    %v464 = vunpack.c.h.b16 %v149
    %v465 = vunpack.c.l.b16 %v150
    %v466 = vunpack.c.h.b16 %v150
    %v467 = vunpack.c.l.b16 %v151
    %v468 = vunpack.c.h.b16 %v151
    %v469 = vunpack.c.l.b16 %v152
    %v470 = vunpack.c.h.b16 %v152
    %v471 = vunpack.c.l.b16 %v153
    %v472 = vunpack.c.h.b16 %v153
    %v473 = vunpack.c.l.b16 %v154
    %v474 = vunpack.c.h.b16 %v154
    %v475 = vunpack.c.l.b16 %v155
    %v476 = vunpack.c.h.b16 %v155
    %v477 = vunpack.c.l.b16 %v156
    %v478 = vunpack.c.h.b16 %v156
    %v479 = vunpack.c.l.b16 %v157
    %v480 = vunpack.c.h.b16 %v157
    %v481 = vunpack.c.l.b16 %v158
    %v482 = vunpack.c.h.b16 %v158
    %v483 = vunpack.c.l.b16 %v159
    %v484 = vunpack.c.h.b16 %v159
    %v485 = vunpack.c.l.b16 %v160
    %v486 = vunpack.c.h.b16 %v160
    %v487 = vunpack.c.l.b16 %v161
    %v488 = vunpack.c.h.b16 %v161
    %v489 = vunpack.c.l.b16 %v162
    %v490 = vunpack.c.h.b16 %v162
    %v491 = vunpack.c.l.b16 %v163
    %v492 = vunpack.c.h.b16 %v163
    %v493 = vunpack.c.l.b16 %v164
    %v494 = vunpack.c.h.b16 %v164
    %v495 = vunpack.c.l.b16 %v165
    %v496 = vunpack.c.h.b16 %v165
    %v497 = vunpack.c.l.b16 %v166
    %v498 = vunpack.c.h.b16 %v166
    %v499 = vunpack.c.l.b16 %v167
    %v500 = vunpack.c.h.b16 %v167
    %v501 = vunpack.c.l.b16 %v168
    %v502 = vunpack.c.h.b16 %v168
    %v503 = vunpack.c.l.b16 %v169
    %v504 = vunpack.c.h.b16 %v169
    %v505 = vunpack.c.l.b16 %v170
    %v506 = vunpack.c.h.b16 %v170
    %v507 = vunpack.c.l.b16 %v171
    %v508 = vunpack.c.h.b16 %v171
    %v509 = vunpack.c.l.b16 %v172
    %v510 = vunpack.c.h.b16 %v172
    %v511 = vunpack.c.l.b16 %v173
    %v512 = vunpack.c.h.b16 %v173
    %v513 = vunpack.c.l.b16 %v174
    %v514 = vunpack.c.h.b16 %v174
    %v515 = vunpack.c.l.b16 %v175
    %v516 = vunpack.c.h.b16 %v175
    %v517 = vunpack.c.l.b16 %v176
    %v518 = vunpack.c.h.b16 %v176
    %v519 = vunpack.c.l.b16 %v177
    %v520 = vunpack.c.h.b16 %v177
    %v521 = vunpack.c.l.b16 %v178
    %v522 = vunpack.c.h.b16 %v178
    %v523 = vunpack.c.l.b16 %v179
    %v524 = vunpack.c.h.b16 %v179
    %v525 = vunpack.c.l.b16 %v180
    %v526 = vunpack.c.h.b16 %v180
    %v527 = vunpack.c.l.b16 %v181
    %v528 = vunpack.c.h.b16 %v181
    %v529 = vunpack.c.l.b16 %v182
    %v530 = vunpack.c.h.b16 %v182
    %v531 = vunpack.c.l.b16 %v183
    %v532 = vunpack.c.h.b16 %v183
    %v533 = vunpack.c.l.b16 %v184
    %v534 = vunpack.c.h.b16 %v184
    %v535 = vunpack.c.l.b16 %v185
    %v536 = vunpack.c.h.b16 %v185
    %v537 = vunpack.c.l.b16 %v186
    %v538 = vunpack.c.h.b16 %v186
    %v539 = vunpack.c.l.b16 %v187
    %v540 = vunpack.c.h.b16 %v187
    %v541 = vunpack.c.l.b16 %v188
    %v542 = vunpack.c.h.b16 %v188
    %v543 = vunpack.c.l.b16 %v189
    %v544 = vunpack.c.h.b16 %v189
    %v545 = vunpack.c.l.b16 %v190
    %v546 = vunpack.c.h.b16 %v190
    %v547 = vunpack.c.l.b16 %v191
    %v548 = vunpack.c.h.b16 %v191
    %v549 = vunpack.c.l.b16 %v192
    %v550 = vunpack.c.h.b16 %v192
    %v551 = vunpack.c.l.b16 %v193
    %v552 = vunpack.c.h.b16 %v193
    %v553 = vunpack.c.l.b16 %v194
    %v554 = vunpack.c.h.b16 %v194
    %v555 = vunpack.c.l.b16 %v195
    %v556 = vunpack.c.h.b16 %v195
    %v557 = vunpack.c.l.b16 %v196
    %v558 = vunpack.c.h.b16 %v196
    %v559 = vunpack.c.l.b16 %v197
    %v560 = vunpack.c.h.b16 %v197
    %v561 = vunpack.c.l.b16 %v198
    %v562 = vunpack.c.h.b16 %v198
    %v563 = vunpack.c.l.b16 %v199
    %v564 = vunpack.c.h.b16 %v199
    %v565 = vunpack.c.l.b16 %v200
    %v566 = vunpack.c.h.b16 %v200
    %v567 = vunpack.c.l.b16 %v201
    %v568 = vunpack.c.h.b16 %v201
    %v569 = vunpack.c.l.b16 %v202
    %v570 = vunpack.c.h.b16 %v202
    %v571 = vunpack.c.l.b16 %v203
    %v572 = vunpack.c.h.b16 %v203
    %v573 = vunpack.c.l.b16 %v204
    %v574 = vunpack.c.h.b16 %v204
    %v575 = vunpack.c.l.b16 %v205
    %v576 = vunpack.c.h.b16 %v205
    %v577 = vunpack.c.l.b16 %v206
    %v578 = vunpack.c.h.b16 %v206
    %v579 = vunpack.c.l.b16 %v207
    %v580 = vunpack.c.h.b16 %v207
    %v581 = vunpack.c.l.b16 %v208
    %v582 = vunpack.c.h.b16 %v208
    %v583 = vunpack.c.l.b16 %v209
    %v584 = vunpack.c.h.b16 %v209
    %v585 = vunpack.c.l.b16 %v210
    %v586 = vunpack.c.h.b16 %v210
    %v587 = vunpack.c.l.b16 %v211
    %v588 = vunpack.c.h.b16 %v211
    %v589 = vunpack.c.l.b16 %v212
    %v590 = vunpack.c.h.b16 %v212
    %v591 = vunpack.c.l.b16 %v213
    %v592 = vunpack.c.h.b16 %v213
    %v593 = vunpack.c.l.b16 %v214
    %v594 = vunpack.c.h.b16 %v214
    %v595 = vunpack.c.l.b16 %v215
    %v596 = vunpack.c.h.b16 %v215
    %v597 = vunpack.c.l.b16 %v216
    %v598 = vunpack.c.h.b16 %v216
    %v599 = vunpack.c.l.b16 %v217
    %v600 = vunpack.c.h.b16 %v217
    %v601 = vunpack.c.l.b16 %v218
    %v602 = vunpack.c.h.b16 %v218
    %v603 = vunpack.c.l.b16 %v219
    %v604 = vunpack.c.h.b16 %v219
    %v605 = vunpack.c.l.b16 %v220
    %v606 = vunpack.c.h.b16 %v220
    %v607 = vunpack.c.l.b16 %v221
    %v608 = vunpack.c.h.b16 %v221
    %v609 = vunpack.c.l.b16 %v222
    %v610 = vunpack.c.h.b16 %v222
    %v611 = vunpack.c.l.b16 %v223
    %v612 = vunpack.c.h.b16 %v223
    %v613 = vunpack.c.l.b16 %v224
    %v614 = vunpack.c.h.b16 %v224
    %v615 = vunpack.c.l.b16 %v225
    %v616 = vunpack.c.h.b16 %v225
    %v617 = vunpack.c.l.b16 %v226
    %v618 = vunpack.c.h.b16 %v226
    %v619 = vunpack.c.l.b16 %v227
    %v620 = vunpack.c.h.b16 %v227
    %v621 = vunpack.c.l.b16 %v228
    %v622 = vunpack.c.h.b16 %v228
    %v623 = vunpack.c.l.b16 %v229
    %v624 = vunpack.c.h.b16 %v229
    %v625 = vunpack.c.l.b16 %v230
    %v626 = vunpack.c.h.b16 %v230
    %v627 = vunpack.c.l.b16 %v231
    %v628 = vunpack.c.h.b16 %v231
    %v629 = vunpack.c.l.b16 %v232
    %v630 = vunpack.c.h.b16 %v232
    %v631 = vunpack.c.l.b16 %v233
    %v632 = vunpack.c.h.b16 %v233
    %v633 = vunpack.c.l.b16 %v234
    %v634 = vunpack.c.h.b16 %v234
    %v635 = vunpack.c.l.b16 %v235
    %v636 = vunpack.c.h.b16 %v235
    %v637 = vunpack.c.l.b16 %v236
    %v638 = vunpack.c.h.b16 %v236
    %v639 = vunpack.c.l.b16 %v237
    %v640 = vunpack.c.h.b16 %v237
    %v641 = vunpack.c.l.b16 %v238
    %v642 = vunpack.c.h.b16 %v238
    %v643 = vunpack.c.l.b16 %v239
    %v644 = vunpack.c.h.b16 %v239
    %v645 = vunpack.c.l.b16 %v240
    %v646 = vunpack.c.h.b16 %v240
    %v647 = vunpack.c.l.b16 %v241
    %v648 = vunpack.c.h.b16 %v241
    %v649 = vunpack.c.l.b16 %v242
    %v650 = vunpack.c.h.b16 %v242
    %v651 = vunpack.c.l.b16 %v243
    %v652 = vunpack.c.h.b16 %v243
    %v653 = vunpack.c.l.b16 %v244
    %v654 = vunpack.c.h.b16 %v244
    %v655 = vunpack.c.l.b16 %v245
    %v656 = vunpack.c.h.b16 %v245
    %v657 = vunpack.c.l.b16 %v246
    %v658 = vunpack.c.h.b16 %v246
    %v659 = vpack.c.b16 %v411, %v403
    %v660 = vpack.c.b16 %v412, %v404
    %v661 = vpack.c.b16 %v413, %v405
    %v662 = vpack.c.b16 %v414, %v406
    %v663 = vpack.c.b16 %v415, %v407
    %v664 = vpack.c.b16 %v416, %v408
    %v665 = vpack.c.b16 %v417, %v409
    %v666 = vpack.c.b16 %v418, %v410
    %v667 = vpack.c.b16 %v427, %v419
    %v668 = vpack.c.b16 %v428, %v420
    %v669 = vpack.c.b16 %v429, %v421
    %v670 = vpack.c.b16 %v430, %v422
    %v671 = vpack.c.b16 %v431, %v423
    %v672 = vpack.c.b16 %v432, %v424
    %v673 = vpack.c.b16 %v433, %v425
    %v674 = vpack.c.b16 %v434, %v426
    %v675 = vpack.c.b16 %v443, %v435
    %v676 = vpack.c.b16 %v444, %v436
    %v677 = vpack.c.b16 %v445, %v437
    %v678 = vpack.c.b16 %v446, %v438
    %v679 = vpack.c.b16 %v447, %v439
    %v680 = vpack.c.b16 %v448, %v440
    %v681 = vpack.c.b16 %v449, %v441
    %v682 = vpack.c.b16 %v450, %v442
    %v683 = vpack.c.b16 %v459, %v451
    %v684 = vpack.c.b16 %v460, %v452
    %v685 = vpack.c.b16 %v461, %v453
    %v686 = vpack.c.b16 %v462, %v454
    %v687 = vpack.c.b16 %v463, %v455
    %v688 = vpack.c.b16 %v464, %v456
    %v689 = vpack.c.b16 %v465, %v457
    %v690 = vpack.c.b16 %v466, %v458
    %v691 = vpack.c.b16 %v475, %v467
    %v692 = vpack.c.b16 %v476, %v468
    %v693 = vpack.c.b16 %v477, %v469
    %v694 = vpack.c.b16 %v478, %v470
    %v695 = vpack.c.b16 %v479, %v471
    %v696 = vpack.c.b16 %v480, %v472
    %v697 = vpack.c.b16 %v481, %v473
    %v698 = vpack.c.b16 %v482, %v474
    %v699 = vpack.c.b16 %v491, %v483
    %v700 = vpack.c.b16 %v492, %v484
    %v701 = vpack.c.b16 %v493, %v485
    %v702 = vpack.c.b16 %v494, %v486
    %v703 = vpack.c.b16 %v495, %v487
    %v704 = vpack.c.b16 %v496, %v488
    %v705 = vpack.c.b16 %v497, %v489
    %v706 = vpack.c.b16 %v498, %v490
    %v707 = vpack.c.b16 %v507, %v499
    %v708 = vpack.c.b16 %v508, %v500
    %v709 = vpack.c.b16 %v509, %v501
    %v710 = vpack.c.b16 %v510, %v502
    %v711 = vpack.c.b16 %v511, %v503
    %v712 = vpack.c.b16 %v512, %v504
    %v713 = vpack.c.b16 %v513, %v505
    %v714 = vpack.c.b16 %v514, %v506
    %v715 = vpack.c.b16 %v523, %v515
    %v716 = vpack.c.b16 %v524, %v516
    %v717 = vpack.c.b16 %v525, %v517
    %v718 = vpack.c.b16 %v526, %v518
    %v719 = vpack.c.b16 %v527, %v519
    %v720 = vpack.c.b16 %v528, %v520
    %v721 = vpack.c.b16 %v529, %v521
    %v722 = vpack.c.b16 %v530, %v522
    %v723 = vpack.c.b16 %v539, %v531
    %v724 = vpack.c.b16 %v540, %v532
    %v725 = vpack.c.b16 %v541, %v533
    %v726 = vpack.c.b16 %v542, %v534
    %v727 = vpack.c.b16 %v543, %v535
    %v728 = vpack.c.b16 %v544, %v536
    %v729 = vpack.c.b16 %v545, %v537
    %v730 = vpack.c.b16 %v546, %v538
    %v731 = vpack.c.b16 %v555, %v547
    %v732 = vpack.c.b16 %v556, %v548
    %v733 = vpack.c.b16 %v557, %v549
    %v734 = vpack.c.b16 %v558, %v550
    %v735 = vpack.c.b16 %v559, %v551
    %v736 = vpack.c.b16 %v560, %v552
    %v737 = vpack.c.b16 %v561, %v553
    %v738 = vpack.c.b16 %v562, %v554
    %v739 = vpack.c.b16 %v571, %v563
    %v740 = vpack.c.b16 %v572, %v564
    %v741 = vpack.c.b16 %v573, %v565
    %v742 = vpack.c.b16 %v574, %v566
    %v743 = vpack.c.b16 %v575, %v567
    %v744 = vpack.c.b16 %v576, %v568
    %v745 = vpack.c.b16 %v577, %v569
    %v746 = vpack.c.b16 %v578, %v570
    %v747 = vpack.c.b16 %v587, %v579
    %v748 = vpack.c.b16 %v588, %v580
    %v749 = vpack.c.b16 %v589, %v581
    %v750 = vpack.c.b16 %v590, %v582
    %v751 = vpack.c.b16 %v591, %v583
    %v752 = vpack.c.b16 %v592, %v584
    %v753 = vpack.c.b16 %v593, %v585
    %v754 = vpack.c.b16 %v594, %v586
    %v755 = vpack.c.b16 %v603, %v595
    %v756 = vpack.c.b16 %v604, %v596
    %v757 = vpack.c.b16 %v605, %v597
    %v758 = vpack.c.b16 %v606, %v598
    %v759 = vpack.c.b16 %v607, %v599
    %v760 = vpack.c.b16 %v608, %v600
    %v761 = vpack.c.b16 %v609, %v601
    %v762 = vpack.c.b16 %v610, %v602
    %v763 = vpack.c.b16 %v619, %v611
    %v764 = vpack.c.b16 %v620, %v612
    %v765 = vpack.c.b16 %v621, %v613
    %v766 = vpack.c.b16 %v622, %v614
    %v767 = vpack.c.b16 %v623, %v615
    %v768 = vpack.c.b16 %v624, %v616
    %v769 = vpack.c.b16 %v625, %v617
    %v770 = vpack.c.b16 %v626, %v618
    %v771 = vpack.c.b16 %v635, %v627
    %v772 = vpack.c.b16 %v636, %v628
    %v773 = vpack.c.b16 %v637, %v629
    %v774 = vpack.c.b16 %v638, %v630
    %v775 = vpack.c.b16 %v639, %v631
    %v776 = vpack.c.b16 %v640, %v632
    %v777 = vpack.c.b16 %v641, %v633
    %v778 = vpack.c.b16 %v642, %v634
    %v779 = vpack.c.b16 %v651, %v643
    %v780 = vpack.c.b16 %v652, %v644
    %v781 = vpack.c.b16 %v653, %v645
    %v782 = vpack.c.b16 %v654, %v646
    %v783 = vpack.c.b16 %v655, %v647
    %v784 = vpack.c.b16 %v656, %v648
    %v785 = vpack.c.b16 %v657, %v649
    %v786 = vpack.c.b16 %v658, %v650
    %915 = vmatpush.bf16.msra.mxu0 %v715
    %916 = vmatpush.bf16.msra.mxu0 %v707
    %917 = vmatpush.bf16.msra.mxu0 %v699
    %918 = vmatpush.bf16.msra.mxu0 %v691
    %919 = vmatpush.bf16.msra.mxu0 %v683
    %920 = vmatpush.bf16.msra.mxu0 %v675
    %921 = vmatpush.bf16.msra.mxu0 %v667
    %922 = vmatpush.bf16.msra.mxu0 %v659
    %923 = vmatmul.bf16.gmra.mxu0 %v271
    %v924 = vpop.f32.mrf.mxu0
    %v925 = vadd.f32 %v249, %v924
    %v926 = vpop.f32.mrf.mxu0
    %v927 = vadd.f32 %v249, %v926
    %928 = vdwg.mxu0
    %929 = vmatpush.bf16.msra.mxu0 %v779
    %930 = vmatpush.bf16.msra.mxu0 %v771
    %931 = vmatpush.bf16.msra.mxu0 %v763
    %932 = vmatpush.bf16.msra.mxu0 %v755
    %933 = vmatpush.bf16.msra.mxu0 %v747
    %934 = vmatpush.bf16.msra.mxu0 %v739
    %935 = vmatpush.bf16.msra.mxu0 %v731
    %936 = vmatpush.bf16.msra.mxu0 %v723
    %937 = vmatmul.bf16.gmra.mxu0 %v272
    %v938 = vpop.f32.mrf.mxu0
    %v939 = vadd.f32 %v925, %v938
    %v940 = vpop.f32.mrf.mxu0
    %v941 = vadd.f32 %v927, %v940
    %942 = vdwg.mxu0
    %943 = vmatpush.bf16.msra.mxu0 %v716
    %944 = vmatpush.bf16.msra.mxu0 %v708
    %945 = vmatpush.bf16.msra.mxu0 %v700
    %946 = vmatpush.bf16.msra.mxu0 %v692
    %947 = vmatpush.bf16.msra.mxu0 %v684
    %948 = vmatpush.bf16.msra.mxu0 %v676
    %949 = vmatpush.bf16.msra.mxu0 %v668
    %950 = vmatpush.bf16.msra.mxu0 %v660
    %951 = vmatmul.bf16.gmra.mxu0 %v271
    %v952 = vpop.f32.mrf.mxu0
    %v953 = vadd.f32 %v250, %v952
    %v954 = vpop.f32.mrf.mxu0
    %v955 = vadd.f32 %v250, %v954
    %956 = vdwg.mxu0
    %957 = vmatpush.bf16.msra.mxu0 %v780
    %958 = vmatpush.bf16.msra.mxu0 %v772
    %959 = vmatpush.bf16.msra.mxu0 %v764
    %960 = vmatpush.bf16.msra.mxu0 %v756
    %961 = vmatpush.bf16.msra.mxu0 %v748
    %962 = vmatpush.bf16.msra.mxu0 %v740
    %963 = vmatpush.bf16.msra.mxu0 %v732
    %964 = vmatpush.bf16.msra.mxu0 %v724
    %965 = vmatmul.bf16.gmra.mxu0 %v272
    %v966 = vpop.f32.mrf.mxu0
    %v967 = vadd.f32 %v953, %v966
    %v968 = vpop.f32.mrf.mxu0
    %v969 = vadd.f32 %v955, %v968
    %970 = vdwg.mxu0
    %971 = vmatpush.bf16.msra.mxu0 %v717
    %972 = vmatpush.bf16.msra.mxu0 %v709
    %973 = vmatpush.bf16.msra.mxu0 %v701
    %974 = vmatpush.bf16.msra.mxu0 %v693
    %975 = vmatpush.bf16.msra.mxu0 %v685
    %976 = vmatpush.bf16.msra.mxu0 %v677
    %977 = vmatpush.bf16.msra.mxu0 %v669
    %978 = vmatpush.bf16.msra.mxu0 %v661
    %979 = vmatmul.bf16.gmra.mxu0 %v271
    %v980 = vpop.f32.mrf.mxu0
    %v981 = vadd.f32 %v251, %v980
    %v982 = vpop.f32.mrf.mxu0
    %v983 = vadd.f32 %v251, %v982
    %984 = vdwg.mxu0
    %985 = vmatpush.bf16.msra.mxu0 %v781
    %986 = vmatpush.bf16.msra.mxu0 %v773
    %987 = vmatpush.bf16.msra.mxu0 %v765
    %988 = vmatpush.bf16.msra.mxu0 %v757
    %989 = vmatpush.bf16.msra.mxu0 %v749
    %990 = vmatpush.bf16.msra.mxu0 %v741
    %991 = vmatpush.bf16.msra.mxu0 %v733
    %992 = vmatpush.bf16.msra.mxu0 %v725
    %993 = vmatmul.bf16.gmra.mxu0 %v272
    %v994 = vpop.f32.mrf.mxu0
    %v995 = vadd.f32 %v981, %v994
    %v996 = vpop.f32.mrf.mxu0
    %v997 = vadd.f32 %v983, %v996
    %998 = vdwg.mxu0
    %999 = vmatpush.bf16.msra.mxu0 %v718
    %1000 = vmatpush.bf16.msra.mxu0 %v710
    %1001 = vmatpush.bf16.msra.mxu0 %v702
    %1002 = vmatpush.bf16.msra.mxu0 %v694
    %1003 = vmatpush.bf16.msra.mxu0 %v686
    %1004 = vmatpush.bf16.msra.mxu0 %v678
    %1005 = vmatpush.bf16.msra.mxu0 %v670
    %1006 = vmatpush.bf16.msra.mxu0 %v662
    %1007 = vmatmul.bf16.gmra.mxu0 %v271
    %v1008 = vpop.f32.mrf.mxu0
    %v1009 = vadd.f32 %v252, %v1008
    %v1010 = vpop.f32.mrf.mxu0
    %v1011 = vadd.f32 %v252, %v1010
    %1012 = vdwg.mxu0
    %1013 = vmatpush.bf16.msra.mxu0 %v782
    %1014 = vmatpush.bf16.msra.mxu0 %v774
    %1015 = vmatpush.bf16.msra.mxu0 %v766
    %1016 = vmatpush.bf16.msra.mxu0 %v758
    %1017 = vmatpush.bf16.msra.mxu0 %v750
    %1018 = vmatpush.bf16.msra.mxu0 %v742
    %1019 = vmatpush.bf16.msra.mxu0 %v734
    %1020 = vmatpush.bf16.msra.mxu0 %v726
    %1021 = vmatmul.bf16.gmra.mxu0 %v272
    %v1022 = vpop.f32.mrf.mxu0
    %v1023 = vadd.f32 %v1009, %v1022
    %v1024 = vpop.f32.mrf.mxu0
    %v1025 = vadd.f32 %v1011, %v1024
    %1026 = vdwg.mxu0
    %1027 = vmatpush.bf16.msra.mxu0 %v719
    %1028 = vmatpush.bf16.msra.mxu0 %v711
    %1029 = vmatpush.bf16.msra.mxu0 %v703
    %1030 = vmatpush.bf16.msra.mxu0 %v695
    %1031 = vmatpush.bf16.msra.mxu0 %v687
    %1032 = vmatpush.bf16.msra.mxu0 %v679
    %1033 = vmatpush.bf16.msra.mxu0 %v671
    %1034 = vmatpush.bf16.msra.mxu0 %v663
    %1035 = vmatmul.bf16.gmra.mxu0 %v271
    %v1036 = vpop.f32.mrf.mxu0
    %v1037 = vadd.f32 %v253, %v1036
    %v1038 = vpop.f32.mrf.mxu0
    %v1039 = vadd.f32 %v253, %v1038
    %1040 = vdwg.mxu0
    %1041 = vmatpush.bf16.msra.mxu0 %v783
    %1042 = vmatpush.bf16.msra.mxu0 %v775
    %1043 = vmatpush.bf16.msra.mxu0 %v767
    %1044 = vmatpush.bf16.msra.mxu0 %v759
    %1045 = vmatpush.bf16.msra.mxu0 %v751
    %1046 = vmatpush.bf16.msra.mxu0 %v743
    %1047 = vmatpush.bf16.msra.mxu0 %v735
    %1048 = vmatpush.bf16.msra.mxu0 %v727
    %1049 = vmatmul.bf16.gmra.mxu0 %v272
    %v1050 = vpop.f32.mrf.mxu0
    %v1051 = vadd.f32 %v1037, %v1050
    %v1052 = vpop.f32.mrf.mxu0
    %v1053 = vadd.f32 %v1039, %v1052
    %1054 = vdwg.mxu0
    %1055 = vmatpush.bf16.msra.mxu0 %v720
    %1056 = vmatpush.bf16.msra.mxu0 %v712
    %1057 = vmatpush.bf16.msra.mxu0 %v704
    %1058 = vmatpush.bf16.msra.mxu0 %v696
    %1059 = vmatpush.bf16.msra.mxu0 %v688
    %1060 = vmatpush.bf16.msra.mxu0 %v680
    %1061 = vmatpush.bf16.msra.mxu0 %v672
    %1062 = vmatpush.bf16.msra.mxu0 %v664
    %1063 = vmatmul.bf16.gmra.mxu0 %v271
    %v1064 = vpop.f32.mrf.mxu0
    %v1065 = vadd.f32 %v254, %v1064
    %v1066 = vpop.f32.mrf.mxu0
    %v1067 = vadd.f32 %v254, %v1066
    %1068 = vdwg.mxu0
    %1069 = vmatpush.bf16.msra.mxu0 %v784
    %1070 = vmatpush.bf16.msra.mxu0 %v776
    %1071 = vmatpush.bf16.msra.mxu0 %v768
    %1072 = vmatpush.bf16.msra.mxu0 %v760
    %1073 = vmatpush.bf16.msra.mxu0 %v752
    %1074 = vmatpush.bf16.msra.mxu0 %v744
    %1075 = vmatpush.bf16.msra.mxu0 %v736
    %1076 = vmatpush.bf16.msra.mxu0 %v728
    %1077 = vmatmul.bf16.gmra.mxu0 %v272
    %v1078 = vpop.f32.mrf.mxu0
    %v1079 = vadd.f32 %v1065, %v1078
    %v1080 = vpop.f32.mrf.mxu0
    %v1081 = vadd.f32 %v1067, %v1080
    %1082 = vdwg.mxu0
    %1083 = vmatpush.bf16.msra.mxu0 %v721
    %1084 = vmatpush.bf16.msra.mxu0 %v713
    %1085 = vmatpush.bf16.msra.mxu0 %v705
    %1086 = vmatpush.bf16.msra.mxu0 %v697
    %1087 = vmatpush.bf16.msra.mxu0 %v689
    %1088 = vmatpush.bf16.msra.mxu0 %v681
    %1089 = vmatpush.bf16.msra.mxu0 %v673
    %1090 = vmatpush.bf16.msra.mxu0 %v665
    %1091 = vmatmul.bf16.gmra.mxu0 %v271
    %v1092 = vpop.f32.mrf.mxu0
    %v1093 = vadd.f32 %v255, %v1092
    %v1094 = vpop.f32.mrf.mxu0
    %v1095 = vadd.f32 %v255, %v1094
    %1096 = vdwg.mxu0
    %1097 = vmatpush.bf16.msra.mxu0 %v785
    %1098 = vmatpush.bf16.msra.mxu0 %v777
    %1099 = vmatpush.bf16.msra.mxu0 %v769
    %1100 = vmatpush.bf16.msra.mxu0 %v761
    %1101 = vmatpush.bf16.msra.mxu0 %v753
    %1102 = vmatpush.bf16.msra.mxu0 %v745
    %1103 = vmatpush.bf16.msra.mxu0 %v737
    %1104 = vmatpush.bf16.msra.mxu0 %v729
    %1105 = vmatmul.bf16.gmra.mxu0 %v272
    %v1106 = vpop.f32.mrf.mxu0
    %v1107 = vadd.f32 %v1093, %v1106
    %v1108 = vpop.f32.mrf.mxu0
    %v1109 = vadd.f32 %v1095, %v1108
    %1110 = vdwg.mxu0
    %1111 = vmatpush.bf16.msra.mxu0 %v722
    %1112 = vmatpush.bf16.msra.mxu0 %v714
    %1113 = vmatpush.bf16.msra.mxu0 %v706
    %1114 = vmatpush.bf16.msra.mxu0 %v698
    %1115 = vmatpush.bf16.msra.mxu0 %v690
    %1116 = vmatpush.bf16.msra.mxu0 %v682
    %1117 = vmatpush.bf16.msra.mxu0 %v674
    %1118 = vmatpush.bf16.msra.mxu0 %v666
    %1119 = vmatmul.bf16.gmra.mxu0 %v271
    %v1120 = vpop.f32.mrf.mxu0
    %v1121 = vadd.f32 %v256, %v1120
    %v1122 = vpop.f32.mrf.mxu0
    %v1123 = vadd.f32 %v256, %v1122
    %1124 = vdwg.mxu0
    %1125 = vmatpush.bf16.msra.mxu0 %v786
    %1126 = vmatpush.bf16.msra.mxu0 %v778
    %1127 = vmatpush.bf16.msra.mxu0 %v770
    %1128 = vmatpush.bf16.msra.mxu0 %v762
    %1129 = vmatpush.bf16.msra.mxu0 %v754
    %1130 = vmatpush.bf16.msra.mxu0 %v746
    %1131 = vmatpush.bf16.msra.mxu0 %v738
    %1132 = vmatpush.bf16.msra.mxu0 %v730
    %1133 = vmatmul.bf16.gmra.mxu0 %v272
    %v1134 = vpop.f32.mrf.mxu0
    %v1135 = vadd.f32 %v1121, %v1134
    %v1136 = vpop.f32.mrf.mxu0
    %v1137 = vadd.f32 %v1123, %v1136
    %1138 = vdwg.mxu0
    %v1139 = vmax.f32 %v939, 0.0
    %v1140 = vmax.f32 %v967, 0.0
    %v1141 = vmax.f32 %v995, 0.0
    %v1142 = vmax.f32 %v1023, 0.0
    %v1143 = vmax.f32 %v1051, 0.0
    %v1144 = vmax.f32 %v1079, 0.0
    %v1145 = vmax.f32 %v1107, 0.0
    %v1146 = vmax.f32 %v1135, 0.0
    %v1147 = vmax.f32 %v941, 0.0
    %v1148 = vmax.f32 %v969, 0.0
    %v1149 = vmax.f32 %v997, 0.0
    %v1150 = vmax.f32 %v1025, 0.0
    %v1151 = vmax.f32 %v1053, 0.0
    %v1152 = vmax.f32 %v1081, 0.0
    %v1153 = vmax.f32 %v1109, 0.0
    %v1154 = vmax.f32 %v1137, 0.0
    %v1155 = vpack.c.bf16 %v1147, %v1139
    %v1156 = vpack.c.bf16 %v1148, %v1140
    %v1157 = vpack.c.bf16 %v1149, %v1141
    %v1158 = vpack.c.bf16 %v1150, %v1142
    %v1159 = vpack.c.bf16 %v1151, %v1143
    %v1160 = vpack.c.bf16 %v1152, %v1144
    %v1161 = vpack.c.bf16 %v1153, %v1145
    %v1162 = vpack.c.bf16 %v1154, %v1146
    %v1163 = vld [vmem:[#allocation8] sm:$0xff]
    %v1164 = vld [vmem:[#allocation8 + $0x8] sm:$0xff]
    %v1165 = vld [vmem:[#allocation8 + $0x10] sm:$0xff]
    %v1166 = vld [vmem:[#allocation8 + $0x18] sm:$0xff]
    %v1167 = vld [vmem:[#allocation8 + $0x20] sm:$0xff]
    %v1168 = vld [vmem:[#allocation8 + $0x28] sm:$0xff]
    %v1169 = vld [vmem:[#allocation8 + $0x30] sm:$0xff]
    %v1170 = vld [vmem:[#allocation8 + $0x38] sm:$0xff]
    %v1171 = vld [vmem:[#allocation8 + $0x40] sm:$0xff]
    %v1172 = vld [vmem:[#allocation8 + $0x48] sm:$0xff]
    %v1173 = vld [vmem:[#allocation8 + $0x50] sm:$0xff]
    %v1174 = vld [vmem:[#allocation8 + $0x58] sm:$0xff]
    %v1175 = vld [vmem:[#allocation8 + $0x60] sm:$0xff]
    %v1176 = vld [vmem:[#allocation8 + $0x68] sm:$0xff]
    %v1177 = vld [vmem:[#allocation8 + $0x70] sm:$0xff]
    %v1178 = vld [vmem:[#allocation8 + $0x78] sm:$0xff]
    %v1179 = vld [vmem:[#allocation8 + $0x80] sm:$0xff]
    %v1180 = vld [vmem:[#allocation8 + $0x88] sm:$0xff]
    %v1181 = vld [vmem:[#allocation8 + $0x90] sm:$0xff]
    %v1182 = vld [vmem:[#allocation8 + $0x98] sm:$0xff]
    %v1183 = vld [vmem:[#allocation8 + $0xa0] sm:$0xff]
    %v1184 = vld [vmem:[#allocation8 + $0xa8] sm:$0xff]
    %v1185 = vld [vmem:[#allocation8 + $0xb0] sm:$0xff]
    %v1186 = vld [vmem:[#allocation8 + $0xb8] sm:$0xff]
    %v1187 = vld [vmem:[#allocation8 + $0xc0] sm:$0xff]
    %v1188 = vld [vmem:[#allocation8 + $0xc8] sm:$0xff]
    %v1189 = vld [vmem:[#allocation8 + $0xd0] sm:$0xff]
    %v1190 = vld [vmem:[#allocation8 + $0xd8] sm:$0xff]
    %v1191 = vld [vmem:[#allocation8 + $0xe0] sm:$0xff]
    %v1192 = vld [vmem:[#allocation8 + $0xe8] sm:$0xff]
    %v1193 = vld [vmem:[#allocation8 + $0xf0] sm:$0xff]
    %v1194 = vld [vmem:[#allocation8 + $0xf8] sm:$0xff]
    %v1195 = vld [vmem:[#allocation8 + $0x100] sm:$0xff]
    %v1196 = vld [vmem:[#allocation8 + $0x108] sm:$0xff]
    %v1197 = vld [vmem:[#allocation8 + $0x110] sm:$0xff]
    %v1198 = vld [vmem:[#allocation8 + $0x118] sm:$0xff]
    %v1199 = vld [vmem:[#allocation8 + $0x120] sm:$0xff]
    %v1200 = vld [vmem:[#allocation8 + $0x128] sm:$0xff]
    %v1201 = vld [vmem:[#allocation8 + $0x130] sm:$0xff]
    %v1202 = vld [vmem:[#allocation8 + $0x138] sm:$0xff]
    %v1203 = vld [vmem:[#allocation8 + $0x140] sm:$0xff]
    %v1204 = vld [vmem:[#allocation8 + $0x148] sm:$0xff]
    %v1205 = vld [vmem:[#allocation8 + $0x150] sm:$0xff]
    %v1206 = vld [vmem:[#allocation8 + $0x158] sm:$0xff]
    %v1207 = vld [vmem:[#allocation8 + $0x160] sm:$0xff]
    %v1208 = vld [vmem:[#allocation8 + $0x168] sm:$0xff]
    %v1209 = vld [vmem:[#allocation8 + $0x170] sm:$0xff]
    %v1210 = vld [vmem:[#allocation8 + $0x178] sm:$0xff]
    %v1211 = vld [vmem:[#allocation8 + $0x180] sm:$0xff]
    %v1212 = vld [vmem:[#allocation8 + $0x188] sm:$0xff]
    %v1213 = vld [vmem:[#allocation8 + $0x190] sm:$0xff]
    %v1214 = vld [vmem:[#allocation8 + $0x198] sm:$0xff]
    %v1215 = vld [vmem:[#allocation8 + $0x1a0] sm:$0xff]
    %v1216 = vld [vmem:[#allocation8 + $0x1a8] sm:$0xff]
    %v1217 = vld [vmem:[#allocation8 + $0x1b0] sm:$0xff]
    %v1218 = vld [vmem:[#allocation8 + $0x1b8] sm:$0xff]
    %v1219 = vld [vmem:[#allocation8 + $0x1c0] sm:$0xff]
    %v1220 = vld [vmem:[#allocation8 + $0x1c8] sm:$0xff]
    %v1221 = vld [vmem:[#allocation8 + $0x1d0] sm:$0xff]
    %v1222 = vld [vmem:[#allocation8 + $0x1d8] sm:$0xff]
    %v1223 = vld [vmem:[#allocation8 + $0x1e0] sm:$0xff]
    %v1224 = vld [vmem:[#allocation8 + $0x1e8] sm:$0xff]
    %v1225 = vld [vmem:[#allocation8 + $0x1f0] sm:$0xff]
    %v1226 = vld [vmem:[#allocation8 + $0x1f8] sm:$0xff]
    %v1227 = vld [vmem:[#allocation8 + $0x200] sm:$0xff]
    %v1228 = vld [vmem:[#allocation8 + $0x208] sm:$0xff]
    %v1229 = vld [vmem:[#allocation8 + $0x210] sm:$0xff]
    %v1230 = vld [vmem:[#allocation8 + $0x218] sm:$0xff]
    %v1231 = vld [vmem:[#allocation8 + $0x220] sm:$0xff]
    %v1232 = vld [vmem:[#allocation8 + $0x228] sm:$0xff]
    %v1233 = vld [vmem:[#allocation8 + $0x230] sm:$0xff]
    %v1234 = vld [vmem:[#allocation8 + $0x238] sm:$0xff]
    %v1235 = vld [vmem:[#allocation8 + $0x240] sm:$0xff]
    %v1236 = vld [vmem:[#allocation8 + $0x248] sm:$0xff]
    %v1237 = vld [vmem:[#allocation8 + $0x250] sm:$0xff]
    %v1238 = vld [vmem:[#allocation8 + $0x258] sm:$0xff]
    %v1239 = vld [vmem:[#allocation8 + $0x260] sm:$0xff]
    %v1240 = vld [vmem:[#allocation8 + $0x268] sm:$0xff]
    %v1241 = vld [vmem:[#allocation8 + $0x270] sm:$0xff]
    %v1242 = vld [vmem:[#allocation8 + $0x278] sm:$0xff]
    %v1243 = vld [vmem:[#allocation8 + $0x280] sm:$0xff]
    %v1244 = vld [vmem:[#allocation8 + $0x288] sm:$0xff]
    %v1245 = vld [vmem:[#allocation8 + $0x290] sm:$0xff]
    %v1246 = vld [vmem:[#allocation8 + $0x298] sm:$0xff]
    %v1247 = vld [vmem:[#allocation8 + $0x2a0] sm:$0xff]
    %v1248 = vld [vmem:[#allocation8 + $0x2a8] sm:$0xff]
    %v1249 = vld [vmem:[#allocation8 + $0x2b0] sm:$0xff]
    %v1250 = vld [vmem:[#allocation8 + $0x2b8] sm:$0xff]
    %v1251 = vld [vmem:[#allocation8 + $0x2c0] sm:$0xff]
    %v1252 = vld [vmem:[#allocation8 + $0x2c8] sm:$0xff]
    %v1253 = vld [vmem:[#allocation8 + $0x2d0] sm:$0xff]
    %v1254 = vld [vmem:[#allocation8 + $0x2d8] sm:$0xff]
    %v1255 = vld [vmem:[#allocation8 + $0x2e0] sm:$0xff]
    %v1256 = vld [vmem:[#allocation8 + $0x2e8] sm:$0xff]
    %v1257 = vld [vmem:[#allocation8 + $0x2f0] sm:$0xff]
    %v1258 = vld [vmem:[#allocation8 + $0x2f8] sm:$0xff]
    %v1259 = vld [vmem:[#allocation8 + $0x300] sm:$0xff]
    %v1260 = vld [vmem:[#allocation8 + $0x308] sm:$0xff]
    %v1261 = vld [vmem:[#allocation8 + $0x310] sm:$0xff]
    %v1262 = vld [vmem:[#allocation8 + $0x318] sm:$0xff]
    %v1263 = vld [vmem:[#allocation8 + $0x320] sm:$0xff]
    %v1264 = vld [vmem:[#allocation8 + $0x328] sm:$0xff]
    %v1265 = vld [vmem:[#allocation8 + $0x330] sm:$0xff]
    %v1266 = vld [vmem:[#allocation8 + $0x338] sm:$0xff]
    %v1267 = vld [vmem:[#allocation8 + $0x340] sm:$0xff]
    %v1268 = vld [vmem:[#allocation8 + $0x348] sm:$0xff]
    %v1269 = vld [vmem:[#allocation8 + $0x350] sm:$0xff]
    %v1270 = vld [vmem:[#allocation8 + $0x358] sm:$0xff]
    %v1271 = vld [vmem:[#allocation8 + $0x360] sm:$0xff]
    %v1272 = vld [vmem:[#allocation8 + $0x368] sm:$0xff]
    %v1273 = vld [vmem:[#allocation8 + $0x370] sm:$0xff]
    %v1274 = vld [vmem:[#allocation8 + $0x378] sm:$0xff]
    %v1275 = vld [vmem:[#allocation8 + $0x380] sm:$0xff]
    %v1276 = vld [vmem:[#allocation8 + $0x388] sm:$0xff]
    %v1277 = vld [vmem:[#allocation8 + $0x390] sm:$0xff]
    %v1278 = vld [vmem:[#allocation8 + $0x398] sm:$0xff]
    %v1279 = vld [vmem:[#allocation8 + $0x3a0] sm:$0xff]
    %v1280 = vld [vmem:[#allocation8 + $0x3a8] sm:$0xff]
    %v1281 = vld [vmem:[#allocation8 + $0x3b0] sm:$0xff]
    %v1282 = vld [vmem:[#allocation8 + $0x3b8] sm:$0xff]
    %v1283 = vld [vmem:[#allocation8 + $0x3c0] sm:$0xff]
    %v1284 = vld [vmem:[#allocation8 + $0x3c8] sm:$0xff]
    %v1285 = vld [vmem:[#allocation8 + $0x3d0] sm:$0xff]
    %v1286 = vld [vmem:[#allocation8 + $0x3d8] sm:$0xff]
    %v1287 = vld [vmem:[#allocation8 + $0x3e0] sm:$0xff]
    %v1288 = vld [vmem:[#allocation8 + $0x3e8] sm:$0xff]
    %v1289 = vld [vmem:[#allocation8 + $0x3f0] sm:$0xff]
    %v1290 = vld [vmem:[#allocation8 + $0x3f8] sm:$0xff]
    %v1291 = vld [vmem:[#allocation8 + $0x400] sm:$0xff]
    %v1292 = vld [vmem:[#allocation8 + $0x408] sm:$0xff]
    %v1293 = vld [vmem:[#allocation8 + $0x410] sm:$0xff]
    %v1294 = vld [vmem:[#allocation8 + $0x418] sm:$0xff]
    %v1295 = vld [vmem:[#allocation8 + $0x420] sm:$0xff]
    %v1296 = vld [vmem:[#allocation8 + $0x428] sm:$0xff]
    %v1297 = vld [vmem:[#allocation8 + $0x430] sm:$0xff]
    %v1298 = vld [vmem:[#allocation8 + $0x438] sm:$0xff]
    %v1299 = vld [vmem:[#allocation8 + $0x440] sm:$0xff]
    %v1300 = vld [vmem:[#allocation8 + $0x448] sm:$0xff]
    %v1301 = vld [vmem:[#allocation8 + $0x450] sm:$0xff]
    %v1302 = vld [vmem:[#allocation8 + $0x458] sm:$0xff]
    %v1303 = vld [vmem:[#allocation8 + $0x460] sm:$0xff]
    %v1304 = vld [vmem:[#allocation8 + $0x468] sm:$0xff]
    %v1305 = vld [vmem:[#allocation8 + $0x470] sm:$0xff]
    %v1306 = vld [vmem:[#allocation8 + $0x478] sm:$0xff]
    %v1307 = vld [vmem:[#allocation8 + $0x480] sm:$0xff]
    %v1308 = vld [vmem:[#allocation8 + $0x488] sm:$0xff]
    %v1309 = vld [vmem:[#allocation8 + $0x490] sm:$0xff]
    %v1310 = vld [vmem:[#allocation8 + $0x498] sm:$0xff]
    %v1311 = vld [vmem:[#allocation8 + $0x4a0] sm:$0xff]
    %v1312 = vld [vmem:[#allocation8 + $0x4a8] sm:$0xff]
    %v1313 = vld [vmem:[#allocation8 + $0x4b0] sm:$0xff]
    %v1314 = vld [vmem:[#allocation8 + $0x4b8] sm:$0xff]
    %v1315 = vld [vmem:[#allocation8 + $0x4c0] sm:$0xff]
    %v1316 = vld [vmem:[#allocation8 + $0x4c8] sm:$0xff]
    %v1317 = vld [vmem:[#allocation8 + $0x4d0] sm:$0xff]
    %v1318 = vld [vmem:[#allocation8 + $0x4d8] sm:$0xff]
    %v1319 = vld [vmem:[#allocation8 + $0x4e0] sm:$0xff]
    %v1320 = vld [vmem:[#allocation8 + $0x4e8] sm:$0xff]
    %v1321 = vld [vmem:[#allocation8 + $0x4f0] sm:$0xff]
    %v1322 = vld [vmem:[#allocation8 + $0x4f8] sm:$0xff]
    %v1323 = vld [vmem:[#allocation8 + $0x500] sm:$0xff]
    %v1324 = vld [vmem:[#allocation8 + $0x508] sm:$0xff]
    %v1325 = vld [vmem:[#allocation8 + $0x510] sm:$0xff]
    %v1326 = vld [vmem:[#allocation8 + $0x518] sm:$0xff]
    %v1327 = vld [vmem:[#allocation8 + $0x520] sm:$0xff]
    %v1328 = vld [vmem:[#allocation8 + $0x528] sm:$0xff]
    %v1329 = vld [vmem:[#allocation8 + $0x530] sm:$0xff]
    %v1330 = vld [vmem:[#allocation8 + $0x538] sm:$0xff]
    %v1331 = vld [vmem:[#allocation8 + $0x540] sm:$0xff]
    %v1332 = vld [vmem:[#allocation8 + $0x548] sm:$0xff]
    %v1333 = vld [vmem:[#allocation8 + $0x550] sm:$0xff]
    %v1334 = vld [vmem:[#allocation8 + $0x558] sm:$0xff]
    %v1335 = vld [vmem:[#allocation8 + $0x560] sm:$0xff]
    %v1336 = vld [vmem:[#allocation8 + $0x568] sm:$0xff]
    %v1337 = vld [vmem:[#allocation8 + $0x570] sm:$0xff]
    %v1338 = vld [vmem:[#allocation8 + $0x578] sm:$0xff]
    %v1339 = vld [vmem:[#allocation8 + $0x580] sm:$0xff]
    %v1340 = vld [vmem:[#allocation8 + $0x588] sm:$0xff]
    %v1341 = vld [vmem:[#allocation8 + $0x590] sm:$0xff]
    %v1342 = vld [vmem:[#allocation8 + $0x598] sm:$0xff]
    %v1343 = vld [vmem:[#allocation8 + $0x5a0] sm:$0xff]
    %v1344 = vld [vmem:[#allocation8 + $0x5a8] sm:$0xff]
    %v1345 = vld [vmem:[#allocation8 + $0x5b0] sm:$0xff]
    %v1346 = vld [vmem:[#allocation8 + $0x5b8] sm:$0xff]
    %v1347 = vld [vmem:[#allocation8 + $0x5c0] sm:$0xff]
    %v1348 = vld [vmem:[#allocation8 + $0x5c8] sm:$0xff]
    %v1349 = vld [vmem:[#allocation8 + $0x5d0] sm:$0xff]
    %v1350 = vld [vmem:[#allocation8 + $0x5d8] sm:$0xff]
    %v1351 = vld [vmem:[#allocation8 + $0x5e0] sm:$0xff]
    %v1352 = vld [vmem:[#allocation8 + $0x5e8] sm:$0xff]
    %v1353 = vld [vmem:[#allocation8 + $0x5f0] sm:$0xff]
    %v1354 = vld [vmem:[#allocation8 + $0x5f8] sm:$0xff]
    %v1355 = vld [vmem:[#allocation8 + $0x600] sm:$0xff]
    %v1356 = vld [vmem:[#allocation8 + $0x608] sm:$0xff]
    %v1357 = vld [vmem:[#allocation8 + $0x610] sm:$0xff]
    %v1358 = vld [vmem:[#allocation8 + $0x618] sm:$0xff]
    %v1359 = vld [vmem:[#allocation8 + $0x620] sm:$0xff]
    %v1360 = vld [vmem:[#allocation8 + $0x628] sm:$0xff]
    %v1361 = vld [vmem:[#allocation8 + $0x630] sm:$0xff]
    %v1362 = vld [vmem:[#allocation8 + $0x638] sm:$0xff]
    %v1363 = vld [vmem:[#allocation8 + $0x640] sm:$0xff]
    %v1364 = vld [vmem:[#allocation8 + $0x648] sm:$0xff]
    %v1365 = vld [vmem:[#allocation8 + $0x650] sm:$0xff]
    %v1366 = vld [vmem:[#allocation8 + $0x658] sm:$0xff]
    %v1367 = vld [vmem:[#allocation8 + $0x660] sm:$0xff]
    %v1368 = vld [vmem:[#allocation8 + $0x668] sm:$0xff]
    %v1369 = vld [vmem:[#allocation8 + $0x670] sm:$0xff]
    %v1370 = vld [vmem:[#allocation8 + $0x678] sm:$0xff]
    %v1371 = vld [vmem:[#allocation8 + $0x680] sm:$0xff]
    %v1372 = vld [vmem:[#allocation8 + $0x688] sm:$0xff]
    %v1373 = vld [vmem:[#allocation8 + $0x690] sm:$0xff]
    %v1374 = vld [vmem:[#allocation8 + $0x698] sm:$0xff]
    %v1375 = vld [vmem:[#allocation8 + $0x6a0] sm:$0xff]
    %v1376 = vld [vmem:[#allocation8 + $0x6a8] sm:$0xff]
    %v1377 = vld [vmem:[#allocation8 + $0x6b0] sm:$0xff]
    %v1378 = vld [vmem:[#allocation8 + $0x6b8] sm:$0xff]
    %v1379 = vld [vmem:[#allocation8 + $0x6c0] sm:$0xff]
    %v1380 = vld [vmem:[#allocation8 + $0x6c8] sm:$0xff]
    %v1381 = vld [vmem:[#allocation8 + $0x6d0] sm:$0xff]
    %v1382 = vld [vmem:[#allocation8 + $0x6d8] sm:$0xff]
    %v1383 = vld [vmem:[#allocation8 + $0x6e0] sm:$0xff]
    %v1384 = vld [vmem:[#allocation8 + $0x6e8] sm:$0xff]
    %v1385 = vld [vmem:[#allocation8 + $0x6f0] sm:$0xff]
    %v1386 = vld [vmem:[#allocation8 + $0x6f8] sm:$0xff]
    %v1387 = vld [vmem:[#allocation8 + $0x700] sm:$0xff]
    %v1388 = vld [vmem:[#allocation8 + $0x708] sm:$0xff]
    %v1389 = vld [vmem:[#allocation8 + $0x710] sm:$0xff]
    %v1390 = vld [vmem:[#allocation8 + $0x718] sm:$0xff]
    %v1391 = vld [vmem:[#allocation8 + $0x720] sm:$0xff]
    %v1392 = vld [vmem:[#allocation8 + $0x728] sm:$0xff]
    %v1393 = vld [vmem:[#allocation8 + $0x730] sm:$0xff]
    %v1394 = vld [vmem:[#allocation8 + $0x738] sm:$0xff]
    %v1395 = vld [vmem:[#allocation8 + $0x740] sm:$0xff]
    %v1396 = vld [vmem:[#allocation8 + $0x748] sm:$0xff]
    %v1397 = vld [vmem:[#allocation8 + $0x750] sm:$0xff]
    %v1398 = vld [vmem:[#allocation8 + $0x758] sm:$0xff]
    %v1399 = vld [vmem:[#allocation8 + $0x760] sm:$0xff]
    %v1400 = vld [vmem:[#allocation8 + $0x768] sm:$0xff]
    %v1401 = vld [vmem:[#allocation8 + $0x770] sm:$0xff]
    %v1402 = vld [vmem:[#allocation8 + $0x778] sm:$0xff]
    %v1403 = vld [vmem:[#allocation8 + $0x780] sm:$0xff]
    %v1404 = vld [vmem:[#allocation8 + $0x788] sm:$0xff]
    %v1405 = vld [vmem:[#allocation8 + $0x790] sm:$0xff]
    %v1406 = vld [vmem:[#allocation8 + $0x798] sm:$0xff]
    %v1407 = vld [vmem:[#allocation8 + $0x7a0] sm:$0xff]
    %v1408 = vld [vmem:[#allocation8 + $0x7a8] sm:$0xff]
    %v1409 = vld [vmem:[#allocation8 + $0x7b0] sm:$0xff]
    %v1410 = vld [vmem:[#allocation8 + $0x7b8] sm:$0xff]
    %v1411 = vld [vmem:[#allocation8 + $0x7c0] sm:$0xff]
    %v1412 = vld [vmem:[#allocation8 + $0x7c8] sm:$0xff]
    %v1413 = vld [vmem:[#allocation8 + $0x7d0] sm:$0xff]
    %v1414 = vld [vmem:[#allocation8 + $0x7d8] sm:$0xff]
    %v1415 = vld [vmem:[#allocation8 + $0x7e0] sm:$0xff]
    %v1416 = vld [vmem:[#allocation8 + $0x7e8] sm:$0xff]
    %v1417 = vld [vmem:[#allocation8 + $0x7f0] sm:$0xff]
    %v1418 = vld [vmem:[#allocation8 + $0x7f8] sm:$0xff]
    %v1419 = vld [vmem:[#allocation10] sm:$0xf]
    %v1421 = vperm.slane %v1419, 0
    %v1422 = vperm.slane %v1419, 1
    %v1423 = vperm.slane %v1419, 2
    %v1424 = vperm.slane %v1419, 3
    %v1685 = vunpack.c.l.b16 %v1163
    %v1686 = vunpack.c.h.b16 %v1163
    %v1687 = vunpack.c.l.b16 %v1164
    %v1688 = vunpack.c.h.b16 %v1164
    %v1689 = vunpack.c.l.b16 %v1165
    %v1690 = vunpack.c.h.b16 %v1165
    %v1691 = vunpack.c.l.b16 %v1166
    %v1692 = vunpack.c.h.b16 %v1166
    %v1693 = vunpack.c.l.b16 %v1167
    %v1694 = vunpack.c.h.b16 %v1167
    %v1695 = vunpack.c.l.b16 %v1168
    %v1696 = vunpack.c.h.b16 %v1168
    %v1697 = vunpack.c.l.b16 %v1169
    %v1698 = vunpack.c.h.b16 %v1169
    %v1699 = vunpack.c.l.b16 %v1170
    %v1700 = vunpack.c.h.b16 %v1170
    %v1701 = vunpack.c.l.b16 %v1171
    %v1702 = vunpack.c.h.b16 %v1171
    %v1703 = vunpack.c.l.b16 %v1172
    %v1704 = vunpack.c.h.b16 %v1172
    %v1705 = vunpack.c.l.b16 %v1173
    %v1706 = vunpack.c.h.b16 %v1173
    %v1707 = vunpack.c.l.b16 %v1174
    %v1708 = vunpack.c.h.b16 %v1174
    %v1709 = vunpack.c.l.b16 %v1175
    %v1710 = vunpack.c.h.b16 %v1175
    %v1711 = vunpack.c.l.b16 %v1176
    %v1712 = vunpack.c.h.b16 %v1176
    %v1713 = vunpack.c.l.b16 %v1177
    %v1714 = vunpack.c.h.b16 %v1177
    %v1715 = vunpack.c.l.b16 %v1178
    %v1716 = vunpack.c.h.b16 %v1178
    %v1717 = vunpack.c.l.b16 %v1179
    %v1718 = vunpack.c.h.b16 %v1179
    %v1719 = vunpack.c.l.b16 %v1180
    %v1720 = vunpack.c.h.b16 %v1180
    %v1721 = vunpack.c.l.b16 %v1181
    %v1722 = vunpack.c.h.b16 %v1181
    %v1723 = vunpack.c.l.b16 %v1182
    %v1724 = vunpack.c.h.b16 %v1182
    %v1725 = vunpack.c.l.b16 %v1183
    %v1726 = vunpack.c.h.b16 %v1183
    %v1727 = vunpack.c.l.b16 %v1184
    %v1728 = vunpack.c.h.b16 %v1184
    %v1729 = vunpack.c.l.b16 %v1185
    %v1730 = vunpack.c.h.b16 %v1185
    %v1731 = vunpack.c.l.b16 %v1186
    %v1732 = vunpack.c.h.b16 %v1186
    %v1733 = vunpack.c.l.b16 %v1187
    %v1734 = vunpack.c.h.b16 %v1187
    %v1735 = vunpack.c.l.b16 %v1188
    %v1736 = vunpack.c.h.b16 %v1188
    %v1737 = vunpack.c.l.b16 %v1189
    %v1738 = vunpack.c.h.b16 %v1189
    %v1739 = vunpack.c.l.b16 %v1190
    %v1740 = vunpack.c.h.b16 %v1190
    %v1741 = vunpack.c.l.b16 %v1191
    %v1742 = vunpack.c.h.b16 %v1191
    %v1743 = vunpack.c.l.b16 %v1192
    %v1744 = vunpack.c.h.b16 %v1192
    %v1745 = vunpack.c.l.b16 %v1193
    %v1746 = vunpack.c.h.b16 %v1193
    %v1747 = vunpack.c.l.b16 %v1194
    %v1748 = vunpack.c.h.b16 %v1194
    %v1749 = vunpack.c.l.b16 %v1195
    %v1750 = vunpack.c.h.b16 %v1195
    %v1751 = vunpack.c.l.b16 %v1196
    %v1752 = vunpack.c.h.b16 %v1196
    %v1753 = vunpack.c.l.b16 %v1197
    %v1754 = vunpack.c.h.b16 %v1197
    %v1755 = vunpack.c.l.b16 %v1198
    %v1756 = vunpack.c.h.b16 %v1198
    %v1757 = vunpack.c.l.b16 %v1199
    %v1758 = vunpack.c.h.b16 %v1199
    %v1759 = vunpack.c.l.b16 %v1200
    %v1760 = vunpack.c.h.b16 %v1200
    %v1761 = vunpack.c.l.b16 %v1201
    %v1762 = vunpack.c.h.b16 %v1201
    %v1763 = vunpack.c.l.b16 %v1202
    %v1764 = vunpack.c.h.b16 %v1202
    %v1765 = vunpack.c.l.b16 %v1203
    %v1766 = vunpack.c.h.b16 %v1203
    %v1767 = vunpack.c.l.b16 %v1204
    %v1768 = vunpack.c.h.b16 %v1204
    %v1769 = vunpack.c.l.b16 %v1205
    %v1770 = vunpack.c.h.b16 %v1205
    %v1771 = vunpack.c.l.b16 %v1206
    %v1772 = vunpack.c.h.b16 %v1206
    %v1773 = vunpack.c.l.b16 %v1207
    %v1774 = vunpack.c.h.b16 %v1207
    %v1775 = vunpack.c.l.b16 %v1208
    %v1776 = vunpack.c.h.b16 %v1208
    %v1777 = vunpack.c.l.b16 %v1209
    %v1778 = vunpack.c.h.b16 %v1209
    %v1779 = vunpack.c.l.b16 %v1210
    %v1780 = vunpack.c.h.b16 %v1210
    %v1781 = vunpack.c.l.b16 %v1211
    %v1782 = vunpack.c.h.b16 %v1211
    %v1783 = vunpack.c.l.b16 %v1212
    %v1784 = vunpack.c.h.b16 %v1212
    %v1785 = vunpack.c.l.b16 %v1213
    %v1786 = vunpack.c.h.b16 %v1213
    %v1787 = vunpack.c.l.b16 %v1214
    %v1788 = vunpack.c.h.b16 %v1214
    %v1789 = vunpack.c.l.b16 %v1215
    %v1790 = vunpack.c.h.b16 %v1215
    %v1791 = vunpack.c.l.b16 %v1216
    %v1792 = vunpack.c.h.b16 %v1216
    %v1793 = vunpack.c.l.b16 %v1217
    %v1794 = vunpack.c.h.b16 %v1217
    %v1795 = vunpack.c.l.b16 %v1218
    %v1796 = vunpack.c.h.b16 %v1218
    %v1797 = vunpack.c.l.b16 %v1219
    %v1798 = vunpack.c.h.b16 %v1219
    %v1799 = vunpack.c.l.b16 %v1220
    %v1800 = vunpack.c.h.b16 %v1220
    %v1801 = vunpack.c.l.b16 %v1221
    %v1802 = vunpack.c.h.b16 %v1221
    %v1803 = vunpack.c.l.b16 %v1222
    %v1804 = vunpack.c.h.b16 %v1222
    %v1805 = vunpack.c.l.b16 %v1223
    %v1806 = vunpack.c.h.b16 %v1223
    %v1807 = vunpack.c.l.b16 %v1224
    %v1808 = vunpack.c.h.b16 %v1224
    %v1809 = vunpack.c.l.b16 %v1225
    %v1810 = vunpack.c.h.b16 %v1225
    %v1811 = vunpack.c.l.b16 %v1226
    %v1812 = vunpack.c.h.b16 %v1226
    %v1813 = vunpack.c.l.b16 %v1227
    %v1814 = vunpack.c.h.b16 %v1227
    %v1815 = vunpack.c.l.b16 %v1228
    %v1816 = vunpack.c.h.b16 %v1228
    %v1817 = vunpack.c.l.b16 %v1229
    %v1818 = vunpack.c.h.b16 %v1229
    %v1819 = vunpack.c.l.b16 %v1230
    %v1820 = vunpack.c.h.b16 %v1230
    %v1821 = vunpack.c.l.b16 %v1231
    %v1822 = vunpack.c.h.b16 %v1231
    %v1823 = vunpack.c.l.b16 %v1232
    %v1824 = vunpack.c.h.b16 %v1232
    %v1825 = vunpack.c.l.b16 %v1233
    %v1826 = vunpack.c.h.b16 %v1233
    %v1827 = vunpack.c.l.b16 %v1234
    %v1828 = vunpack.c.h.b16 %v1234
    %v1829 = vunpack.c.l.b16 %v1235
    %v1830 = vunpack.c.h.b16 %v1235
    %v1831 = vunpack.c.l.b16 %v1236
    %v1832 = vunpack.c.h.b16 %v1236
    %v1833 = vunpack.c.l.b16 %v1237
    %v1834 = vunpack.c.h.b16 %v1237
    %v1835 = vunpack.c.l.b16 %v1238
    %v1836 = vunpack.c.h.b16 %v1238
    %v1837 = vunpack.c.l.b16 %v1239
    %v1838 = vunpack.c.h.b16 %v1239
    %v1839 = vunpack.c.l.b16 %v1240
    %v1840 = vunpack.c.h.b16 %v1240
    %v1841 = vunpack.c.l.b16 %v1241
    %v1842 = vunpack.c.h.b16 %v1241
    %v1843 = vunpack.c.l.b16 %v1242
    %v1844 = vunpack.c.h.b16 %v1242
    %v1845 = vunpack.c.l.b16 %v1243
    %v1846 = vunpack.c.h.b16 %v1243
    %v1847 = vunpack.c.l.b16 %v1244
    %v1848 = vunpack.c.h.b16 %v1244
    %v1849 = vunpack.c.l.b16 %v1245
    %v1850 = vunpack.c.h.b16 %v1245
    %v1851 = vunpack.c.l.b16 %v1246
    %v1852 = vunpack.c.h.b16 %v1246
    %v1853 = vunpack.c.l.b16 %v1247
    %v1854 = vunpack.c.h.b16 %v1247
    %v1855 = vunpack.c.l.b16 %v1248
    %v1856 = vunpack.c.h.b16 %v1248
    %v1857 = vunpack.c.l.b16 %v1249
    %v1858 = vunpack.c.h.b16 %v1249
    %v1859 = vunpack.c.l.b16 %v1250
    %v1860 = vunpack.c.h.b16 %v1250
    %v1861 = vunpack.c.l.b16 %v1251
    %v1862 = vunpack.c.h.b16 %v1251
    %v1863 = vunpack.c.l.b16 %v1252
    %v1864 = vunpack.c.h.b16 %v1252
    %v1865 = vunpack.c.l.b16 %v1253
    %v1866 = vunpack.c.h.b16 %v1253
    %v1867 = vunpack.c.l.b16 %v1254
    %v1868 = vunpack.c.h.b16 %v1254
    %v1869 = vunpack.c.l.b16 %v1255
    %v1870 = vunpack.c.h.b16 %v1255
    %v1871 = vunpack.c.l.b16 %v1256
    %v1872 = vunpack.c.h.b16 %v1256
    %v1873 = vunpack.c.l.b16 %v1257
    %v1874 = vunpack.c.h.b16 %v1257
    %v1875 = vunpack.c.l.b16 %v1258
    %v1876 = vunpack.c.h.b16 %v1258
    %v1877 = vunpack.c.l.b16 %v1259
    %v1878 = vunpack.c.h.b16 %v1259
    %v1879 = vunpack.c.l.b16 %v1260
    %v1880 = vunpack.c.h.b16 %v1260
    %v1881 = vunpack.c.l.b16 %v1261
    %v1882 = vunpack.c.h.b16 %v1261
    %v1883 = vunpack.c.l.b16 %v1262
    %v1884 = vunpack.c.h.b16 %v1262
    %v1885 = vunpack.c.l.b16 %v1263
    %v1886 = vunpack.c.h.b16 %v1263
    %v1887 = vunpack.c.l.b16 %v1264
    %v1888 = vunpack.c.h.b16 %v1264
    %v1889 = vunpack.c.l.b16 %v1265
    %v1890 = vunpack.c.h.b16 %v1265
    %v1891 = vunpack.c.l.b16 %v1266
    %v1892 = vunpack.c.h.b16 %v1266
    %v1893 = vunpack.c.l.b16 %v1267
    %v1894 = vunpack.c.h.b16 %v1267
    %v1895 = vunpack.c.l.b16 %v1268
    %v1896 = vunpack.c.h.b16 %v1268
    %v1897 = vunpack.c.l.b16 %v1269
    %v1898 = vunpack.c.h.b16 %v1269
    %v1899 = vunpack.c.l.b16 %v1270
    %v1900 = vunpack.c.h.b16 %v1270
    %v1901 = vunpack.c.l.b16 %v1271
    %v1902 = vunpack.c.h.b16 %v1271
    %v1903 = vunpack.c.l.b16 %v1272
    %v1904 = vunpack.c.h.b16 %v1272
    %v1905 = vunpack.c.l.b16 %v1273
    %v1906 = vunpack.c.h.b16 %v1273
    %v1907 = vunpack.c.l.b16 %v1274
    %v1908 = vunpack.c.h.b16 %v1274
    %v1909 = vunpack.c.l.b16 %v1275
    %v1910 = vunpack.c.h.b16 %v1275
    %v1911 = vunpack.c.l.b16 %v1276
    %v1912 = vunpack.c.h.b16 %v1276
    %v1913 = vunpack.c.l.b16 %v1277
    %v1914 = vunpack.c.h.b16 %v1277
    %v1915 = vunpack.c.l.b16 %v1278
    %v1916 = vunpack.c.h.b16 %v1278
    %v1917 = vunpack.c.l.b16 %v1279
    %v1918 = vunpack.c.h.b16 %v1279
    %v1919 = vunpack.c.l.b16 %v1280
    %v1920 = vunpack.c.h.b16 %v1280
    %v1921 = vunpack.c.l.b16 %v1281
    %v1922 = vunpack.c.h.b16 %v1281
    %v1923 = vunpack.c.l.b16 %v1282
    %v1924 = vunpack.c.h.b16 %v1282
    %v1925 = vunpack.c.l.b16 %v1283
    %v1926 = vunpack.c.h.b16 %v1283
    %v1927 = vunpack.c.l.b16 %v1284
    %v1928 = vunpack.c.h.b16 %v1284
    %v1929 = vunpack.c.l.b16 %v1285
    %v1930 = vunpack.c.h.b16 %v1285
    %v1931 = vunpack.c.l.b16 %v1286
    %v1932 = vunpack.c.h.b16 %v1286
    %v1933 = vunpack.c.l.b16 %v1287
    %v1934 = vunpack.c.h.b16 %v1287
    %v1935 = vunpack.c.l.b16 %v1288
    %v1936 = vunpack.c.h.b16 %v1288
    %v1937 = vunpack.c.l.b16 %v1289
    %v1938 = vunpack.c.h.b16 %v1289
    %v1939 = vunpack.c.l.b16 %v1290
    %v1940 = vunpack.c.h.b16 %v1290
    %v1941 = vunpack.c.l.b16 %v1291
    %v1942 = vunpack.c.h.b16 %v1291
    %v1943 = vunpack.c.l.b16 %v1292
    %v1944 = vunpack.c.h.b16 %v1292
    %v1945 = vunpack.c.l.b16 %v1293
    %v1946 = vunpack.c.h.b16 %v1293
    %v1947 = vunpack.c.l.b16 %v1294
    %v1948 = vunpack.c.h.b16 %v1294
    %v1949 = vunpack.c.l.b16 %v1295
    %v1950 = vunpack.c.h.b16 %v1295
    %v1951 = vunpack.c.l.b16 %v1296
    %v1952 = vunpack.c.h.b16 %v1296
    %v1953 = vunpack.c.l.b16 %v1297
    %v1954 = vunpack.c.h.b16 %v1297
    %v1955 = vunpack.c.l.b16 %v1298
    %v1956 = vunpack.c.h.b16 %v1298
    %v1957 = vunpack.c.l.b16 %v1299
    %v1958 = vunpack.c.h.b16 %v1299
    %v1959 = vunpack.c.l.b16 %v1300
    %v1960 = vunpack.c.h.b16 %v1300
    %v1961 = vunpack.c.l.b16 %v1301
    %v1962 = vunpack.c.h.b16 %v1301
    %v1963 = vunpack.c.l.b16 %v1302
    %v1964 = vunpack.c.h.b16 %v1302
    %v1965 = vunpack.c.l.b16 %v1303
    %v1966 = vunpack.c.h.b16 %v1303
    %v1967 = vunpack.c.l.b16 %v1304
    %v1968 = vunpack.c.h.b16 %v1304
    %v1969 = vunpack.c.l.b16 %v1305
    %v1970 = vunpack.c.h.b16 %v1305
    %v1971 = vunpack.c.l.b16 %v1306
    %v1972 = vunpack.c.h.b16 %v1306
    %v1973 = vunpack.c.l.b16 %v1307
    %v1974 = vunpack.c.h.b16 %v1307
    %v1975 = vunpack.c.l.b16 %v1308
    %v1976 = vunpack.c.h.b16 %v1308
    %v1977 = vunpack.c.l.b16 %v1309
    %v1978 = vunpack.c.h.b16 %v1309
    %v1979 = vunpack.c.l.b16 %v1310
    %v1980 = vunpack.c.h.b16 %v1310
    %v1981 = vunpack.c.l.b16 %v1311
    %v1982 = vunpack.c.h.b16 %v1311
    %v1983 = vunpack.c.l.b16 %v1312
    %v1984 = vunpack.c.h.b16 %v1312
    %v1985 = vunpack.c.l.b16 %v1313
    %v1986 = vunpack.c.h.b16 %v1313
    %v1987 = vunpack.c.l.b16 %v1314
    %v1988 = vunpack.c.h.b16 %v1314
    %v1989 = vunpack.c.l.b16 %v1315
    %v1990 = vunpack.c.h.b16 %v1315
    %v1991 = vunpack.c.l.b16 %v1316
    %v1992 = vunpack.c.h.b16 %v1316
    %v1993 = vunpack.c.l.b16 %v1317
    %v1994 = vunpack.c.h.b16 %v1317
    %v1995 = vunpack.c.l.b16 %v1318
    %v1996 = vunpack.c.h.b16 %v1318
    %v1997 = vunpack.c.l.b16 %v1319
    %v1998 = vunpack.c.h.b16 %v1319
    %v1999 = vunpack.c.l.b16 %v1320
    %v2000 = vunpack.c.h.b16 %v1320
    %v2001 = vunpack.c.l.b16 %v1321
    %v2002 = vunpack.c.h.b16 %v1321
    %v2003 = vunpack.c.l.b16 %v1322
    %v2004 = vunpack.c.h.b16 %v1322
    %v2005 = vunpack.c.l.b16 %v1323
    %v2006 = vunpack.c.h.b16 %v1323
    %v2007 = vunpack.c.l.b16 %v1324
    %v2008 = vunpack.c.h.b16 %v1324
    %v2009 = vunpack.c.l.b16 %v1325
    %v2010 = vunpack.c.h.b16 %v1325
    %v2011 = vunpack.c.l.b16 %v1326
    %v2012 = vunpack.c.h.b16 %v1326
    %v2013 = vunpack.c.l.b16 %v1327
    %v2014 = vunpack.c.h.b16 %v1327
    %v2015 = vunpack.c.l.b16 %v1328
    %v2016 = vunpack.c.h.b16 %v1328
    %v2017 = vunpack.c.l.b16 %v1329
    %v2018 = vunpack.c.h.b16 %v1329
    %v2019 = vunpack.c.l.b16 %v1330
    %v2020 = vunpack.c.h.b16 %v1330
    %v2021 = vunpack.c.l.b16 %v1331
    %v2022 = vunpack.c.h.b16 %v1331
    %v2023 = vunpack.c.l.b16 %v1332
    %v2024 = vunpack.c.h.b16 %v1332
    %v2025 = vunpack.c.l.b16 %v1333
    %v2026 = vunpack.c.h.b16 %v1333
    %v2027 = vunpack.c.l.b16 %v1334
    %v2028 = vunpack.c.h.b16 %v1334
    %v2029 = vunpack.c.l.b16 %v1335
    %v2030 = vunpack.c.h.b16 %v1335
    %v2031 = vunpack.c.l.b16 %v1336
    %v2032 = vunpack.c.h.b16 %v1336
    %v2033 = vunpack.c.l.b16 %v1337
    %v2034 = vunpack.c.h.b16 %v1337
    %v2035 = vunpack.c.l.b16 %v1338
    %v2036 = vunpack.c.h.b16 %v1338
    %v2037 = vunpack.c.l.b16 %v1339
    %v2038 = vunpack.c.h.b16 %v1339
    %v2039 = vunpack.c.l.b16 %v1340
    %v2040 = vunpack.c.h.b16 %v1340
    %v2041 = vunpack.c.l.b16 %v1341
    %v2042 = vunpack.c.h.b16 %v1341
    %v2043 = vunpack.c.l.b16 %v1342
    %v2044 = vunpack.c.h.b16 %v1342
    %v2045 = vunpack.c.l.b16 %v1343
    %v2046 = vunpack.c.h.b16 %v1343
    %v2047 = vunpack.c.l.b16 %v1344
    %v2048 = vunpack.c.h.b16 %v1344
    %v2049 = vunpack.c.l.b16 %v1345
    %v2050 = vunpack.c.h.b16 %v1345
    %v2051 = vunpack.c.l.b16 %v1346
    %v2052 = vunpack.c.h.b16 %v1346
    %v2053 = vunpack.c.l.b16 %v1347
    %v2054 = vunpack.c.h.b16 %v1347
    %v2055 = vunpack.c.l.b16 %v1348
    %v2056 = vunpack.c.h.b16 %v1348
    %v2057 = vunpack.c.l.b16 %v1349
    %v2058 = vunpack.c.h.b16 %v1349
    %v2059 = vunpack.c.l.b16 %v1350
    %v2060 = vunpack.c.h.b16 %v1350
    %v2061 = vunpack.c.l.b16 %v1351
    %v2062 = vunpack.c.h.b16 %v1351
    %v2063 = vunpack.c.l.b16 %v1352
    %v2064 = vunpack.c.h.b16 %v1352
    %v2065 = vunpack.c.l.b16 %v1353
    %v2066 = vunpack.c.h.b16 %v1353
    %v2067 = vunpack.c.l.b16 %v1354
    %v2068 = vunpack.c.h.b16 %v1354
    %v2069 = vunpack.c.l.b16 %v1355
    %v2070 = vunpack.c.h.b16 %v1355
    %v2071 = vunpack.c.l.b16 %v1356
    %v2072 = vunpack.c.h.b16 %v1356
    %v2073 = vunpack.c.l.b16 %v1357
    %v2074 = vunpack.c.h.b16 %v1357
    %v2075 = vunpack.c.l.b16 %v1358
    %v2076 = vunpack.c.h.b16 %v1358
    %v2077 = vunpack.c.l.b16 %v1359
    %v2078 = vunpack.c.h.b16 %v1359
    %v2079 = vunpack.c.l.b16 %v1360
    %v2080 = vunpack.c.h.b16 %v1360
    %v2081 = vunpack.c.l.b16 %v1361
    %v2082 = vunpack.c.h.b16 %v1361
    %v2083 = vunpack.c.l.b16 %v1362
    %v2084 = vunpack.c.h.b16 %v1362
    %v2085 = vunpack.c.l.b16 %v1363
    %v2086 = vunpack.c.h.b16 %v1363
    %v2087 = vunpack.c.l.b16 %v1364
    %v2088 = vunpack.c.h.b16 %v1364
    %v2089 = vunpack.c.l.b16 %v1365
    %v2090 = vunpack.c.h.b16 %v1365
    %v2091 = vunpack.c.l.b16 %v1366
    %v2092 = vunpack.c.h.b16 %v1366
    %v2093 = vunpack.c.l.b16 %v1367
    %v2094 = vunpack.c.h.b16 %v1367
    %v2095 = vunpack.c.l.b16 %v1368
    %v2096 = vunpack.c.h.b16 %v1368
    %v2097 = vunpack.c.l.b16 %v1369
    %v2098 = vunpack.c.h.b16 %v1369
    %v2099 = vunpack.c.l.b16 %v1370
    %v2100 = vunpack.c.h.b16 %v1370
    %v2101 = vunpack.c.l.b16 %v1371
    %v2102 = vunpack.c.h.b16 %v1371
    %v2103 = vunpack.c.l.b16 %v1372
    %v2104 = vunpack.c.h.b16 %v1372
    %v2105 = vunpack.c.l.b16 %v1373
    %v2106 = vunpack.c.h.b16 %v1373
    %v2107 = vunpack.c.l.b16 %v1374
    %v2108 = vunpack.c.h.b16 %v1374
    %v2109 = vunpack.c.l.b16 %v1375
    %v2110 = vunpack.c.h.b16 %v1375
    %v2111 = vunpack.c.l.b16 %v1376
    %v2112 = vunpack.c.h.b16 %v1376
    %v2113 = vunpack.c.l.b16 %v1377
    %v2114 = vunpack.c.h.b16 %v1377
    %v2115 = vunpack.c.l.b16 %v1378
    %v2116 = vunpack.c.h.b16 %v1378
    %v2117 = vunpack.c.l.b16 %v1379
    %v2118 = vunpack.c.h.b16 %v1379
    %v2119 = vunpack.c.l.b16 %v1380
    %v2120 = vunpack.c.h.b16 %v1380
    %v2121 = vunpack.c.l.b16 %v1381
    %v2122 = vunpack.c.h.b16 %v1381
    %v2123 = vunpack.c.l.b16 %v1382
    %v2124 = vunpack.c.h.b16 %v1382
    %v2125 = vunpack.c.l.b16 %v1383
    %v2126 = vunpack.c.h.b16 %v1383
    %v2127 = vunpack.c.l.b16 %v1384
    %v2128 = vunpack.c.h.b16 %v1384
    %v2129 = vunpack.c.l.b16 %v1385
    %v2130 = vunpack.c.h.b16 %v1385
    %v2131 = vunpack.c.l.b16 %v1386
    %v2132 = vunpack.c.h.b16 %v1386
    %v2133 = vunpack.c.l.b16 %v1387
    %v2134 = vunpack.c.h.b16 %v1387
    %v2135 = vunpack.c.l.b16 %v1388
    %v2136 = vunpack.c.h.b16 %v1388
    %v2137 = vunpack.c.l.b16 %v1389
    %v2138 = vunpack.c.h.b16 %v1389
    %v2139 = vunpack.c.l.b16 %v1390
    %v2140 = vunpack.c.h.b16 %v1390
    %v2141 = vunpack.c.l.b16 %v1391
    %v2142 = vunpack.c.h.b16 %v1391
    %v2143 = vunpack.c.l.b16 %v1392
    %v2144 = vunpack.c.h.b16 %v1392
    %v2145 = vunpack.c.l.b16 %v1393
    %v2146 = vunpack.c.h.b16 %v1393
    %v2147 = vunpack.c.l.b16 %v1394
    %v2148 = vunpack.c.h.b16 %v1394
    %v2149 = vunpack.c.l.b16 %v1395
    %v2150 = vunpack.c.h.b16 %v1395
    %v2151 = vunpack.c.l.b16 %v1396
    %v2152 = vunpack.c.h.b16 %v1396
    %v2153 = vunpack.c.l.b16 %v1397
    %v2154 = vunpack.c.h.b16 %v1397
    %v2155 = vunpack.c.l.b16 %v1398
    %v2156 = vunpack.c.h.b16 %v1398
    %v2157 = vunpack.c.l.b16 %v1399
    %v2158 = vunpack.c.h.b16 %v1399
    %v2159 = vunpack.c.l.b16 %v1400
    %v2160 = vunpack.c.h.b16 %v1400
    %v2161 = vunpack.c.l.b16 %v1401
    %v2162 = vunpack.c.h.b16 %v1401
    %v2163 = vunpack.c.l.b16 %v1402
    %v2164 = vunpack.c.h.b16 %v1402
    %v2165 = vunpack.c.l.b16 %v1403
    %v2166 = vunpack.c.h.b16 %v1403
    %v2167 = vunpack.c.l.b16 %v1404
    %v2168 = vunpack.c.h.b16 %v1404
    %v2169 = vunpack.c.l.b16 %v1405
    %v2170 = vunpack.c.h.b16 %v1405
    %v2171 = vunpack.c.l.b16 %v1406
    %v2172 = vunpack.c.h.b16 %v1406
    %v2173 = vunpack.c.l.b16 %v1407
    %v2174 = vunpack.c.h.b16 %v1407
    %v2175 = vunpack.c.l.b16 %v1408
    %v2176 = vunpack.c.h.b16 %v1408
    %v2177 = vunpack.c.l.b16 %v1409
    %v2178 = vunpack.c.h.b16 %v1409
    %v2179 = vunpack.c.l.b16 %v1410
    %v2180 = vunpack.c.h.b16 %v1410
    %v2181 = vunpack.c.l.b16 %v1411
    %v2182 = vunpack.c.h.b16 %v1411
    %v2183 = vunpack.c.l.b16 %v1412
    %v2184 = vunpack.c.h.b16 %v1412
    %v2185 = vunpack.c.l.b16 %v1413
    %v2186 = vunpack.c.h.b16 %v1413
    %v2187 = vunpack.c.l.b16 %v1414
    %v2188 = vunpack.c.h.b16 %v1414
    %v2189 = vunpack.c.l.b16 %v1415
    %v2190 = vunpack.c.h.b16 %v1415
    %v2191 = vunpack.c.l.b16 %v1416
    %v2192 = vunpack.c.h.b16 %v1416
    %v2193 = vunpack.c.l.b16 %v1417
    %v2194 = vunpack.c.h.b16 %v1417
    %v2195 = vunpack.c.l.b16 %v1418
    %v2196 = vunpack.c.h.b16 %v1418
    %v2197 = vpack.c.b16 %v1689, %v1685
    %v2198 = vpack.c.b16 %v1690, %v1686
    %v2199 = vpack.c.b16 %v1691, %v1687
    %v2200 = vpack.c.b16 %v1692, %v1688
    %v2201 = vpack.c.b16 %v1697, %v1693
    %v2202 = vpack.c.b16 %v1698, %v1694
    %v2203 = vpack.c.b16 %v1699, %v1695
    %v2204 = vpack.c.b16 %v1700, %v1696
    %v2205 = vpack.c.b16 %v1705, %v1701
    %v2206 = vpack.c.b16 %v1706, %v1702
    %v2207 = vpack.c.b16 %v1707, %v1703
    %v2208 = vpack.c.b16 %v1708, %v1704
    %v2209 = vpack.c.b16 %v1713, %v1709
    %v2210 = vpack.c.b16 %v1714, %v1710
    %v2211 = vpack.c.b16 %v1715, %v1711
    %v2212 = vpack.c.b16 %v1716, %v1712
    %v2213 = vpack.c.b16 %v1721, %v1717
    %v2214 = vpack.c.b16 %v1722, %v1718
    %v2215 = vpack.c.b16 %v1723, %v1719
    %v2216 = vpack.c.b16 %v1724, %v1720
    %v2217 = vpack.c.b16 %v1729, %v1725
    %v2218 = vpack.c.b16 %v1730, %v1726
    %v2219 = vpack.c.b16 %v1731, %v1727
    %v2220 = vpack.c.b16 %v1732, %v1728
    %v2221 = vpack.c.b16 %v1737, %v1733
    %v2222 = vpack.c.b16 %v1738, %v1734
    %v2223 = vpack.c.b16 %v1739, %v1735
    %v2224 = vpack.c.b16 %v1740, %v1736
    %v2225 = vpack.c.b16 %v1745, %v1741
    %v2226 = vpack.c.b16 %v1746, %v1742
    %v2227 = vpack.c.b16 %v1747, %v1743
    %v2228 = vpack.c.b16 %v1748, %v1744
    %v2229 = vpack.c.b16 %v1753, %v1749
    %v2230 = vpack.c.b16 %v1754, %v1750
    %v2231 = vpack.c.b16 %v1755, %v1751
    %v2232 = vpack.c.b16 %v1756, %v1752
    %v2233 = vpack.c.b16 %v1761, %v1757
    %v2234 = vpack.c.b16 %v1762, %v1758
    %v2235 = vpack.c.b16 %v1763, %v1759
    %v2236 = vpack.c.b16 %v1764, %v1760
    %v2237 = vpack.c.b16 %v1769, %v1765
    %v2238 = vpack.c.b16 %v1770, %v1766
    %v2239 = vpack.c.b16 %v1771, %v1767
    %v2240 = vpack.c.b16 %v1772, %v1768
    %v2241 = vpack.c.b16 %v1777, %v1773
    %v2242 = vpack.c.b16 %v1778, %v1774
    %v2243 = vpack.c.b16 %v1779, %v1775
    %v2244 = vpack.c.b16 %v1780, %v1776
    %v2245 = vpack.c.b16 %v1785, %v1781
    %v2246 = vpack.c.b16 %v1786, %v1782
    %v2247 = vpack.c.b16 %v1787, %v1783
    %v2248 = vpack.c.b16 %v1788, %v1784
    %v2249 = vpack.c.b16 %v1793, %v1789
    %v2250 = vpack.c.b16 %v1794, %v1790
    %v2251 = vpack.c.b16 %v1795, %v1791
    %v2252 = vpack.c.b16 %v1796, %v1792
    %v2253 = vpack.c.b16 %v1801, %v1797
    %v2254 = vpack.c.b16 %v1802, %v1798
    %v2255 = vpack.c.b16 %v1803, %v1799
    %v2256 = vpack.c.b16 %v1804, %v1800
    %v2257 = vpack.c.b16 %v1809, %v1805
    %v2258 = vpack.c.b16 %v1810, %v1806
    %v2259 = vpack.c.b16 %v1811, %v1807
    %v2260 = vpack.c.b16 %v1812, %v1808
    %v2261 = vpack.c.b16 %v1817, %v1813
    %v2262 = vpack.c.b16 %v1818, %v1814
    %v2263 = vpack.c.b16 %v1819, %v1815
    %v2264 = vpack.c.b16 %v1820, %v1816
    %v2265 = vpack.c.b16 %v1825, %v1821
    %v2266 = vpack.c.b16 %v1826, %v1822
    %v2267 = vpack.c.b16 %v1827, %v1823
    %v2268 = vpack.c.b16 %v1828, %v1824
    %v2269 = vpack.c.b16 %v1833, %v1829
    %v2270 = vpack.c.b16 %v1834, %v1830
    %v2271 = vpack.c.b16 %v1835, %v1831
    %v2272 = vpack.c.b16 %v1836, %v1832
    %v2273 = vpack.c.b16 %v1841, %v1837
    %v2274 = vpack.c.b16 %v1842, %v1838
    %v2275 = vpack.c.b16 %v1843, %v1839
    %v2276 = vpack.c.b16 %v1844, %v1840
    %v2277 = vpack.c.b16 %v1849, %v1845
    %v2278 = vpack.c.b16 %v1850, %v1846
    %v2279 = vpack.c.b16 %v1851, %v1847
    %v2280 = vpack.c.b16 %v1852, %v1848
    %v2281 = vpack.c.b16 %v1857, %v1853
    %v2282 = vpack.c.b16 %v1858, %v1854
    %v2283 = vpack.c.b16 %v1859, %v1855
    %v2284 = vpack.c.b16 %v1860, %v1856
    %v2285 = vpack.c.b16 %v1865, %v1861
    %v2286 = vpack.c.b16 %v1866, %v1862
    %v2287 = vpack.c.b16 %v1867, %v1863
    %v2288 = vpack.c.b16 %v1868, %v1864
    %v2289 = vpack.c.b16 %v1873, %v1869
    %v2290 = vpack.c.b16 %v1874, %v1870
    %v2291 = vpack.c.b16 %v1875, %v1871
    %v2292 = vpack.c.b16 %v1876, %v1872
    %v2293 = vpack.c.b16 %v1881, %v1877
    %v2294 = vpack.c.b16 %v1882, %v1878
    %v2295 = vpack.c.b16 %v1883, %v1879
    %v2296 = vpack.c.b16 %v1884, %v1880
    %v2297 = vpack.c.b16 %v1889, %v1885
    %v2298 = vpack.c.b16 %v1890, %v1886
    %v2299 = vpack.c.b16 %v1891, %v1887
    %v2300 = vpack.c.b16 %v1892, %v1888
    %v2301 = vpack.c.b16 %v1897, %v1893
    %v2302 = vpack.c.b16 %v1898, %v1894
    %v2303 = vpack.c.b16 %v1899, %v1895
    %v2304 = vpack.c.b16 %v1900, %v1896
    %v2305 = vpack.c.b16 %v1905, %v1901
    %v2306 = vpack.c.b16 %v1906, %v1902
    %v2307 = vpack.c.b16 %v1907, %v1903
    %v2308 = vpack.c.b16 %v1908, %v1904
    %v2309 = vpack.c.b16 %v1913, %v1909
    %v2310 = vpack.c.b16 %v1914, %v1910
    %v2311 = vpack.c.b16 %v1915, %v1911
    %v2312 = vpack.c.b16 %v1916, %v1912
    %v2313 = vpack.c.b16 %v1921, %v1917
    %v2314 = vpack.c.b16 %v1922, %v1918
    %v2315 = vpack.c.b16 %v1923, %v1919
    %v2316 = vpack.c.b16 %v1924, %v1920
    %v2317 = vpack.c.b16 %v1929, %v1925
    %v2318 = vpack.c.b16 %v1930, %v1926
    %v2319 = vpack.c.b16 %v1931, %v1927
    %v2320 = vpack.c.b16 %v1932, %v1928
    %v2321 = vpack.c.b16 %v1937, %v1933
    %v2322 = vpack.c.b16 %v1938, %v1934
    %v2323 = vpack.c.b16 %v1939, %v1935
    %v2324 = vpack.c.b16 %v1940, %v1936
    %v2325 = vpack.c.b16 %v1945, %v1941
    %v2326 = vpack.c.b16 %v1946, %v1942
    %v2327 = vpack.c.b16 %v1947, %v1943
    %v2328 = vpack.c.b16 %v1948, %v1944
    %v2329 = vpack.c.b16 %v1953, %v1949
    %v2330 = vpack.c.b16 %v1954, %v1950
    %v2331 = vpack.c.b16 %v1955, %v1951
    %v2332 = vpack.c.b16 %v1956, %v1952
    %v2333 = vpack.c.b16 %v1961, %v1957
    %v2334 = vpack.c.b16 %v1962, %v1958
    %v2335 = vpack.c.b16 %v1963, %v1959
    %v2336 = vpack.c.b16 %v1964, %v1960
    %v2337 = vpack.c.b16 %v1969, %v1965
    %v2338 = vpack.c.b16 %v1970, %v1966
    %v2339 = vpack.c.b16 %v1971, %v1967
    %v2340 = vpack.c.b16 %v1972, %v1968
    %v2341 = vpack.c.b16 %v1977, %v1973
    %v2342 = vpack.c.b16 %v1978, %v1974
    %v2343 = vpack.c.b16 %v1979, %v1975
    %v2344 = vpack.c.b16 %v1980, %v1976
    %v2345 = vpack.c.b16 %v1985, %v1981
    %v2346 = vpack.c.b16 %v1986, %v1982
    %v2347 = vpack.c.b16 %v1987, %v1983
    %v2348 = vpack.c.b16 %v1988, %v1984
    %v2349 = vpack.c.b16 %v1993, %v1989
    %v2350 = vpack.c.b16 %v1994, %v1990
    %v2351 = vpack.c.b16 %v1995, %v1991
    %v2352 = vpack.c.b16 %v1996, %v1992
    %v2353 = vpack.c.b16 %v2001, %v1997
    %v2354 = vpack.c.b16 %v2002, %v1998
    %v2355 = vpack.c.b16 %v2003, %v1999
    %v2356 = vpack.c.b16 %v2004, %v2000
    %v2357 = vpack.c.b16 %v2009, %v2005
    %v2358 = vpack.c.b16 %v2010, %v2006
    %v2359 = vpack.c.b16 %v2011, %v2007
    %v2360 = vpack.c.b16 %v2012, %v2008
    %v2361 = vpack.c.b16 %v2017, %v2013
    %v2362 = vpack.c.b16 %v2018, %v2014
    %v2363 = vpack.c.b16 %v2019, %v2015
    %v2364 = vpack.c.b16 %v2020, %v2016
    %v2365 = vpack.c.b16 %v2025, %v2021
    %v2366 = vpack.c.b16 %v2026, %v2022
    %v2367 = vpack.c.b16 %v2027, %v2023
    %v2368 = vpack.c.b16 %v2028, %v2024
    %v2369 = vpack.c.b16 %v2033, %v2029
    %v2370 = vpack.c.b16 %v2034, %v2030
    %v2371 = vpack.c.b16 %v2035, %v2031
    %v2372 = vpack.c.b16 %v2036, %v2032
    %v2373 = vpack.c.b16 %v2041, %v2037
    %v2374 = vpack.c.b16 %v2042, %v2038
    %v2375 = vpack.c.b16 %v2043, %v2039
    %v2376 = vpack.c.b16 %v2044, %v2040
    %v2377 = vpack.c.b16 %v2049, %v2045
    %v2378 = vpack.c.b16 %v2050, %v2046
    %v2379 = vpack.c.b16 %v2051, %v2047
    %v2380 = vpack.c.b16 %v2052, %v2048
    %v2381 = vpack.c.b16 %v2057, %v2053
    %v2382 = vpack.c.b16 %v2058, %v2054
    %v2383 = vpack.c.b16 %v2059, %v2055
    %v2384 = vpack.c.b16 %v2060, %v2056
    %v2385 = vpack.c.b16 %v2065, %v2061
    %v2386 = vpack.c.b16 %v2066, %v2062
    %v2387 = vpack.c.b16 %v2067, %v2063
    %v2388 = vpack.c.b16 %v2068, %v2064
    %v2389 = vpack.c.b16 %v2073, %v2069
    %v2390 = vpack.c.b16 %v2074, %v2070
    %v2391 = vpack.c.b16 %v2075, %v2071
    %v2392 = vpack.c.b16 %v2076, %v2072
    %v2393 = vpack.c.b16 %v2081, %v2077
    %v2394 = vpack.c.b16 %v2082, %v2078
    %v2395 = vpack.c.b16 %v2083, %v2079
    %v2396 = vpack.c.b16 %v2084, %v2080
    %v2397 = vpack.c.b16 %v2089, %v2085
    %v2398 = vpack.c.b16 %v2090, %v2086
    %v2399 = vpack.c.b16 %v2091, %v2087
    %v2400 = vpack.c.b16 %v2092, %v2088
    %v2401 = vpack.c.b16 %v2097, %v2093
    %v2402 = vpack.c.b16 %v2098, %v2094
    %v2403 = vpack.c.b16 %v2099, %v2095
    %v2404 = vpack.c.b16 %v2100, %v2096
    %v2405 = vpack.c.b16 %v2105, %v2101
    %v2406 = vpack.c.b16 %v2106, %v2102
    %v2407 = vpack.c.b16 %v2107, %v2103
    %v2408 = vpack.c.b16 %v2108, %v2104
    %v2409 = vpack.c.b16 %v2113, %v2109
    %v2410 = vpack.c.b16 %v2114, %v2110
    %v2411 = vpack.c.b16 %v2115, %v2111
    %v2412 = vpack.c.b16 %v2116, %v2112
    %v2413 = vpack.c.b16 %v2121, %v2117
    %v2414 = vpack.c.b16 %v2122, %v2118
    %v2415 = vpack.c.b16 %v2123, %v2119
    %v2416 = vpack.c.b16 %v2124, %v2120
    %v2417 = vpack.c.b16 %v2129, %v2125
    %v2418 = vpack.c.b16 %v2130, %v2126
    %v2419 = vpack.c.b16 %v2131, %v2127
    %v2420 = vpack.c.b16 %v2132, %v2128
    %v2421 = vpack.c.b16 %v2137, %v2133
    %v2422 = vpack.c.b16 %v2138, %v2134
    %v2423 = vpack.c.b16 %v2139, %v2135
    %v2424 = vpack.c.b16 %v2140, %v2136
    %v2425 = vpack.c.b16 %v2145, %v2141
    %v2426 = vpack.c.b16 %v2146, %v2142
    %v2427 = vpack.c.b16 %v2147, %v2143
    %v2428 = vpack.c.b16 %v2148, %v2144
    %v2429 = vpack.c.b16 %v2153, %v2149
    %v2430 = vpack.c.b16 %v2154, %v2150
    %v2431 = vpack.c.b16 %v2155, %v2151
    %v2432 = vpack.c.b16 %v2156, %v2152
    %v2433 = vpack.c.b16 %v2161, %v2157
    %v2434 = vpack.c.b16 %v2162, %v2158
    %v2435 = vpack.c.b16 %v2163, %v2159
    %v2436 = vpack.c.b16 %v2164, %v2160
    %v2437 = vpack.c.b16 %v2169, %v2165
    %v2438 = vpack.c.b16 %v2170, %v2166
    %v2439 = vpack.c.b16 %v2171, %v2167
    %v2440 = vpack.c.b16 %v2172, %v2168
    %v2441 = vpack.c.b16 %v2177, %v2173
    %v2442 = vpack.c.b16 %v2178, %v2174
    %v2443 = vpack.c.b16 %v2179, %v2175
    %v2444 = vpack.c.b16 %v2180, %v2176
    %v2445 = vpack.c.b16 %v2185, %v2181
    %v2446 = vpack.c.b16 %v2186, %v2182
    %v2447 = vpack.c.b16 %v2187, %v2183
    %v2448 = vpack.c.b16 %v2188, %v2184
    %v2449 = vpack.c.b16 %v2193, %v2189
    %v2450 = vpack.c.b16 %v2194, %v2190
    %v2451 = vpack.c.b16 %v2195, %v2191
    %v2452 = vpack.c.b16 %v2196, %v2192
    %2709 = vmatpush.bf16.msra.mxu0 %v2225
    %2710 = vmatpush.bf16.msra.mxu0 %v2221
    %2711 = vmatpush.bf16.msra.mxu0 %v2217
    %2712 = vmatpush.bf16.msra.mxu0 %v2213
    %2713 = vmatpush.bf16.msra.mxu0 %v2209
    %2714 = vmatpush.bf16.msra.mxu0 %v2205
    %2715 = vmatpush.bf16.msra.mxu0 %v2201
    %2716 = vmatpush.bf16.msra.mxu0 %v2197
    %2717 = vmatmul.bf16.gmra.mxu0 %v1155
    %v2718 = vpop.f32.mrf.mxu0
    %v2719 = vadd.f32 %v1421, %v2718
    %v2720 = vpop.f32.mrf.mxu0
    %v2721 = vadd.f32 %v1421, %v2720
    %2722 = vdwg.mxu0
    %2723 = vmatpush.bf16.msra.mxu0 %v2257
    %2724 = vmatpush.bf16.msra.mxu0 %v2253
    %2725 = vmatpush.bf16.msra.mxu0 %v2249
    %2726 = vmatpush.bf16.msra.mxu0 %v2245
    %2727 = vmatpush.bf16.msra.mxu0 %v2241
    %2728 = vmatpush.bf16.msra.mxu0 %v2237
    %2729 = vmatpush.bf16.msra.mxu0 %v2233
    %2730 = vmatpush.bf16.msra.mxu0 %v2229
    %2731 = vmatmul.bf16.gmra.mxu0 %v1156
    %v2732 = vpop.f32.mrf.mxu0
    %v2733 = vadd.f32 %v2719, %v2732
    %v2734 = vpop.f32.mrf.mxu0
    %v2735 = vadd.f32 %v2721, %v2734
    %2736 = vdwg.mxu0
    %2737 = vmatpush.bf16.msra.mxu0 %v2289
    %2738 = vmatpush.bf16.msra.mxu0 %v2285
    %2739 = vmatpush.bf16.msra.mxu0 %v2281
    %2740 = vmatpush.bf16.msra.mxu0 %v2277
    %2741 = vmatpush.bf16.msra.mxu0 %v2273
    %2742 = vmatpush.bf16.msra.mxu0 %v2269
    %2743 = vmatpush.bf16.msra.mxu0 %v2265
    %2744 = vmatpush.bf16.msra.mxu0 %v2261
    %2745 = vmatmul.bf16.gmra.mxu0 %v1157
    %v2746 = vpop.f32.mrf.mxu0
    %v2747 = vadd.f32 %v2733, %v2746
    %v2748 = vpop.f32.mrf.mxu0
    %v2749 = vadd.f32 %v2735, %v2748
    %2750 = vdwg.mxu0
    %2751 = vmatpush.bf16.msra.mxu0 %v2321
    %2752 = vmatpush.bf16.msra.mxu0 %v2317
    %2753 = vmatpush.bf16.msra.mxu0 %v2313
    %2754 = vmatpush.bf16.msra.mxu0 %v2309
    %2755 = vmatpush.bf16.msra.mxu0 %v2305
    %2756 = vmatpush.bf16.msra.mxu0 %v2301
    %2757 = vmatpush.bf16.msra.mxu0 %v2297
    %2758 = vmatpush.bf16.msra.mxu0 %v2293
    %2759 = vmatmul.bf16.gmra.mxu0 %v1158
    %v2760 = vpop.f32.mrf.mxu0
    %v2761 = vadd.f32 %v2747, %v2760
    %v2762 = vpop.f32.mrf.mxu0
    %v2763 = vadd.f32 %v2749, %v2762
    %2764 = vdwg.mxu0
    %2765 = vmatpush.bf16.msra.mxu0 %v2353
    %2766 = vmatpush.bf16.msra.mxu0 %v2349
    %2767 = vmatpush.bf16.msra.mxu0 %v2345
    %2768 = vmatpush.bf16.msra.mxu0 %v2341
    %2769 = vmatpush.bf16.msra.mxu0 %v2337
    %2770 = vmatpush.bf16.msra.mxu0 %v2333
    %2771 = vmatpush.bf16.msra.mxu0 %v2329
    %2772 = vmatpush.bf16.msra.mxu0 %v2325
    %2773 = vmatmul.bf16.gmra.mxu0 %v1159
    %v2774 = vpop.f32.mrf.mxu0
    %v2775 = vadd.f32 %v2761, %v2774
    %v2776 = vpop.f32.mrf.mxu0
    %v2777 = vadd.f32 %v2763, %v2776
    %2778 = vdwg.mxu0
    %2779 = vmatpush.bf16.msra.mxu0 %v2385
    %2780 = vmatpush.bf16.msra.mxu0 %v2381
    %2781 = vmatpush.bf16.msra.mxu0 %v2377
    %2782 = vmatpush.bf16.msra.mxu0 %v2373
    %2783 = vmatpush.bf16.msra.mxu0 %v2369
    %2784 = vmatpush.bf16.msra.mxu0 %v2365
    %2785 = vmatpush.bf16.msra.mxu0 %v2361
    %2786 = vmatpush.bf16.msra.mxu0 %v2357
    %2787 = vmatmul.bf16.gmra.mxu0 %v1160
    %v2788 = vpop.f32.mrf.mxu0
    %v2789 = vadd.f32 %v2775, %v2788
    %v2790 = vpop.f32.mrf.mxu0
    %v2791 = vadd.f32 %v2777, %v2790
    %2792 = vdwg.mxu0
    %2793 = vmatpush.bf16.msra.mxu0 %v2417
    %2794 = vmatpush.bf16.msra.mxu0 %v2413
    %2795 = vmatpush.bf16.msra.mxu0 %v2409
    %2796 = vmatpush.bf16.msra.mxu0 %v2405
    %2797 = vmatpush.bf16.msra.mxu0 %v2401
    %2798 = vmatpush.bf16.msra.mxu0 %v2397
    %2799 = vmatpush.bf16.msra.mxu0 %v2393
    %2800 = vmatpush.bf16.msra.mxu0 %v2389
    %2801 = vmatmul.bf16.gmra.mxu0 %v1161
    %v2802 = vpop.f32.mrf.mxu0
    %v2803 = vadd.f32 %v2789, %v2802
    %v2804 = vpop.f32.mrf.mxu0
    %v2805 = vadd.f32 %v2791, %v2804
    %2806 = vdwg.mxu0
    %2807 = vmatpush.bf16.msra.mxu0 %v2449
    %2808 = vmatpush.bf16.msra.mxu0 %v2445
    %2809 = vmatpush.bf16.msra.mxu0 %v2441
    %2810 = vmatpush.bf16.msra.mxu0 %v2437
    %2811 = vmatpush.bf16.msra.mxu0 %v2433
    %2812 = vmatpush.bf16.msra.mxu0 %v2429
    %2813 = vmatpush.bf16.msra.mxu0 %v2425
    %2814 = vmatpush.bf16.msra.mxu0 %v2421
    %2815 = vmatmul.bf16.gmra.mxu0 %v1162
    %v2816 = vpop.f32.mrf.mxu0
    %v2817 = vadd.f32 %v2803, %v2816
    %v2818 = vpop.f32.mrf.mxu0
    %v2819 = vadd.f32 %v2805, %v2818
    %2820 = vdwg.mxu0
    %2821 = vmatpush.bf16.msra.mxu0 %v2226
    %2822 = vmatpush.bf16.msra.mxu0 %v2222
    %2823 = vmatpush.bf16.msra.mxu0 %v2218
    %2824 = vmatpush.bf16.msra.mxu0 %v2214
    %2825 = vmatpush.bf16.msra.mxu0 %v2210
    %2826 = vmatpush.bf16.msra.mxu0 %v2206
    %2827 = vmatpush.bf16.msra.mxu0 %v2202
    %2828 = vmatpush.bf16.msra.mxu0 %v2198
    %2829 = vmatmul.bf16.gmra.mxu0 %v1155
    %v2830 = vpop.f32.mrf.mxu0
    %v2831 = vadd.f32 %v1422, %v2830
    %v2832 = vpop.f32.mrf.mxu0
    %v2833 = vadd.f32 %v1422, %v2832
    %2834 = vdwg.mxu0
    %2835 = vmatpush.bf16.msra.mxu0 %v2258
    %2836 = vmatpush.bf16.msra.mxu0 %v2254
    %2837 = vmatpush.bf16.msra.mxu0 %v2250
    %2838 = vmatpush.bf16.msra.mxu0 %v2246
    %2839 = vmatpush.bf16.msra.mxu0 %v2242
    %2840 = vmatpush.bf16.msra.mxu0 %v2238
    %2841 = vmatpush.bf16.msra.mxu0 %v2234
    %2842 = vmatpush.bf16.msra.mxu0 %v2230
    %2843 = vmatmul.bf16.gmra.mxu0 %v1156
    %v2844 = vpop.f32.mrf.mxu0
    %v2845 = vadd.f32 %v2831, %v2844
    %v2846 = vpop.f32.mrf.mxu0
    %v2847 = vadd.f32 %v2833, %v2846
    %2848 = vdwg.mxu0
    %2849 = vmatpush.bf16.msra.mxu0 %v2290
    %2850 = vmatpush.bf16.msra.mxu0 %v2286
    %2851 = vmatpush.bf16.msra.mxu0 %v2282
    %2852 = vmatpush.bf16.msra.mxu0 %v2278
    %2853 = vmatpush.bf16.msra.mxu0 %v2274
    %2854 = vmatpush.bf16.msra.mxu0 %v2270
    %2855 = vmatpush.bf16.msra.mxu0 %v2266
    %2856 = vmatpush.bf16.msra.mxu0 %v2262
    %2857 = vmatmul.bf16.gmra.mxu0 %v1157
    %v2858 = vpop.f32.mrf.mxu0
    %v2859 = vadd.f32 %v2845, %v2858
    %v2860 = vpop.f32.mrf.mxu0
    %v2861 = vadd.f32 %v2847, %v2860
    %2862 = vdwg.mxu0
    %2863 = vmatpush.bf16.msra.mxu0 %v2322
    %2864 = vmatpush.bf16.msra.mxu0 %v2318
    %2865 = vmatpush.bf16.msra.mxu0 %v2314
    %2866 = vmatpush.bf16.msra.mxu0 %v2310
    %2867 = vmatpush.bf16.msra.mxu0 %v2306
    %2868 = vmatpush.bf16.msra.mxu0 %v2302
    %2869 = vmatpush.bf16.msra.mxu0 %v2298
    %2870 = vmatpush.bf16.msra.mxu0 %v2294
    %2871 = vmatmul.bf16.gmra.mxu0 %v1158
    %v2872 = vpop.f32.mrf.mxu0
    %v2873 = vadd.f32 %v2859, %v2872
    %v2874 = vpop.f32.mrf.mxu0
    %v2875 = vadd.f32 %v2861, %v2874
    %2876 = vdwg.mxu0
    %2877 = vmatpush.bf16.msra.mxu0 %v2354
    %2878 = vmatpush.bf16.msra.mxu0 %v2350
    %2879 = vmatpush.bf16.msra.mxu0 %v2346
    %2880 = vmatpush.bf16.msra.mxu0 %v2342
    %2881 = vmatpush.bf16.msra.mxu0 %v2338
    %2882 = vmatpush.bf16.msra.mxu0 %v2334
    %2883 = vmatpush.bf16.msra.mxu0 %v2330
    %2884 = vmatpush.bf16.msra.mxu0 %v2326
    %2885 = vmatmul.bf16.gmra.mxu0 %v1159
    %v2886 = vpop.f32.mrf.mxu0
    %v2887 = vadd.f32 %v2873, %v2886
    %v2888 = vpop.f32.mrf.mxu0
    %v2889 = vadd.f32 %v2875, %v2888
    %2890 = vdwg.mxu0
    %2891 = vmatpush.bf16.msra.mxu0 %v2386
    %2892 = vmatpush.bf16.msra.mxu0 %v2382
    %2893 = vmatpush.bf16.msra.mxu0 %v2378
    %2894 = vmatpush.bf16.msra.mxu0 %v2374
    %2895 = vmatpush.bf16.msra.mxu0 %v2370
    %2896 = vmatpush.bf16.msra.mxu0 %v2366
    %2897 = vmatpush.bf16.msra.mxu0 %v2362
    %2898 = vmatpush.bf16.msra.mxu0 %v2358
    %2899 = vmatmul.bf16.gmra.mxu0 %v1160
    %v2900 = vpop.f32.mrf.mxu0
    %v2901 = vadd.f32 %v2887, %v2900
    %v2902 = vpop.f32.mrf.mxu0
    %v2903 = vadd.f32 %v2889, %v2902
    %2904 = vdwg.mxu0
    %2905 = vmatpush.bf16.msra.mxu0 %v2418
    %2906 = vmatpush.bf16.msra.mxu0 %v2414
    %2907 = vmatpush.bf16.msra.mxu0 %v2410
    %2908 = vmatpush.bf16.msra.mxu0 %v2406
    %2909 = vmatpush.bf16.msra.mxu0 %v2402
    %2910 = vmatpush.bf16.msra.mxu0 %v2398
    %2911 = vmatpush.bf16.msra.mxu0 %v2394
    %2912 = vmatpush.bf16.msra.mxu0 %v2390
    %2913 = vmatmul.bf16.gmra.mxu0 %v1161
    %v2914 = vpop.f32.mrf.mxu0
    %v2915 = vadd.f32 %v2901, %v2914
    %v2916 = vpop.f32.mrf.mxu0
    %v2917 = vadd.f32 %v2903, %v2916
    %2918 = vdwg.mxu0
    %2919 = vmatpush.bf16.msra.mxu0 %v2450
    %2920 = vmatpush.bf16.msra.mxu0 %v2446
    %2921 = vmatpush.bf16.msra.mxu0 %v2442
    %2922 = vmatpush.bf16.msra.mxu0 %v2438
    %2923 = vmatpush.bf16.msra.mxu0 %v2434
    %2924 = vmatpush.bf16.msra.mxu0 %v2430
    %2925 = vmatpush.bf16.msra.mxu0 %v2426
    %2926 = vmatpush.bf16.msra.mxu0 %v2422
    %2927 = vmatmul.bf16.gmra.mxu0 %v1162
    %v2928 = vpop.f32.mrf.mxu0
    %v2929 = vadd.f32 %v2915, %v2928
    %v2930 = vpop.f32.mrf.mxu0
    %v2931 = vadd.f32 %v2917, %v2930
    %2932 = vdwg.mxu0
    %2933 = vmatpush.bf16.msra.mxu0 %v2227
    %2934 = vmatpush.bf16.msra.mxu0 %v2223
    %2935 = vmatpush.bf16.msra.mxu0 %v2219
    %2936 = vmatpush.bf16.msra.mxu0 %v2215
    %2937 = vmatpush.bf16.msra.mxu0 %v2211
    %2938 = vmatpush.bf16.msra.mxu0 %v2207
    %2939 = vmatpush.bf16.msra.mxu0 %v2203
    %2940 = vmatpush.bf16.msra.mxu0 %v2199
    %2941 = vmatmul.bf16.gmra.mxu0 %v1155
    %v2942 = vpop.f32.mrf.mxu0
    %v2943 = vadd.f32 %v1423, %v2942
    %v2944 = vpop.f32.mrf.mxu0
    %v2945 = vadd.f32 %v1423, %v2944
    %2946 = vdwg.mxu0
    %2947 = vmatpush.bf16.msra.mxu0 %v2259
    %2948 = vmatpush.bf16.msra.mxu0 %v2255
    %2949 = vmatpush.bf16.msra.mxu0 %v2251
    %2950 = vmatpush.bf16.msra.mxu0 %v2247
    %2951 = vmatpush.bf16.msra.mxu0 %v2243
    %2952 = vmatpush.bf16.msra.mxu0 %v2239
    %2953 = vmatpush.bf16.msra.mxu0 %v2235
    %2954 = vmatpush.bf16.msra.mxu0 %v2231
    %2955 = vmatmul.bf16.gmra.mxu0 %v1156
    %v2956 = vpop.f32.mrf.mxu0
    %v2957 = vadd.f32 %v2943, %v2956
    %v2958 = vpop.f32.mrf.mxu0
    %v2959 = vadd.f32 %v2945, %v2958
    %2960 = vdwg.mxu0
    %2961 = vmatpush.bf16.msra.mxu0 %v2291
    %2962 = vmatpush.bf16.msra.mxu0 %v2287
    %2963 = vmatpush.bf16.msra.mxu0 %v2283
    %2964 = vmatpush.bf16.msra.mxu0 %v2279
    %2965 = vmatpush.bf16.msra.mxu0 %v2275
    %2966 = vmatpush.bf16.msra.mxu0 %v2271
    %2967 = vmatpush.bf16.msra.mxu0 %v2267
    %2968 = vmatpush.bf16.msra.mxu0 %v2263
    %2969 = vmatmul.bf16.gmra.mxu0 %v1157
    %v2970 = vpop.f32.mrf.mxu0
    %v2971 = vadd.f32 %v2957, %v2970
    %v2972 = vpop.f32.mrf.mxu0
    %v2973 = vadd.f32 %v2959, %v2972
    %2974 = vdwg.mxu0
    %2975 = vmatpush.bf16.msra.mxu0 %v2323
    %2976 = vmatpush.bf16.msra.mxu0 %v2319
    %2977 = vmatpush.bf16.msra.mxu0 %v2315
    %2978 = vmatpush.bf16.msra.mxu0 %v2311
    %2979 = vmatpush.bf16.msra.mxu0 %v2307
    %2980 = vmatpush.bf16.msra.mxu0 %v2303
    %2981 = vmatpush.bf16.msra.mxu0 %v2299
    %2982 = vmatpush.bf16.msra.mxu0 %v2295
    %2983 = vmatmul.bf16.gmra.mxu0 %v1158
    %v2984 = vpop.f32.mrf.mxu0
    %v2985 = vadd.f32 %v2971, %v2984
    %v2986 = vpop.f32.mrf.mxu0
    %v2987 = vadd.f32 %v2973, %v2986
    %2988 = vdwg.mxu0
    %2989 = vmatpush.bf16.msra.mxu0 %v2355
    %2990 = vmatpush.bf16.msra.mxu0 %v2351
    %2991 = vmatpush.bf16.msra.mxu0 %v2347
    %2992 = vmatpush.bf16.msra.mxu0 %v2343
    %2993 = vmatpush.bf16.msra.mxu0 %v2339
    %2994 = vmatpush.bf16.msra.mxu0 %v2335
    %2995 = vmatpush.bf16.msra.mxu0 %v2331
    %2996 = vmatpush.bf16.msra.mxu0 %v2327
    %2997 = vmatmul.bf16.gmra.mxu0 %v1159
    %v2998 = vpop.f32.mrf.mxu0
    %v2999 = vadd.f32 %v2985, %v2998
    %v3000 = vpop.f32.mrf.mxu0
    %v3001 = vadd.f32 %v2987, %v3000
    %3002 = vdwg.mxu0
    %3003 = vmatpush.bf16.msra.mxu0 %v2387
    %3004 = vmatpush.bf16.msra.mxu0 %v2383
    %3005 = vmatpush.bf16.msra.mxu0 %v2379
    %3006 = vmatpush.bf16.msra.mxu0 %v2375
    %3007 = vmatpush.bf16.msra.mxu0 %v2371
    %3008 = vmatpush.bf16.msra.mxu0 %v2367
    %3009 = vmatpush.bf16.msra.mxu0 %v2363
    %3010 = vmatpush.bf16.msra.mxu0 %v2359
    %3011 = vmatmul.bf16.gmra.mxu0 %v1160
    %v3012 = vpop.f32.mrf.mxu0
    %v3013 = vadd.f32 %v2999, %v3012
    %v3014 = vpop.f32.mrf.mxu0
    %v3015 = vadd.f32 %v3001, %v3014
    %3016 = vdwg.mxu0
    %3017 = vmatpush.bf16.msra.mxu0 %v2419
    %3018 = vmatpush.bf16.msra.mxu0 %v2415
    %3019 = vmatpush.bf16.msra.mxu0 %v2411
    %3020 = vmatpush.bf16.msra.mxu0 %v2407
    %3021 = vmatpush.bf16.msra.mxu0 %v2403
    %3022 = vmatpush.bf16.msra.mxu0 %v2399
    %3023 = vmatpush.bf16.msra.mxu0 %v2395
    %3024 = vmatpush.bf16.msra.mxu0 %v2391
    %3025 = vmatmul.bf16.gmra.mxu0 %v1161
    %v3026 = vpop.f32.mrf.mxu0
    %v3027 = vadd.f32 %v3013, %v3026
    %v3028 = vpop.f32.mrf.mxu0
    %v3029 = vadd.f32 %v3015, %v3028
    %3030 = vdwg.mxu0
    %3031 = vmatpush.bf16.msra.mxu0 %v2451
    %3032 = vmatpush.bf16.msra.mxu0 %v2447
    %3033 = vmatpush.bf16.msra.mxu0 %v2443
    %3034 = vmatpush.bf16.msra.mxu0 %v2439
    %3035 = vmatpush.bf16.msra.mxu0 %v2435
    %3036 = vmatpush.bf16.msra.mxu0 %v2431
    %3037 = vmatpush.bf16.msra.mxu0 %v2427
    %3038 = vmatpush.bf16.msra.mxu0 %v2423
    %3039 = vmatmul.bf16.gmra.mxu0 %v1162
    %v3040 = vpop.f32.mrf.mxu0
    %v3041 = vadd.f32 %v3027, %v3040
    %v3042 = vpop.f32.mrf.mxu0
    %v3043 = vadd.f32 %v3029, %v3042
    %3044 = vdwg.mxu0
    %3045 = vmatpush.bf16.msra.mxu0 %v2228
    %3046 = vmatpush.bf16.msra.mxu0 %v2224
    %3047 = vmatpush.bf16.msra.mxu0 %v2220
    %3048 = vmatpush.bf16.msra.mxu0 %v2216
    %3049 = vmatpush.bf16.msra.mxu0 %v2212
    %3050 = vmatpush.bf16.msra.mxu0 %v2208
    %3051 = vmatpush.bf16.msra.mxu0 %v2204
    %3052 = vmatpush.bf16.msra.mxu0 %v2200
    %3053 = vmatmul.bf16.gmra.mxu0 %v1155
    %v3054 = vpop.f32.mrf.mxu0
    %v3055 = vadd.f32 %v1424, %v3054
    %v3056 = vpop.f32.mrf.mxu0
    %v3057 = vadd.f32 %v1424, %v3056
    %3058 = vdwg.mxu0
    %3059 = vmatpush.bf16.msra.mxu0 %v2260
    %3060 = vmatpush.bf16.msra.mxu0 %v2256
    %3061 = vmatpush.bf16.msra.mxu0 %v2252
    %3062 = vmatpush.bf16.msra.mxu0 %v2248
    %3063 = vmatpush.bf16.msra.mxu0 %v2244
    %3064 = vmatpush.bf16.msra.mxu0 %v2240
    %3065 = vmatpush.bf16.msra.mxu0 %v2236
    %3066 = vmatpush.bf16.msra.mxu0 %v2232
    %3067 = vmatmul.bf16.gmra.mxu0 %v1156
    %v3068 = vpop.f32.mrf.mxu0
    %v3069 = vadd.f32 %v3055, %v3068
    %v3070 = vpop.f32.mrf.mxu0
    %v3071 = vadd.f32 %v3057, %v3070
    %3072 = vdwg.mxu0
    %3073 = vmatpush.bf16.msra.mxu0 %v2292
    %3074 = vmatpush.bf16.msra.mxu0 %v2288
    %3075 = vmatpush.bf16.msra.mxu0 %v2284
    %3076 = vmatpush.bf16.msra.mxu0 %v2280
    %3077 = vmatpush.bf16.msra.mxu0 %v2276
    %3078 = vmatpush.bf16.msra.mxu0 %v2272
    %3079 = vmatpush.bf16.msra.mxu0 %v2268
    %3080 = vmatpush.bf16.msra.mxu0 %v2264
    %3081 = vmatmul.bf16.gmra.mxu0 %v1157
    %v3082 = vpop.f32.mrf.mxu0
    %v3083 = vadd.f32 %v3069, %v3082
    %v3084 = vpop.f32.mrf.mxu0
    %v3085 = vadd.f32 %v3071, %v3084
    %3086 = vdwg.mxu0
    %3087 = vmatpush.bf16.msra.mxu0 %v2324
    %3088 = vmatpush.bf16.msra.mxu0 %v2320
    %3089 = vmatpush.bf16.msra.mxu0 %v2316
    %3090 = vmatpush.bf16.msra.mxu0 %v2312
    %3091 = vmatpush.bf16.msra.mxu0 %v2308
    %3092 = vmatpush.bf16.msra.mxu0 %v2304
    %3093 = vmatpush.bf16.msra.mxu0 %v2300
    %3094 = vmatpush.bf16.msra.mxu0 %v2296
    %3095 = vmatmul.bf16.gmra.mxu0 %v1158
    %v3096 = vpop.f32.mrf.mxu0
    %v3097 = vadd.f32 %v3083, %v3096
    %v3098 = vpop.f32.mrf.mxu0
    %v3099 = vadd.f32 %v3085, %v3098
    %3100 = vdwg.mxu0
    %3101 = vmatpush.bf16.msra.mxu0 %v2356
    %3102 = vmatpush.bf16.msra.mxu0 %v2352
    %3103 = vmatpush.bf16.msra.mxu0 %v2348
    %3104 = vmatpush.bf16.msra.mxu0 %v2344
    %3105 = vmatpush.bf16.msra.mxu0 %v2340
    %3106 = vmatpush.bf16.msra.mxu0 %v2336
    %3107 = vmatpush.bf16.msra.mxu0 %v2332
    %3108 = vmatpush.bf16.msra.mxu0 %v2328
    %3109 = vmatmul.bf16.gmra.mxu0 %v1159
    %v3110 = vpop.f32.mrf.mxu0
    %v3111 = vadd.f32 %v3097, %v3110
    %v3112 = vpop.f32.mrf.mxu0
    %v3113 = vadd.f32 %v3099, %v3112
    %3114 = vdwg.mxu0
    %3115 = vmatpush.bf16.msra.mxu0 %v2388
    %3116 = vmatpush.bf16.msra.mxu0 %v2384
    %3117 = vmatpush.bf16.msra.mxu0 %v2380
    %3118 = vmatpush.bf16.msra.mxu0 %v2376
    %3119 = vmatpush.bf16.msra.mxu0 %v2372
    %3120 = vmatpush.bf16.msra.mxu0 %v2368
    %3121 = vmatpush.bf16.msra.mxu0 %v2364
    %3122 = vmatpush.bf16.msra.mxu0 %v2360
    %3123 = vmatmul.bf16.gmra.mxu0 %v1160
    %v3124 = vpop.f32.mrf.mxu0
    %v3125 = vadd.f32 %v3111, %v3124
    %v3126 = vpop.f32.mrf.mxu0
    %v3127 = vadd.f32 %v3113, %v3126
    %3128 = vdwg.mxu0
    %3129 = vmatpush.bf16.msra.mxu0 %v2420
    %3130 = vmatpush.bf16.msra.mxu0 %v2416
    %3131 = vmatpush.bf16.msra.mxu0 %v2412
    %3132 = vmatpush.bf16.msra.mxu0 %v2408
    %3133 = vmatpush.bf16.msra.mxu0 %v2404
    %3134 = vmatpush.bf16.msra.mxu0 %v2400
    %3135 = vmatpush.bf16.msra.mxu0 %v2396
    %3136 = vmatpush.bf16.msra.mxu0 %v2392
    %3137 = vmatmul.bf16.gmra.mxu0 %v1161
    %v3138 = vpop.f32.mrf.mxu0
    %v3139 = vadd.f32 %v3125, %v3138
    %v3140 = vpop.f32.mrf.mxu0
    %v3141 = vadd.f32 %v3127, %v3140
    %3142 = vdwg.mxu0
    %3143 = vmatpush.bf16.msra.mxu0 %v2452
    %3144 = vmatpush.bf16.msra.mxu0 %v2448
    %3145 = vmatpush.bf16.msra.mxu0 %v2444
    %3146 = vmatpush.bf16.msra.mxu0 %v2440
    %3147 = vmatpush.bf16.msra.mxu0 %v2436
    %3148 = vmatpush.bf16.msra.mxu0 %v2432
    %3149 = vmatpush.bf16.msra.mxu0 %v2428
    %3150 = vmatpush.bf16.msra.mxu0 %v2424
    %3151 = vmatmul.bf16.gmra.mxu0 %v1162
    %v3152 = vpop.f32.mrf.mxu0
    %v3153 = vadd.f32 %v3139, %v3152
    %v3154 = vpop.f32.mrf.mxu0
    %v3155 = vadd.f32 %v3141, %v3154
    %3156 = vdwg.mxu0
    %v3157 = vmax.f32 %v2817, 0.0
    %v3158 = vmax.f32 %v2929, 0.0
    %v3159 = vmax.f32 %v3041, 0.0
    %v3160 = vmax.f32 %v3153, 0.0
    %v3161 = vmax.f32 %v2819, 0.0
    %v3162 = vmax.f32 %v2931, 0.0
    %v3163 = vmax.f32 %v3043, 0.0
    %v3164 = vmax.f32 %v3155, 0.0
    %v3165 = vpack.c.bf16 %v3161, %v3157
    %v3166 = vpack.c.bf16 %v3162, %v3158
    %v3167 = vpack.c.bf16 %v3163, %v3159
    %v3168 = vpack.c.bf16 %v3164, %v3160
    %v3169 = vld [vmem:[#allocation11] sm:$0xf]
    %v3170 = vld [vmem:[#allocation11 + $0x4] sm:$0xf]
    %v3171 = vld [vmem:[#allocation11 + $0x8] sm:$0xf]
    %v3172 = vld [vmem:[#allocation11 + $0xc] sm:$0xf]
    %v3173 = vld [vmem:[#allocation11 + $0x10] sm:$0xf]
    %v3174 = vld [vmem:[#allocation11 + $0x14] sm:$0xf]
    %v3175 = vld [vmem:[#allocation11 + $0x18] sm:$0xf]
    %v3176 = vld [vmem:[#allocation11 + $0x1c] sm:$0xf]
    %v3177 = vld [vmem:[#allocation11 + $0x20] sm:$0xf]
    %v3178 = vld [vmem:[#allocation11 + $0x24] sm:$0xf]
    %v3179 = vld [vmem:[#allocation11 + $0x28] sm:$0xf]
    %v3180 = vld [vmem:[#allocation11 + $0x2c] sm:$0xf]
    %v3181 = vld [vmem:[#allocation11 + $0x30] sm:$0xf]
    %v3182 = vld [vmem:[#allocation11 + $0x34] sm:$0xf]
    %v3183 = vld [vmem:[#allocation11 + $0x38] sm:$0xf]
    %v3184 = vld [vmem:[#allocation11 + $0x3c] sm:$0xf]
    %v3185 = vld [vmem:[#allocation11 + $0x40] sm:$0xf]
    %v3186 = vld [vmem:[#allocation11 + $0x44] sm:$0xf]
    %v3187 = vld [vmem:[#allocation11 + $0x48] sm:$0xf]
    %v3188 = vld [vmem:[#allocation11 + $0x4c] sm:$0xf]
    %v3189 = vld [vmem:[#allocation11 + $0x50] sm:$0xf]
    %v3190 = vld [vmem:[#allocation11 + $0x54] sm:$0xf]
    %v3191 = vld [vmem:[#allocation11 + $0x58] sm:$0xf]
    %v3192 = vld [vmem:[#allocation11 + $0x5c] sm:$0xf]
    %v3193 = vld [vmem:[#allocation11 + $0x60] sm:$0xf]
    %v3194 = vld [vmem:[#allocation11 + $0x64] sm:$0xf]
    %v3195 = vld [vmem:[#allocation11 + $0x68] sm:$0xf]
    %v3196 = vld [vmem:[#allocation11 + $0x6c] sm:$0xf]
    %v3197 = vld [vmem:[#allocation11 + $0x70] sm:$0xf]
    %v3198 = vld [vmem:[#allocation11 + $0x74] sm:$0xf]
    %v3199 = vld [vmem:[#allocation11 + $0x78] sm:$0xf]
    %v3200 = vld [vmem:[#allocation11 + $0x7c] sm:$0xf]
    %v3201 = vld [vmem:[#allocation11 + $0x80] sm:$0xf]
    %v3202 = vld [vmem:[#allocation11 + $0x84] sm:$0xf]
    %v3203 = vld [vmem:[#allocation11 + $0x88] sm:$0xf]
    %v3204 = vld [vmem:[#allocation11 + $0x8c] sm:$0xf]
    %v3205 = vld [vmem:[#allocation11 + $0x90] sm:$0xf]
    %v3206 = vld [vmem:[#allocation11 + $0x94] sm:$0xf]
    %v3207 = vld [vmem:[#allocation11 + $0x98] sm:$0xf]
    %v3208 = vld [vmem:[#allocation11 + $0x9c] sm:$0xf]
    %v3209 = vld [vmem:[#allocation11 + $0xa0] sm:$0xf]
    %v3210 = vld [vmem:[#allocation11 + $0xa4] sm:$0xf]
    %v3211 = vld [vmem:[#allocation11 + $0xa8] sm:$0xf]
    %v3212 = vld [vmem:[#allocation11 + $0xac] sm:$0xf]
    %v3213 = vld [vmem:[#allocation11 + $0xb0] sm:$0xf]
    %v3214 = vld [vmem:[#allocation11 + $0xb4] sm:$0xf]
    %v3215 = vld [vmem:[#allocation11 + $0xb8] sm:$0xf]
    %v3216 = vld [vmem:[#allocation11 + $0xbc] sm:$0xf]
    %v3217 = vld [vmem:[#allocation11 + $0xc0] sm:$0xf]
    %v3218 = vld [vmem:[#allocation11 + $0xc4] sm:$0xf]
    %v3219 = vld [vmem:[#allocation11 + $0xc8] sm:$0xf]
    %v3220 = vld [vmem:[#allocation11 + $0xcc] sm:$0xf]
    %v3221 = vld [vmem:[#allocation11 + $0xd0] sm:$0xf]
    %v3222 = vld [vmem:[#allocation11 + $0xd4] sm:$0xf]
    %v3223 = vld [vmem:[#allocation11 + $0xd8] sm:$0xf]
    %v3224 = vld [vmem:[#allocation11 + $0xdc] sm:$0xf]
    %v3225 = vld [vmem:[#allocation11 + $0xe0] sm:$0xf]
    %v3226 = vld [vmem:[#allocation11 + $0xe4] sm:$0xf]
    %v3227 = vld [vmem:[#allocation11 + $0xe8] sm:$0xf]
    %v3228 = vld [vmem:[#allocation11 + $0xec] sm:$0xf]
    %v3229 = vld [vmem:[#allocation11 + $0xf0] sm:$0xf]
    %v3230 = vld [vmem:[#allocation11 + $0xf4] sm:$0xf]
    %v3231 = vld [vmem:[#allocation11 + $0xf8] sm:$0xf]
    %v3232 = vld [vmem:[#allocation11 + $0xfc] sm:$0xf]
    %v3233 = vld [vmem:[%s6] sm:$0x1]
    %v3235 = vperm.slane %v3233, 0
    %v3301 = vunpack.c.l.b16 %v3169
    %v3302 = vunpack.c.l.b16 %v3170
    %v3303 = vunpack.c.l.b16 %v3171
    %v3304 = vunpack.c.l.b16 %v3172
    %v3305 = vunpack.c.l.b16 %v3173
    %v3306 = vunpack.c.l.b16 %v3174
    %v3307 = vunpack.c.l.b16 %v3175
    %v3308 = vunpack.c.l.b16 %v3176
    %v3309 = vunpack.c.l.b16 %v3177
    %v3310 = vunpack.c.l.b16 %v3178
    %v3311 = vunpack.c.l.b16 %v3179
    %v3312 = vunpack.c.l.b16 %v3180
    %v3313 = vunpack.c.l.b16 %v3181
    %v3314 = vunpack.c.l.b16 %v3182
    %v3315 = vunpack.c.l.b16 %v3183
    %v3316 = vunpack.c.l.b16 %v3184
    %v3317 = vunpack.c.l.b16 %v3185
    %v3318 = vunpack.c.l.b16 %v3186
    %v3319 = vunpack.c.l.b16 %v3187
    %v3320 = vunpack.c.l.b16 %v3188
    %v3321 = vunpack.c.l.b16 %v3189
    %v3322 = vunpack.c.l.b16 %v3190
    %v3323 = vunpack.c.l.b16 %v3191
    %v3324 = vunpack.c.l.b16 %v3192
    %v3325 = vunpack.c.l.b16 %v3193
    %v3326 = vunpack.c.l.b16 %v3194
    %v3327 = vunpack.c.l.b16 %v3195
    %v3328 = vunpack.c.l.b16 %v3196
    %v3329 = vunpack.c.l.b16 %v3197
    %v3330 = vunpack.c.l.b16 %v3198
    %v3331 = vunpack.c.l.b16 %v3199
    %v3332 = vunpack.c.l.b16 %v3200
    %v3333 = vunpack.c.l.b16 %v3201
    %v3334 = vunpack.c.l.b16 %v3202
    %v3335 = vunpack.c.l.b16 %v3203
    %v3336 = vunpack.c.l.b16 %v3204
    %v3337 = vunpack.c.l.b16 %v3205
    %v3338 = vunpack.c.l.b16 %v3206
    %v3339 = vunpack.c.l.b16 %v3207
    %v3340 = vunpack.c.l.b16 %v3208
    %v3341 = vunpack.c.l.b16 %v3209
    %v3342 = vunpack.c.l.b16 %v3210
    %v3343 = vunpack.c.l.b16 %v3211
    %v3344 = vunpack.c.l.b16 %v3212
    %v3345 = vunpack.c.l.b16 %v3213
    %v3346 = vunpack.c.l.b16 %v3214
    %v3347 = vunpack.c.l.b16 %v3215
    %v3348 = vunpack.c.l.b16 %v3216
    %v3349 = vunpack.c.l.b16 %v3217
    %v3350 = vunpack.c.l.b16 %v3218
    %v3351 = vunpack.c.l.b16 %v3219
    %v3352 = vunpack.c.l.b16 %v3220
    %v3353 = vunpack.c.l.b16 %v3221
    %v3354 = vunpack.c.l.b16 %v3222
    %v3355 = vunpack.c.l.b16 %v3223
    %v3356 = vunpack.c.l.b16 %v3224
    %v3357 = vunpack.c.l.b16 %v3225
    %v3358 = vunpack.c.l.b16 %v3226
    %v3359 = vunpack.c.l.b16 %v3227
    %v3360 = vunpack.c.l.b16 %v3228
    %v3361 = vunpack.c.l.b16 %v3229
    %v3362 = vunpack.c.l.b16 %v3230
    %v3363 = vunpack.c.l.b16 %v3231
    %v3364 = vunpack.c.l.b16 %v3232
    %v3365 = vpack.c.b16 %v3302, %v3301
    %v3366 = vpack.c.b16 %v3304, %v3303
    %v3367 = vpack.c.b16 %v3306, %v3305
    %v3368 = vpack.c.b16 %v3308, %v3307
    %v3369 = vpack.c.b16 %v3310, %v3309
    %v3370 = vpack.c.b16 %v3312, %v3311
    %v3371 = vpack.c.b16 %v3314, %v3313
    %v3372 = vpack.c.b16 %v3316, %v3315
    %v3373 = vpack.c.b16 %v3318, %v3317
    %v3374 = vpack.c.b16 %v3320, %v3319
    %v3375 = vpack.c.b16 %v3322, %v3321
    %v3376 = vpack.c.b16 %v3324, %v3323
    %v3377 = vpack.c.b16 %v3326, %v3325
    %v3378 = vpack.c.b16 %v3328, %v3327
    %v3379 = vpack.c.b16 %v3330, %v3329
    %v3380 = vpack.c.b16 %v3332, %v3331
    %v3381 = vpack.c.b16 %v3334, %v3333
    %v3382 = vpack.c.b16 %v3336, %v3335
    %v3383 = vpack.c.b16 %v3338, %v3337
    %v3384 = vpack.c.b16 %v3340, %v3339
    %v3385 = vpack.c.b16 %v3342, %v3341
    %v3386 = vpack.c.b16 %v3344, %v3343
    %v3387 = vpack.c.b16 %v3346, %v3345
    %v3388 = vpack.c.b16 %v3348, %v3347
    %v3389 = vpack.c.b16 %v3350, %v3349
    %v3390 = vpack.c.b16 %v3352, %v3351
    %v3391 = vpack.c.b16 %v3354, %v3353
    %v3392 = vpack.c.b16 %v3356, %v3355
    %v3393 = vpack.c.b16 %v3358, %v3357
    %v3394 = vpack.c.b16 %v3360, %v3359
    %v3395 = vpack.c.b16 %v3362, %v3361
    %v3396 = vpack.c.b16 %v3364, %v3363
    %3429 = vmatpush.bf16.msra.mxu0 %v3372
    %3430 = vmatpush.bf16.msra.mxu0 %v3371
    %3431 = vmatpush.bf16.msra.mxu0 %v3370
    %3432 = vmatpush.bf16.msra.mxu0 %v3369
    %3433 = vmatpush.bf16.msra.mxu0 %v3368
    %3434 = vmatpush.bf16.msra.mxu0 %v3367
    %3435 = vmatpush.bf16.msra.mxu0 %v3366
    %3436 = vmatpush.bf16.msra.mxu0 %v3365
    %3437 = vmatmul.bf16.gmra.mxu0 %v3165
    %v3438 = vpop.f32.mrf.mxu0
    %v3439 = vadd.f32 %v3235, %v3438
    %v3440 = vpop.f32.mrf.mxu0
    %v3441 = vadd.f32 %v3235, %v3440
    %3442 = vdwg.mxu0
    %3443 = vmatpush.bf16.msra.mxu0 %v3380
    %3444 = vmatpush.bf16.msra.mxu0 %v3379
    %3445 = vmatpush.bf16.msra.mxu0 %v3378
    %3446 = vmatpush.bf16.msra.mxu0 %v3377
    %3447 = vmatpush.bf16.msra.mxu0 %v3376
    %3448 = vmatpush.bf16.msra.mxu0 %v3375
    %3449 = vmatpush.bf16.msra.mxu0 %v3374
    %3450 = vmatpush.bf16.msra.mxu0 %v3373
    %3451 = vmatmul.bf16.gmra.mxu0 %v3166
    %v3452 = vpop.f32.mrf.mxu0
    %v3453 = vadd.f32 %v3439, %v3452
    %v3454 = vpop.f32.mrf.mxu0
    %v3455 = vadd.f32 %v3441, %v3454
    %3456 = vdwg.mxu0
    %3457 = vmatpush.bf16.msra.mxu0 %v3388
    %3458 = vmatpush.bf16.msra.mxu0 %v3387
    %3459 = vmatpush.bf16.msra.mxu0 %v3386
    %3460 = vmatpush.bf16.msra.mxu0 %v3385
    %3461 = vmatpush.bf16.msra.mxu0 %v3384
    %3462 = vmatpush.bf16.msra.mxu0 %v3383
    %3463 = vmatpush.bf16.msra.mxu0 %v3382
    %3464 = vmatpush.bf16.msra.mxu0 %v3381
    %3465 = vmatmul.bf16.gmra.mxu0 %v3167
    %v3466 = vpop.f32.mrf.mxu0
    %v3467 = vadd.f32 %v3453, %v3466
    %v3468 = vpop.f32.mrf.mxu0
    %v3469 = vadd.f32 %v3455, %v3468
    %3470 = vdwg.mxu0
    %3471 = vmatpush.bf16.msra.mxu0 %v3396
    %3472 = vmatpush.bf16.msra.mxu0 %v3395
    %3473 = vmatpush.bf16.msra.mxu0 %v3394
    %3474 = vmatpush.bf16.msra.mxu0 %v3393
    %3475 = vmatpush.bf16.msra.mxu0 %v3392
    %3476 = vmatpush.bf16.msra.mxu0 %v3391
    %3477 = vmatpush.bf16.msra.mxu0 %v3390
    %3478 = vmatpush.bf16.msra.mxu0 %v3389
    %3479 = vmatmul.bf16.gmra.mxu0 %v3168
    %v3480 = vpop.f32.mrf.mxu0
    %v3481 = vadd.f32 %v3467, %v3480
    %v3482 = vpop.f32.mrf.mxu0
    %v3483 = vadd.f32 %v3469, %v3482
    %3484 = vdwg.mxu0
    %3485 = vst [vmem:[#allocation13] sm:$0xff] %v3481
    %3486 = vst [vmem:[#allocation13 + $0x8] sm:$0xff] %v3483
    // Predicated region
    $region54: #{tpu_custom_call.1} parent=1 // pred_check
      _
    $region55: #{tpu_custom_call.1} parent=1 // pred_check_branch
      %3488 = sbr.rel (0) target = $region57
    $region56: #{tpu_custom_call.1} parent=1 // pred_region
      %3490 = vsyncadd [#allocation4], 0
      %s3491 = sshll.u32 [#allocation13], 4
      %s3492 = int_to_ptr.vmem [resolvable:$true] %s3491
      %s3493 = sshll.u32 %s7, 4
      %s3494 = int_to_ptr.hbm [resolvable:$true] %s3493
      %3499 = dma.vmem_to_hbm [thread:$0]  %s3492, 256, %s3494, [#allocation4], 128, 128, 8
    $region57: #{tpu_custom_call.1} parent=1 // pred_fallthru
      _
    // Predicated region
    $region58: #{tpu_custom_call.1} parent=1 // pred_check
      _
    $region59: #{tpu_custom_call.1} parent=1 // pred_check_branch
      %3501 = sbr.rel (0) target = $region61
    $region60: #{tpu_custom_call.1} parent=1 // pred_region
      %3503 = dma.done [#allocation4], 256
    $region61: #{tpu_custom_call.1} parent=1 // pred_fallthru
      _
    %3504 = vsyncpa [#allocation3], 1
    %3505 = vsyncpa [#allocation6], 1
    %3506 = vsyncpa [#allocation9], 1
    %3507 = vsyncpa [#allocation12], 1
    %3508 = vsyncpa [#allocation4], 1

// kernel: tpu_custom_call.1
$region0: #{tpu_custom_call.1}
  #allocation0 [shape = 'u32[]', space=smem, size = 0x4, offset = 0x4, fixed_abs, tag = 'smem constant byte address 0x4 - core index']
  #allocation1 [shape = 'u32[72,128]{1,0:T(1,128)}', space=vmem, size = 0x9000, scoped, tag = 'internal scratch']
  %s0 = inlined_call_operand.hbm [shape: bf16[16,256], index: 0, kind: input, shape index: {}]
  %s1 = inlined_call_operand.hbm [shape: bf16[256,1024], index: 1, kind: input, shape index: {}]
  %s2 = inlined_call_operand.hbm [shape: f32[1,1024], index: 2, kind: input, shape index: {}]
  %s3 = inlined_call_operand.hbm [shape: bf16[1024,512], index: 3, kind: input, shape index: {}]
  %s4 = inlined_call_operand.hbm [shape: f32[1,512], index: 4, kind: input, shape index: {}]
  %s5 = inlined_call_operand.hbm [shape: bf16[512,128], index: 5, kind: input, shape index: {}]
  %s6 = inlined_call_operand.vmem [shape: f32[1,128], index: 6, kind: input, shape index: {}]
  %s7 = inlined_call_operand.hbm [shape: f32[16,128], index: 7, kind: output, shape index: {}]
  %s8 = sld [smem:[#allocation0]]
  $region62: #{tpu_custom_call.1} parent=0
    _
  %s10 = ssub.s32 1, %s8
  %s11 = scalar_select 0, %s10, %s8
  $region1: #{tpu_custom_call.1} parent=0
    #allocation2 [shape = 'u8[8192]{0}', space=vmem, size = 0x2000, scoped, tag = 'input window, operand 0, single buffered']
    #allocation3 [shape = 's32[1]{0}', space=sflag, size = 0x4, scoped, tag = 'scoped memory for tpu_custom_call.1']
    #allocation4 [shape = 's32[1]{0}', space=sflag, size = 0x4, scoped, tag = 'scoped memory for tpu_custom_call.1']
    #allocation5 [shape = 'u8[524288]{0}', space=vmem, size = 0x80000, scoped, tag = 'input window, operand 1, single buffered']
    #allocation6 [shape = 's32[1]{0}', space=sflag, size = 0x4, scoped, tag = 'scoped memory for tpu_custom_call.1']
    #allocation7 [shape = 'u8[4096]{0}', space=vmem, size = 0x1000, scoped, tag = 'input window, operand 2, single buffered']
    #allocation8 [shape = 'u8[1048576]{0}', space=vmem, size = 0x100000, scoped, tag = 'input window, operand 3, single buffered']
    #allocation9 [shape = 's32[1]{0}', space=sflag, size = 0x4, scoped, tag = 'scoped memory for tpu_custom_call.1']
    #allocation10 [shape = 'u8[2048]{0}', space=vmem, size = 0x800, scoped, tag = 'input window, operand 4, single buffered']
    #allocation11 [shape = 'u8[131072]{0}', space=vmem, size = 0x20000, scoped, tag = 'input window, operand 5, single buffered']
    #allocation12 [shape = 's32[1]{0}', space=sflag, size = 0x4, scoped, tag = 'scoped memory for tpu_custom_call.1']
    #allocation13 [shape = 'u8[8192]{0}', space=vmem, size = 0x2000, scoped, tag = 'output window, operand 0, single buffered']
    %12 = vsyncpa [#allocation3], 0
    %13 = vsyncpa [#allocation6], 0
    %14 = vsyncpa [#allocation9], 0
    %15 = vsyncpa [#allocation12], 0
    %16 = vsyncpa [#allocation4], 0
    // Predicated region
    $region2: #{tpu_custom_call.1} parent=1 // pred_check
      _
    $region3: #{tpu_custom_call.1} parent=1 // pred_check_branch
      %18 = sbr.rel (0) target = $region5
    $region4: #{tpu_custom_call.1} parent=1 // pred_region
      %20 = vsyncadd [#allocation3], 0
      %s21 = sshll.u32 %s0, 4
      %s22 = int_to_ptr.hbm [resolvable:$true] %s21
      %s23 = sshll.u32 [#allocation2], 4
      %s24 = int_to_ptr.vmem [resolvable:$true] %s23
      %29 = dma.hbm_to_vmem [thread:$0]  %s22, 256, %s24, [#allocation3], 128, 128, 8
    $region5: #{tpu_custom_call.1} parent=1 // pred_fallthru
      _
    // Predicated region
    $region6: #{tpu_custom_call.1} parent=1 // pred_check
      _
    $region7: #{tpu_custom_call.1} parent=1 // pred_check_branch
      %31 = sbr.rel (0) target = $region9
    $region8: #{tpu_custom_call.1} parent=1 // pred_region
      %33 = vsyncadd [#allocation6], 0
      %s34 = sshll.u32 %s1, 4
      %s35 = int_to_ptr.hbm [resolvable:$true] %s34
      %s36 = sshll.u32 [#allocation5], 4
      %s37 = int_to_ptr.vmem [resolvable:$true] %s36
      %42 = dma.hbm_to_vmem [thread:$0]  %s35, 16384, %s37, [#allocation6], 512, 512, 32
    $region9: #{tpu_custom_call.1} parent=1 // pred_fallthru
      _
    // Predicated region
    $region10: #{tpu_custom_call.1} parent=1 // pred_check
      _
    $region11: #{tpu_custom_call.1} parent=1 // pred_check_branch
      %44 = sbr.rel (0) target = $region13
    $region12: #{tpu_custom_call.1} parent=1 // pred_region
      %46 = vsyncadd [#allocation6], 0
      %s48 = sshll.u32 %s2, 4
      %s49 = int_to_ptr.hbm [resolvable:$true] %s48
      %s50 = sshll.u32 [#allocation7], 4
      %s51 = int_to_ptr.vmem [resolvable:$true] %s50
      %53 = dma.hbm_to_vmem [thread:$0]  %s49, 128, %s51, [#allocation6]
    $region13: #{tpu_custom_call.1} parent=1 // pred_fallthru
      _
    // Predicated region
    $region14: #{tpu_custom_call.1} parent=1 // pred_check
      _
    $region15: #{tpu_custom_call.1} parent=1 // pred_check_branch
      %55 = sbr.rel (0) target = $region17
    $region16: #{tpu_custom_call.1} parent=1 // pred_region
      %57 = vsyncadd [#allocation9], 0
      %s58 = sshll.u32 %s3, 4
      %s59 = int_to_ptr.hbm [resolvable:$true] %s58
      %s60 = sshll.u32 [#allocation8], 4
      %s61 = int_to_ptr.vmem [resolvable:$true] %s60
      %66 = dma.hbm_to_vmem [thread:$0]  %s59, 32768, %s61, [#allocation9], 256, 256, 16
    $region17: #{tpu_custom_call.1} parent=1 // pred_fallthru
      _
    // Predicated region
    $region18: #{tpu_custom_call.1} parent=1 // pred_check
      _
    $region19: #{tpu_custom_call.1} parent=1 // pred_check_branch
      %68 = sbr.rel (0) target = $region21
    $region20: #{tpu_custom_call.1} parent=1 // pred_region
      %70 = vsyncadd [#allocation9], 0
      %s72 = sshll.u32 %s4, 4
      %s73 = int_to_ptr.hbm [resolvable:$true] %s72
      %s74 = sshll.u32 [#allocation10], 4
      %s75 = int_to_ptr.vmem [resolvable:$true] %s74
      %77 = dma.hbm_to_vmem [thread:$0]  %s73, 64, %s75, [#allocation9]
    $region21: #{tpu_custom_call.1} parent=1 // pred_fallthru
      _
    // Predicated region
    $region22: #{tpu_custom_call.1} parent=1 // pred_check
      _
    $region23: #{tpu_custom_call.1} parent=1 // pred_check_branch
      %79 = sbr.rel (0) target = $region25
    $region24: #{tpu_custom_call.1} parent=1 // pred_region
      %81 = vsyncadd [#allocation12], 0
      %s82 = sshll.u32 %s5, 4
      %s83 = int_to_ptr.hbm [resolvable:$true] %s82
      %s84 = sshll.u32 [#allocation11], 4
      %s85 = int_to_ptr.vmem [resolvable:$true] %s84
      %90 = dma.hbm_to_vmem [thread:$0]  %s83, 4096, %s85, [#allocation12], 64, 64, 4
    $region25: #{tpu_custom_call.1} parent=1 // pred_fallthru
      _
    // Predicated region
    $region26: #{tpu_custom_call.1} parent=1 // pred_check
      _
    $region27: #{tpu_custom_call.1} parent=1 // pred_check_branch
      %92 = sbr.rel (0) target = $region29
    $region28: #{tpu_custom_call.1} parent=1 // pred_region
      _
    $region29: #{tpu_custom_call.1} parent=1 // pred_fallthru
      _
    // Predicated region
    $region30: #{tpu_custom_call.1} parent=1 // pred_check
      _
    $region31: #{tpu_custom_call.1} parent=1 // pred_check_branch
      %94 = sbr.rel (0) target = $region33
    $region32: #{tpu_custom_call.1} parent=1 // pred_region
      %96 = dma.done [#allocation3], 256
    $region33: #{tpu_custom_call.1} parent=1 // pred_fallthru
      _
    // Predicated region
    $region34: #{tpu_custom_call.1} parent=1 // pred_check
      _
    $region35: #{tpu_custom_call.1} parent=1 // pred_check_branch
      %98 = sbr.rel (0) target = $region37
    $region36: #{tpu_custom_call.1} parent=1 // pred_region
      %100 = dma.done [#allocation6], 16384
    $region37: #{tpu_custom_call.1} parent=1 // pred_fallthru
      _
    // Predicated region
    $region38: #{tpu_custom_call.1} parent=1 // pred_check
      _
    $region39: #{tpu_custom_call.1} parent=1 // pred_check_branch
      %102 = sbr.rel (0) target = $region41
    $region40: #{tpu_custom_call.1} parent=1 // pred_region
      %104 = dma.done [#allocation6], 128
    $region41: #{tpu_custom_call.1} parent=1 // pred_fallthru
      _
    // Predicated region
    $region42: #{tpu_custom_call.1} parent=1 // pred_check
      _
    $region43: #{tpu_custom_call.1} parent=1 // pred_check_branch
      %106 = sbr.rel (0) target = $region45
    $region44: #{tpu_custom_call.1} parent=1 // pred_region
      %108 = dma.done [#allocation9], 32768
    $region45: #{tpu_custom_call.1} parent=1 // pred_fallthru
      _
    // Predicated region
    $region46: #{tpu_custom_call.1} parent=1 // pred_check
      _
    $region47: #{tpu_custom_call.1} parent=1 // pred_check_branch
      %110 = sbr.rel (0) target = $region49
    $region48: #{tpu_custom_call.1} parent=1 // pred_region
      %112 = dma.done [#allocation9], 64
    $region49: #{tpu_custom_call.1} parent=1 // pred_fallthru
      _
    // Predicated region
    $region50: #{tpu_custom_call.1} parent=1 // pred_check
      _
    $region51: #{tpu_custom_call.1} parent=1 // pred_check_branch
      %114 = sbr.rel (0) target = $region53
    $region52: #{tpu_custom_call.1} parent=1 // pred_region
      %116 = dma.done [#allocation12], 4096
    $region53: #{tpu_custom_call.1} parent=1 // pred_fallthru
      _
    %v117 = vld [vmem:[#allocation2] sm:$0xff]
    %v118 = vld [vmem:[#allocation2 + $0x8] sm:$0xff]
    %v119 = vld [vmem:[#allocation5] sm:$0xff]
    %v120 = vld [vmem:[#allocation5 + $0x8] sm:$0xff]
    %v121 = vld [vmem:[#allocation5 + $0x10] sm:$0xff]
    %v122 = vld [vmem:[#allocation5 + $0x18] sm:$0xff]
    %v123 = vld [vmem:[#allocation5 + $0x20] sm:$0xff]
    %v124 = vld [vmem:[#allocation5 + $0x28] sm:$0xff]
    %v125 = vld [vmem:[#allocation5 + $0x30] sm:$0xff]
    %v126 = vld [vmem:[#allocation5 + $0x38] sm:$0xff]
    %v127 = vld [vmem:[#allocation5 + $0x40] sm:$0xff]
    %v128 = vld [vmem:[#allocation5 + $0x48] sm:$0xff]
    %v129 = vld [vmem:[#allocation5 + $0x50] sm:$0xff]
    %v130 = vld [vmem:[#allocation5 + $0x58] sm:$0xff]
    %v131 = vld [vmem:[#allocation5 + $0x60] sm:$0xff]
    %v132 = vld [vmem:[#allocation5 + $0x68] sm:$0xff]
    %v133 = vld [vmem:[#allocation5 + $0x70] sm:$0xff]
    %v134 = vld [vmem:[#allocation5 + $0x78] sm:$0xff]
    %v135 = vld [vmem:[#allocation5 + $0x80] sm:$0xff]
    %v136 = vld [vmem:[#allocation5 + $0x88] sm:$0xff]
    %v137 = vld [vmem:[#allocation5 + $0x90] sm:$0xff]
    %v138 = vld [vmem:[#allocation5 + $0x98] sm:$0xff]
    %v139 = vld [vmem:[#allocation5 + $0xa0] sm:$0xff]
    %v140 = vld [vmem:[#allocation5 + $0xa8] sm:$0xff]
    %v141 = vld [vmem:[#allocation5 + $0xb0] sm:$0xff]
    %v142 = vld [vmem:[#allocation5 + $0xb8] sm:$0xff]
    %v143 = vld [vmem:[#allocation5 + $0xc0] sm:$0xff]
    %v144 = vld [vmem:[#allocation5 + $0xc8] sm:$0xff]
    %v145 = vld [vmem:[#allocation5 + $0xd0] sm:$0xff]
    %v146 = vld [vmem:[#allocation5 + $0xd8] sm:$0xff]
    %v147 = vld [vmem:[#allocation5 + $0xe0] sm:$0xff]
    %v148 = vld [vmem:[#allocation5 + $0xe8] sm:$0xff]
    %v149 = vld [vmem:[#allocation5 + $0xf0] sm:$0xff]
    %v150 = vld [vmem:[#allocation5 + $0xf8] sm:$0xff]
    %v151 = vld [vmem:[#allocation5 + $0x100] sm:$0xff]
    %v152 = vld [vmem:[#allocation5 + $0x108] sm:$0xff]
    %v153 = vld [vmem:[#allocation5 + $0x110] sm:$0xff]
    %v154 = vld [vmem:[#allocation5 + $0x118] sm:$0xff]
    %v155 = vld [vmem:[#allocation5 + $0x120] sm:$0xff]
    %v156 = vld [vmem:[#allocation5 + $0x128] sm:$0xff]
    %v157 = vld [vmem:[#allocation5 + $0x130] sm:$0xff]
    %v158 = vld [vmem:[#allocation5 + $0x138] sm:$0xff]
    %v159 = vld [vmem:[#allocation5 + $0x140] sm:$0xff]
    %v160 = vld [vmem:[#allocation5 + $0x148] sm:$0xff]
    %v161 = vld [vmem:[#allocation5 + $0x150] sm:$0xff]
    %v162 = vld [vmem:[#allocation5 + $0x158] sm:$0xff]
    %v163 = vld [vmem:[#allocation5 + $0x160] sm:$0xff]
    %v164 = vld [vmem:[#allocation5 + $0x168] sm:$0xff]
    %v165 = vld [vmem:[#allocation5 + $0x170] sm:$0xff]
    %v166 = vld [vmem:[#allocation5 + $0x178] sm:$0xff]
    %v167 = vld [vmem:[#allocation5 + $0x180] sm:$0xff]
    %v168 = vld [vmem:[#allocation5 + $0x188] sm:$0xff]
    %v169 = vld [vmem:[#allocation5 + $0x190] sm:$0xff]
    %v170 = vld [vmem:[#allocation5 + $0x198] sm:$0xff]
    %v171 = vld [vmem:[#allocation5 + $0x1a0] sm:$0xff]
    %v172 = vld [vmem:[#allocation5 + $0x1a8] sm:$0xff]
    %v173 = vld [vmem:[#allocation5 + $0x1b0] sm:$0xff]
    %v174 = vld [vmem:[#allocation5 + $0x1b8] sm:$0xff]
    %v175 = vld [vmem:[#allocation5 + $0x1c0] sm:$0xff]
    %v176 = vld [vmem:[#allocation5 + $0x1c8] sm:$0xff]
    %v177 = vld [vmem:[#allocation5 + $0x1d0] sm:$0xff]
    %v178 = vld [vmem:[#allocation5 + $0x1d8] sm:$0xff]
    %v179 = vld [vmem:[#allocation5 + $0x1e0] sm:$0xff]
    %v180 = vld [vmem:[#allocation5 + $0x1e8] sm:$0xff]
    %v181 = vld [vmem:[#allocation5 + $0x1f0] sm:$0xff]
    %v182 = vld [vmem:[#allocation5 + $0x1f8] sm:$0xff]
    %v183 = vld [vmem:[#allocation5 + $0x200] sm:$0xff]
    %v184 = vld [vmem:[#allocation5 + $0x208] sm:$0xff]
    %v185 = vld [vmem:[#allocation5 + $0x210] sm:$0xff]
    %v186 = vld [vmem:[#allocation5 + $0x218] sm:$0xff]
    %v187 = vld [vmem:[#allocation5 + $0x220] sm:$0xff]
    %v188 = vld [vmem:[#allocation5 + $0x228] sm:$0xff]
    %v189 = vld [vmem:[#allocation5 + $0x230] sm:$0xff]
    %v190 = vld [vmem:[#allocation5 + $0x238] sm:$0xff]
    %v191 = vld [vmem:[#allocation5 + $0x240] sm:$0xff]
    %v192 = vld [vmem:[#allocation5 + $0x248] sm:$0xff]
    %v193 = vld [vmem:[#allocation5 + $0x250] sm:$0xff]
    %v194 = vld [vmem:[#allocation5 + $0x258] sm:$0xff]
    %v195 = vld [vmem:[#allocation5 + $0x260] sm:$0xff]
    %v196 = vld [vmem:[#allocation5 + $0x268] sm:$0xff]
    %v197 = vld [vmem:[#allocation5 + $0x270] sm:$0xff]
    %v198 = vld [vmem:[#allocation5 + $0x278] sm:$0xff]
    %v199 = vld [vmem:[#allocation5 + $0x280] sm:$0xff]
    %v200 = vld [vmem:[#allocation5 + $0x288] sm:$0xff]
    %v201 = vld [vmem:[#allocation5 + $0x290] sm:$0xff]
    %v202 = vld [vmem:[#allocation5 + $0x298] sm:$0xff]
    %v203 = vld [vmem:[#allocation5 + $0x2a0] sm:$0xff]
    %v204 = vld [vmem:[#allocation5 + $0x2a8] sm:$0xff]
    %v205 = vld [vmem:[#allocation5 + $0x2b0] sm:$0xff]
    %v206 = vld [vmem:[#allocation5 + $0x2b8] sm:$0xff]
    %v207 = vld [vmem:[#allocation5 + $0x2c0] sm:$0xff]
    %v208 = vld [vmem:[#allocation5 + $0x2c8] sm:$0xff]
    %v209 = vld [vmem:[#allocation5 + $0x2d0] sm:$0xff]
    %v210 = vld [vmem:[#allocation5 + $0x2d8] sm:$0xff]
    %v211 = vld [vmem:[#allocation5 + $0x2e0] sm:$0xff]
    %v212 = vld [vmem:[#allocation5 + $0x2e8] sm:$0xff]
    %v213 = vld [vmem:[#allocation5 + $0x2f0] sm:$0xff]
    %v214 = vld [vmem:[#allocation5 + $0x2f8] sm:$0xff]
    %v215 = vld [vmem:[#allocation5 + $0x300] sm:$0xff]
    %v216 = vld [vmem:[#allocation5 + $0x308] sm:$0xff]
    %v217 = vld [vmem:[#allocation5 + $0x310] sm:$0xff]
    %v218 = vld [vmem:[#allocation5 + $0x318] sm:$0xff]
    %v219 = vld [vmem:[#allocation5 + $0x320] sm:$0xff]
    %v220 = vld [vmem:[#allocation5 + $0x328] sm:$0xff]
    %v221 = vld [vmem:[#allocation5 + $0x330] sm:$0xff]
    %v222 = vld [vmem:[#allocation5 + $0x338] sm:$0xff]
    %v223 = vld [vmem:[#allocation5 + $0x340] sm:$0xff]
    %v224 = vld [vmem:[#allocation5 + $0x348] sm:$0xff]
    %v225 = vld [vmem:[#allocation5 + $0x350] sm:$0xff]
    %v226 = vld [vmem:[#allocation5 + $0x358] sm:$0xff]
    %v227 = vld [vmem:[#allocation5 + $0x360] sm:$0xff]
    %v228 = vld [vmem:[#allocation5 + $0x368] sm:$0xff]
    %v229 = vld [vmem:[#allocation5 + $0x370] sm:$0xff]
    %v230 = vld [vmem:[#allocation5 + $0x378] sm:$0xff]
    %v231 = vld [vmem:[#allocation5 + $0x380] sm:$0xff]
    %v232 = vld [vmem:[#allocation5 + $0x388] sm:$0xff]
    %v233 = vld [vmem:[#allocation5 + $0x390] sm:$0xff]
    %v234 = vld [vmem:[#allocation5 + $0x398] sm:$0xff]
    %v235 = vld [vmem:[#allocation5 + $0x3a0] sm:$0xff]
    %v236 = vld [vmem:[#allocation5 + $0x3a8] sm:$0xff]
    %v237 = vld [vmem:[#allocation5 + $0x3b0] sm:$0xff]
    %v238 = vld [vmem:[#allocation5 + $0x3b8] sm:$0xff]
    %v239 = vld [vmem:[#allocation5 + $0x3c0] sm:$0xff]
    %v240 = vld [vmem:[#allocation5 + $0x3c8] sm:$0xff]
    %v241 = vld [vmem:[#allocation5 + $0x3d0] sm:$0xff]
    %v242 = vld [vmem:[#allocation5 + $0x3d8] sm:$0xff]
    %v243 = vld [vmem:[#allocation5 + $0x3e0] sm:$0xff]
    %v244 = vld [vmem:[#allocation5 + $0x3e8] sm:$0xff]
    %v245 = vld [vmem:[#allocation5 + $0x3f0] sm:$0xff]
    %v246 = vld [vmem:[#allocation5 + $0x3f8] sm:$0xff]
    %v247 = vld [vmem:[#allocation7] sm:$0xff]
    %v249 = vperm.slane %v247, 0
    %v250 = vperm.slane %v247, 1
    %v251 = vperm.slane %v247, 2
    %v252 = vperm.slane %v247, 3
    %v253 = vperm.slane %v247, 4
    %v254 = vperm.slane %v247, 5
    %v255 = vperm.slane %v247, 6
    %v256 = vperm.slane %v247, 7
    %v267 = vunpack.c.l.b16 %v117
    %v268 = vunpack.c.h.b16 %v117
    %v269 = vunpack.c.l.b16 %v118
    %v270 = vunpack.c.h.b16 %v118
    %v271 = vpack.c.b16 %v269, %v267
    %v272 = vpack.c.b16 %v270, %v268
    %v403 = vunpack.c.l.b16 %v119
    %v404 = vunpack.c.h.b16 %v119
    %v405 = vunpack.c.l.b16 %v120
    %v406 = vunpack.c.h.b16 %v120
    %v407 = vunpack.c.l.b16 %v121
    %v408 = vunpack.c.h.b16 %v121
    %v409 = vunpack.c.l.b16 %v122
    %v410 = vunpack.c.h.b16 %v122
    %v411 = vunpack.c.l.b16 %v123
    %v412 = vunpack.c.h.b16 %v123
    %v413 = vunpack.c.l.b16 %v124
    %v414 = vunpack.c.h.b16 %v124
    %v415 = vunpack.c.l.b16 %v125
    %v416 = vunpack.c.h.b16 %v125
    %v417 = vunpack.c.l.b16 %v126
    %v418 = vunpack.c.h.b16 %v126
    %v419 = vunpack.c.l.b16 %v127
    %v420 = vunpack.c.h.b16 %v127
    %v421 = vunpack.c.l.b16 %v128
    %v422 = vunpack.c.h.b16 %v128
    %v423 = vunpack.c.l.b16 %v129
    %v424 = vunpack.c.h.b16 %v129
    %v425 = vunpack.c.l.b16 %v130
    %v426 = vunpack.c.h.b16 %v130
    %v427 = vunpack.c.l.b16 %v131
    %v428 = vunpack.c.h.b16 %v131
    %v429 = vunpack.c.l.b16 %v132
    %v430 = vunpack.c.h.b16 %v132
    %v431 = vunpack.c.l.b16 %v133
    %v432 = vunpack.c.h.b16 %v133
    %v433 = vunpack.c.l.b16 %v134
    %v434 = vunpack.c.h.b16 %v134
    %v435 = vunpack.c.l.b16 %v135
    %v436 = vunpack.c.h.b16 %v135
    %v437 = vunpack.c.l.b16 %v136
    %v438 = vunpack.c.h.b16 %v136
    %v439 = vunpack.c.l.b16 %v137
    %v440 = vunpack.c.h.b16 %v137
    %v441 = vunpack.c.l.b16 %v138
    %v442 = vunpack.c.h.b16 %v138
    %v443 = vunpack.c.l.b16 %v139
    %v444 = vunpack.c.h.b16 %v139
    %v445 = vunpack.c.l.b16 %v140
    %v446 = vunpack.c.h.b16 %v140
    %v447 = vunpack.c.l.b16 %v141
    %v448 = vunpack.c.h.b16 %v141
    %v449 = vunpack.c.l.b16 %v142
    %v450 = vunpack.c.h.b16 %v142
    %v451 = vunpack.c.l.b16 %v143
    %v452 = vunpack.c.h.b16 %v143
    %v453 = vunpack.c.l.b16 %v144
    %v454 = vunpack.c.h.b16 %v144
    %v455 = vunpack.c.l.b16 %v145
    %v456 = vunpack.c.h.b16 %v145
    %v457 = vunpack.c.l.b16 %v146
    %v458 = vunpack.c.h.b16 %v146
    %v459 = vunpack.c.l.b16 %v147
    %v460 = vunpack.c.h.b16 %v147
    %v461 = vunpack.c.l.b16 %v148
    %v462 = vunpack.c.h.b16 %v148
    %v463 = vunpack.c.l.b16 %v149
    %v464 = vunpack.c.h.b16 %v149
    %v465 = vunpack.c.l.b16 %v150
    %v466 = vunpack.c.h.b16 %v150
    %v467 = vunpack.c.l.b16 %v151
    %v468 = vunpack.c.h.b16 %v151
    %v469 = vunpack.c.l.b16 %v152
    %v470 = vunpack.c.h.b16 %v152
    %v471 = vunpack.c.l.b16 %v153
    %v472 = vunpack.c.h.b16 %v153
    %v473 = vunpack.c.l.b16 %v154
    %v474 = vunpack.c.h.b16 %v154
    %v475 = vunpack.c.l.b16 %v155
    %v476 = vunpack.c.h.b16 %v155
    %v477 = vunpack.c.l.b16 %v156
    %v478 = vunpack.c.h.b16 %v156
    %v479 = vunpack.c.l.b16 %v157
    %v480 = vunpack.c.h.b16 %v157
    %v481 = vunpack.c.l.b16 %v158
    %v482 = vunpack.c.h.b16 %v158
    %v483 = vunpack.c.l.b16 %v159
    %v484 = vunpack.c.h.b16 %v159
    %v485 = vunpack.c.l.b16 %v160
    %v486 = vunpack.c.h.b16 %v160
    %v487 = vunpack.c.l.b16 %v161
    %v488 = vunpack.c.h.b16 %v161
    %v489 = vunpack.c.l.b16 %v162
    %v490 = vunpack.c.h.b16 %v162
    %v491 = vunpack.c.l.b16 %v163
    %v492 = vunpack.c.h.b16 %v163
    %v493 = vunpack.c.l.b16 %v164
    %v494 = vunpack.c.h.b16 %v164
    %v495 = vunpack.c.l.b16 %v165
    %v496 = vunpack.c.h.b16 %v165
    %v497 = vunpack.c.l.b16 %v166
    %v498 = vunpack.c.h.b16 %v166
    %v499 = vunpack.c.l.b16 %v167
    %v500 = vunpack.c.h.b16 %v167
    %v501 = vunpack.c.l.b16 %v168
    %v502 = vunpack.c.h.b16 %v168
    %v503 = vunpack.c.l.b16 %v169
    %v504 = vunpack.c.h.b16 %v169
    %v505 = vunpack.c.l.b16 %v170
    %v506 = vunpack.c.h.b16 %v170
    %v507 = vunpack.c.l.b16 %v171
    %v508 = vunpack.c.h.b16 %v171
    %v509 = vunpack.c.l.b16 %v172
    %v510 = vunpack.c.h.b16 %v172
    %v511 = vunpack.c.l.b16 %v173
    %v512 = vunpack.c.h.b16 %v173
    %v513 = vunpack.c.l.b16 %v174
    %v514 = vunpack.c.h.b16 %v174
    %v515 = vunpack.c.l.b16 %v175
    %v516 = vunpack.c.h.b16 %v175
    %v517 = vunpack.c.l.b16 %v176
    %v518 = vunpack.c.h.b16 %v176
    %v519 = vunpack.c.l.b16 %v177
    %v520 = vunpack.c.h.b16 %v177
    %v521 = vunpack.c.l.b16 %v178
    %v522 = vunpack.c.h.b16 %v178
    %v523 = vunpack.c.l.b16 %v179
    %v524 = vunpack.c.h.b16 %v179
    %v525 = vunpack.c.l.b16 %v180
    %v526 = vunpack.c.h.b16 %v180
    %v527 = vunpack.c.l.b16 %v181
    %v528 = vunpack.c.h.b16 %v181
    %v529 = vunpack.c.l.b16 %v182
    %v530 = vunpack.c.h.b16 %v182
    %v531 = vunpack.c.l.b16 %v183
    %v532 = vunpack.c.h.b16 %v183
    %v533 = vunpack.c.l.b16 %v184
    %v534 = vunpack.c.h.b16 %v184
    %v535 = vunpack.c.l.b16 %v185
    %v536 = vunpack.c.h.b16 %v185
    %v537 = vunpack.c.l.b16 %v186
    %v538 = vunpack.c.h.b16 %v186
    %v539 = vunpack.c.l.b16 %v187
    %v540 = vunpack.c.h.b16 %v187
    %v541 = vunpack.c.l.b16 %v188
    %v542 = vunpack.c.h.b16 %v188
    %v543 = vunpack.c.l.b16 %v189
    %v544 = vunpack.c.h.b16 %v189
    %v545 = vunpack.c.l.b16 %v190
    %v546 = vunpack.c.h.b16 %v190
    %v547 = vunpack.c.l.b16 %v191
    %v548 = vunpack.c.h.b16 %v191
    %v549 = vunpack.c.l.b16 %v192
    %v550 = vunpack.c.h.b16 %v192
    %v551 = vunpack.c.l.b16 %v193
    %v552 = vunpack.c.h.b16 %v193
    %v553 = vunpack.c.l.b16 %v194
    %v554 = vunpack.c.h.b16 %v194
    %v555 = vunpack.c.l.b16 %v195
    %v556 = vunpack.c.h.b16 %v195
    %v557 = vunpack.c.l.b16 %v196
    %v558 = vunpack.c.h.b16 %v196
    %v559 = vunpack.c.l.b16 %v197
    %v560 = vunpack.c.h.b16 %v197
    %v561 = vunpack.c.l.b16 %v198
    %v562 = vunpack.c.h.b16 %v198
    %v563 = vunpack.c.l.b16 %v199
    %v564 = vunpack.c.h.b16 %v199
    %v565 = vunpack.c.l.b16 %v200
    %v566 = vunpack.c.h.b16 %v200
    %v567 = vunpack.c.l.b16 %v201
    %v568 = vunpack.c.h.b16 %v201
    %v569 = vunpack.c.l.b16 %v202
    %v570 = vunpack.c.h.b16 %v202
    %v571 = vunpack.c.l.b16 %v203
    %v572 = vunpack.c.h.b16 %v203
    %v573 = vunpack.c.l.b16 %v204
    %v574 = vunpack.c.h.b16 %v204
    %v575 = vunpack.c.l.b16 %v205
    %v576 = vunpack.c.h.b16 %v205
    %v577 = vunpack.c.l.b16 %v206
    %v578 = vunpack.c.h.b16 %v206
    %v579 = vunpack.c.l.b16 %v207
    %v580 = vunpack.c.h.b16 %v207
    %v581 = vunpack.c.l.b16 %v208
    %v582 = vunpack.c.h.b16 %v208
    %v583 = vunpack.c.l.b16 %v209
    %v584 = vunpack.c.h.b16 %v209
    %v585 = vunpack.c.l.b16 %v210
    %v586 = vunpack.c.h.b16 %v210
    %v587 = vunpack.c.l.b16 %v211
    %v588 = vunpack.c.h.b16 %v211
    %v589 = vunpack.c.l.b16 %v212
    %v590 = vunpack.c.h.b16 %v212
    %v591 = vunpack.c.l.b16 %v213
    %v592 = vunpack.c.h.b16 %v213
    %v593 = vunpack.c.l.b16 %v214
    %v594 = vunpack.c.h.b16 %v214
    %v595 = vunpack.c.l.b16 %v215
    %v596 = vunpack.c.h.b16 %v215
    %v597 = vunpack.c.l.b16 %v216
    %v598 = vunpack.c.h.b16 %v216
    %v599 = vunpack.c.l.b16 %v217
    %v600 = vunpack.c.h.b16 %v217
    %v601 = vunpack.c.l.b16 %v218
    %v602 = vunpack.c.h.b16 %v218
    %v603 = vunpack.c.l.b16 %v219
    %v604 = vunpack.c.h.b16 %v219
    %v605 = vunpack.c.l.b16 %v220
    %v606 = vunpack.c.h.b16 %v220
    %v607 = vunpack.c.l.b16 %v221
    %v608 = vunpack.c.h.b16 %v221
    %v609 = vunpack.c.l.b16 %v222
    %v610 = vunpack.c.h.b16 %v222
    %v611 = vunpack.c.l.b16 %v223
    %v612 = vunpack.c.h.b16 %v223
    %v613 = vunpack.c.l.b16 %v224
    %v614 = vunpack.c.h.b16 %v224
    %v615 = vunpack.c.l.b16 %v225
    %v616 = vunpack.c.h.b16 %v225
    %v617 = vunpack.c.l.b16 %v226
    %v618 = vunpack.c.h.b16 %v226
    %v619 = vunpack.c.l.b16 %v227
    %v620 = vunpack.c.h.b16 %v227
    %v621 = vunpack.c.l.b16 %v228
    %v622 = vunpack.c.h.b16 %v228
    %v623 = vunpack.c.l.b16 %v229
    %v624 = vunpack.c.h.b16 %v229
    %v625 = vunpack.c.l.b16 %v230
    %v626 = vunpack.c.h.b16 %v230
    %v627 = vunpack.c.l.b16 %v231
    %v628 = vunpack.c.h.b16 %v231
    %v629 = vunpack.c.l.b16 %v232
    %v630 = vunpack.c.h.b16 %v232
    %v631 = vunpack.c.l.b16 %v233
    %v632 = vunpack.c.h.b16 %v233
    %v633 = vunpack.c.l.b16 %v234
    %v634 = vunpack.c.h.b16 %v234
    %v635 = vunpack.c.l.b16 %v235
    %v636 = vunpack.c.h.b16 %v235
    %v637 = vunpack.c.l.b16 %v236
    %v638 = vunpack.c.h.b16 %v236
    %v639 = vunpack.c.l.b16 %v237
    %v640 = vunpack.c.h.b16 %v237
    %v641 = vunpack.c.l.b16 %v238
    %v642 = vunpack.c.h.b16 %v238
    %v643 = vunpack.c.l.b16 %v239
    %v644 = vunpack.c.h.b16 %v239
    %v645 = vunpack.c.l.b16 %v240
    %v646 = vunpack.c.h.b16 %v240
    %v647 = vunpack.c.l.b16 %v241
    %v648 = vunpack.c.h.b16 %v241
    %v649 = vunpack.c.l.b16 %v242
    %v650 = vunpack.c.h.b16 %v242
    %v651 = vunpack.c.l.b16 %v243
    %v652 = vunpack.c.h.b16 %v243
    %v653 = vunpack.c.l.b16 %v244
    %v654 = vunpack.c.h.b16 %v244
    %v655 = vunpack.c.l.b16 %v245
    %v656 = vunpack.c.h.b16 %v245
    %v657 = vunpack.c.l.b16 %v246
    %v658 = vunpack.c.h.b16 %v246
    %v659 = vpack.c.b16 %v411, %v403
    %v660 = vpack.c.b16 %v412, %v404
    %v661 = vpack.c.b16 %v413, %v405
    %v662 = vpack.c.b16 %v414, %v406
    %v663 = vpack.c.b16 %v415, %v407
    %v664 = vpack.c.b16 %v416, %v408
    %v665 = vpack.c.b16 %v417, %v409
    %v666 = vpack.c.b16 %v418, %v410
    %v667 = vpack.c.b16 %v427, %v419
    %v668 = vpack.c.b16 %v428, %v420
    %v669 = vpack.c.b16 %v429, %v421
    %v670 = vpack.c.b16 %v430, %v422
    %v671 = vpack.c.b16 %v431, %v423
    %v672 = vpack.c.b16 %v432, %v424
    %v673 = vpack.c.b16 %v433, %v425
    %v674 = vpack.c.b16 %v434, %v426
    %v675 = vpack.c.b16 %v443, %v435
    %v676 = vpack.c.b16 %v444, %v436
    %v677 = vpack.c.b16 %v445, %v437
    %v678 = vpack.c.b16 %v446, %v438
    %v679 = vpack.c.b16 %v447, %v439
    %v680 = vpack.c.b16 %v448, %v440
    %v681 = vpack.c.b16 %v449, %v441
    %v682 = vpack.c.b16 %v450, %v442
    %v683 = vpack.c.b16 %v459, %v451
    %v684 = vpack.c.b16 %v460, %v452
    %v685 = vpack.c.b16 %v461, %v453
    %v686 = vpack.c.b16 %v462, %v454
    %v687 = vpack.c.b16 %v463, %v455
    %v688 = vpack.c.b16 %v464, %v456
    %v689 = vpack.c.b16 %v465, %v457
    %v690 = vpack.c.b16 %v466, %v458
    %v691 = vpack.c.b16 %v475, %v467
    %v692 = vpack.c.b16 %v476, %v468
    %v693 = vpack.c.b16 %v477, %v469
    %v694 = vpack.c.b16 %v478, %v470
    %v695 = vpack.c.b16 %v479, %v471
    %v696 = vpack.c.b16 %v480, %v472
    %v697 = vpack.c.b16 %v481, %v473
    %v698 = vpack.c.b16 %v482, %v474
    %v699 = vpack.c.b16 %v491, %v483
    %v700 = vpack.c.b16 %v492, %v484
    %v701 = vpack.c.b16 %v493, %v485
    %v702 = vpack.c.b16 %v494, %v486
    %v703 = vpack.c.b16 %v495, %v487
    %v704 = vpack.c.b16 %v496, %v488
    %v705 = vpack.c.b16 %v497, %v489
    %v706 = vpack.c.b16 %v498, %v490
    %v707 = vpack.c.b16 %v507, %v499
    %v708 = vpack.c.b16 %v508, %v500
    %v709 = vpack.c.b16 %v509, %v501
    %v710 = vpack.c.b16 %v510, %v502
    %v711 = vpack.c.b16 %v511, %v503
    %v712 = vpack.c.b16 %v512, %v504
    %v713 = vpack.c.b16 %v513, %v505
    %v714 = vpack.c.b16 %v514, %v506
    %v715 = vpack.c.b16 %v523, %v515
    %v716 = vpack.c.b16 %v524, %v516
    %v717 = vpack.c.b16 %v525, %v517
    %v718 = vpack.c.b16 %v526, %v518
    %v719 = vpack.c.b16 %v527, %v519
    %v720 = vpack.c.b16 %v528, %v520
    %v721 = vpack.c.b16 %v529, %v521
    %v722 = vpack.c.b16 %v530, %v522
    %v723 = vpack.c.b16 %v539, %v531
    %v724 = vpack.c.b16 %v540, %v532
    %v725 = vpack.c.b16 %v541, %v533
    %v726 = vpack.c.b16 %v542, %v534
    %v727 = vpack.c.b16 %v543, %v535
    %v728 = vpack.c.b16 %v544, %v536
    %v729 = vpack.c.b16 %v545, %v537
    %v730 = vpack.c.b16 %v546, %v538
    %v731 = vpack.c.b16 %v555, %v547
    %v732 = vpack.c.b16 %v556, %v548
    %v733 = vpack.c.b16 %v557, %v549
    %v734 = vpack.c.b16 %v558, %v550
    %v735 = vpack.c.b16 %v559, %v551
    %v736 = vpack.c.b16 %v560, %v552
    %v737 = vpack.c.b16 %v561, %v553
    %v738 = vpack.c.b16 %v562, %v554
    %v739 = vpack.c.b16 %v571, %v563
    %v740 = vpack.c.b16 %v572, %v564
    %v741 = vpack.c.b16 %v573, %v565
    %v742 = vpack.c.b16 %v574, %v566
    %v743 = vpack.c.b16 %v575, %v567
    %v744 = vpack.c.b16 %v576, %v568
    %v745 = vpack.c.b16 %v577, %v569
    %v746 = vpack.c.b16 %v578, %v570
    %v747 = vpack.c.b16 %v587, %v579
    %v748 = vpack.c.b16 %v588, %v580
    %v749 = vpack.c.b16 %v589, %v581
    %v750 = vpack.c.b16 %v590, %v582
    %v751 = vpack.c.b16 %v591, %v583
    %v752 = vpack.c.b16 %v592, %v584
    %v753 = vpack.c.b16 %v593, %v585
    %v754 = vpack.c.b16 %v594, %v586
    %v755 = vpack.c.b16 %v603, %v595
    %v756 = vpack.c.b16 %v604, %v596
    %v757 = vpack.c.b16 %v605, %v597
    %v758 = vpack.c.b16 %v606, %v598
    %v759 = vpack.c.b16 %v607, %v599
    %v760 = vpack.c.b16 %v608, %v600
    %v761 = vpack.c.b16 %v609, %v601
    %v762 = vpack.c.b16 %v610, %v602
    %v763 = vpack.c.b16 %v619, %v611
    %v764 = vpack.c.b16 %v620, %v612
    %v765 = vpack.c.b16 %v621, %v613
    %v766 = vpack.c.b16 %v622, %v614
    %v767 = vpack.c.b16 %v623, %v615
    %v768 = vpack.c.b16 %v624, %v616
    %v769 = vpack.c.b16 %v625, %v617
    %v770 = vpack.c.b16 %v626, %v618
    %v771 = vpack.c.b16 %v635, %v627
    %v772 = vpack.c.b16 %v636, %v628
    %v773 = vpack.c.b16 %v637, %v629
    %v774 = vpack.c.b16 %v638, %v630
    %v775 = vpack.c.b16 %v639, %v631
    %v776 = vpack.c.b16 %v640, %v632
    %v777 = vpack.c.b16 %v641, %v633
    %v778 = vpack.c.b16 %v642, %v634
    %v779 = vpack.c.b16 %v651, %v643
    %v780 = vpack.c.b16 %v652, %v644
    %v781 = vpack.c.b16 %v653, %v645
    %v782 = vpack.c.b16 %v654, %v646
    %v783 = vpack.c.b16 %v655, %v647
    %v784 = vpack.c.b16 %v656, %v648
    %v785 = vpack.c.b16 %v657, %v649
    %v786 = vpack.c.b16 %v658, %v650
    %915 = vmatpush.bf16.msra.mxu0 %v715
    %916 = vmatpush.bf16.msra.mxu0 %v707
    %917 = vmatpush.bf16.msra.mxu0 %v699
    %918 = vmatpush.bf16.msra.mxu0 %v691
    %919 = vmatpush.bf16.msra.mxu0 %v683
    %920 = vmatpush.bf16.msra.mxu0 %v675
    %921 = vmatpush.bf16.msra.mxu0 %v667
    %922 = vmatpush.bf16.msra.mxu0 %v659
    %923 = vmatmul.bf16.gmra.mxu0 %v271
    %v924 = vpop.f32.mrf.mxu0
    %v925 = vadd.f32 %v249, %v924
    %v926 = vpop.f32.mrf.mxu0
    %v927 = vadd.f32 %v249, %v926
    %928 = vdwg.mxu0
    %929 = vmatpush.bf16.msra.mxu0 %v779
    %930 = vmatpush.bf16.msra.mxu0 %v771
    %931 = vmatpush.bf16.msra.mxu0 %v763
    %932 = vmatpush.bf16.msra.mxu0 %v755
    %933 = vmatpush.bf16.msra.mxu0 %v747
    %934 = vmatpush.bf16.msra.mxu0 %v739
    %935 = vmatpush.bf16.msra.mxu0 %v731
    %936 = vmatpush.bf16.msra.mxu0 %v723
    %937 = vmatmul.bf16.gmra.mxu0 %v272
    %v938 = vpop.f32.mrf.mxu0
    %v939 = vadd.f32 %v925, %v938
    %v940 = vpop.f32.mrf.mxu0
    %v941 = vadd.f32 %v927, %v940
    %942 = vdwg.mxu0
    %943 = vmatpush.bf16.msra.mxu0 %v716
    %944 = vmatpush.bf16.msra.mxu0 %v708
    %945 = vmatpush.bf16.msra.mxu0 %v700
    %946 = vmatpush.bf16.msra.mxu0 %v692
    %947 = vmatpush.bf16.msra.mxu0 %v684
    %948 = vmatpush.bf16.msra.mxu0 %v676
    %949 = vmatpush.bf16.msra.mxu0 %v668
    %950 = vmatpush.bf16.msra.mxu0 %v660
    %951 = vmatmul.bf16.gmra.mxu0 %v271
    %v952 = vpop.f32.mrf.mxu0
    %v953 = vadd.f32 %v250, %v952
    %v954 = vpop.f32.mrf.mxu0
    %v955 = vadd.f32 %v250, %v954
    %956 = vdwg.mxu0
    %957 = vmatpush.bf16.msra.mxu0 %v780
    %958 = vmatpush.bf16.msra.mxu0 %v772
    %959 = vmatpush.bf16.msra.mxu0 %v764
    %960 = vmatpush.bf16.msra.mxu0 %v756
    %961 = vmatpush.bf16.msra.mxu0 %v748
    %962 = vmatpush.bf16.msra.mxu0 %v740
    %963 = vmatpush.bf16.msra.mxu0 %v732
    %964 = vmatpush.bf16.msra.mxu0 %v724
    %965 = vmatmul.bf16.gmra.mxu0 %v272
    %v966 = vpop.f32.mrf.mxu0
    %v967 = vadd.f32 %v953, %v966
    %v968 = vpop.f32.mrf.mxu0
    %v969 = vadd.f32 %v955, %v968
    %970 = vdwg.mxu0
    %971 = vmatpush.bf16.msra.mxu0 %v717
    %972 = vmatpush.bf16.msra.mxu0 %v709
    %973 = vmatpush.bf16.msra.mxu0 %v701
    %974 = vmatpush.bf16.msra.mxu0 %v693
    %975 = vmatpush.bf16.msra.mxu0 %v685
    %976 = vmatpush.bf16.msra.mxu0 %v677
    %977 = vmatpush.bf16.msra.mxu0 %v669
    %978 = vmatpush.bf16.msra.mxu0 %v661
    %979 = vmatmul.bf16.gmra.mxu0 %v271
    %v980 = vpop.f32.mrf.mxu0
    %v981 = vadd.f32 %v251, %v980
    %v982 = vpop.f32.mrf.mxu0
    %v983 = vadd.f32 %v251, %v982
    %984 = vdwg.mxu0
    %985 = vmatpush.bf16.msra.mxu0 %v781
    %986 = vmatpush.bf16.msra.mxu0 %v773
    %987 = vmatpush.bf16.msra.mxu0 %v765
    %988 = vmatpush.bf16.msra.mxu0 %v757
    %989 = vmatpush.bf16.msra.mxu0 %v749
    %990 = vmatpush.bf16.msra.mxu0 %v741
    %991 = vmatpush.bf16.msra.mxu0 %v733
    %992 = vmatpush.bf16.msra.mxu0 %v725
    %993 = vmatmul.bf16.gmra.mxu0 %v272
    %v994 = vpop.f32.mrf.mxu0
    %v995 = vadd.f32 %v981, %v994
    %v996 = vpop.f32.mrf.mxu0
    %v997 = vadd.f32 %v983, %v996
    %998 = vdwg.mxu0
    %999 = vmatpush.bf16.msra.mxu0 %v718
    %1000 = vmatpush.bf16.msra.mxu0 %v710
    %1001 = vmatpush.bf16.msra.mxu0 %v702
    %1002 = vmatpush.bf16.msra.mxu0 %v694
    %1003 = vmatpush.bf16.msra.mxu0 %v686
    %1004 = vmatpush.bf16.msra.mxu0 %v678
    %1005 = vmatpush.bf16.msra.mxu0 %v670
    %1006 = vmatpush.bf16.msra.mxu0 %v662
    %1007 = vmatmul.bf16.gmra.mxu0 %v271
    %v1008 = vpop.f32.mrf.mxu0
    %v1009 = vadd.f32 %v252, %v1008
    %v1010 = vpop.f32.mrf.mxu0
    %v1011 = vadd.f32 %v252, %v1010
    %1012 = vdwg.mxu0
    %1013 = vmatpush.bf16.msra.mxu0 %v782
    %1014 = vmatpush.bf16.msra.mxu0 %v774
    %1015 = vmatpush.bf16.msra.mxu0 %v766
    %1016 = vmatpush.bf16.msra.mxu0 %v758
    %1017 = vmatpush.bf16.msra.mxu0 %v750
    %1018 = vmatpush.bf16.msra.mxu0 %v742
    %1019 = vmatpush.bf16.msra.mxu0 %v734
    %1020 = vmatpush.bf16.msra.mxu0 %v726
    %1021 = vmatmul.bf16.gmra.mxu0 %v272
    %v1022 = vpop.f32.mrf.mxu0
    %v1023 = vadd.f32 %v1009, %v1022
    %v1024 = vpop.f32.mrf.mxu0
    %v1025 = vadd.f32 %v1011, %v1024
    %1026 = vdwg.mxu0
    %1027 = vmatpush.bf16.msra.mxu0 %v719
    %1028 = vmatpush.bf16.msra.mxu0 %v711
    %1029 = vmatpush.bf16.msra.mxu0 %v703
    %1030 = vmatpush.bf16.msra.mxu0 %v695
    %1031 = vmatpush.bf16.msra.mxu0 %v687
    %1032 = vmatpush.bf16.msra.mxu0 %v679
    %1033 = vmatpush.bf16.msra.mxu0 %v671
    %1034 = vmatpush.bf16.msra.mxu0 %v663
    %1035 = vmatmul.bf16.gmra.mxu0 %v271
    %v1036 = vpop.f32.mrf.mxu0
    %v1037 = vadd.f32 %v253, %v1036
    %v1038 = vpop.f32.mrf.mxu0
    %v1039 = vadd.f32 %v253, %v1038
    %1040 = vdwg.mxu0
    %1041 = vmatpush.bf16.msra.mxu0 %v783
    %1042 = vmatpush.bf16.msra.mxu0 %v775
    %1043 = vmatpush.bf16.msra.mxu0 %v767
    %1044 = vmatpush.bf16.msra.mxu0 %v759
    %1045 = vmatpush.bf16.msra.mxu0 %v751
    %1046 = vmatpush.bf16.msra.mxu0 %v743
    %1047 = vmatpush.bf16.msra.mxu0 %v735
    %1048 = vmatpush.bf16.msra.mxu0 %v727
    %1049 = vmatmul.bf16.gmra.mxu0 %v272
    %v1050 = vpop.f32.mrf.mxu0
    %v1051 = vadd.f32 %v1037, %v1050
    %v1052 = vpop.f32.mrf.mxu0
    %v1053 = vadd.f32 %v1039, %v1052
    %1054 = vdwg.mxu0
    %1055 = vmatpush.bf16.msra.mxu0 %v720
    %1056 = vmatpush.bf16.msra.mxu0 %v712
    %1057 = vmatpush.bf16.msra.mxu0 %v704
    %1058 = vmatpush.bf16.msra.mxu0 %v696
    %1059 = vmatpush.bf16.msra.mxu0 %v688
    %1060 = vmatpush.bf16.msra.mxu0 %v680
    %1061 = vmatpush.bf16.msra.mxu0 %v672
    %1062 = vmatpush.bf16.msra.mxu0 %v664
    %1063 = vmatmul.bf16.gmra.mxu0 %v271
    %v1064 = vpop.f32.mrf.mxu0
    %v1065 = vadd.f32 %v254, %v1064
    %v1066 = vpop.f32.mrf.mxu0
    %v1067 = vadd.f32 %v254, %v1066
    %1068 = vdwg.mxu0
    %1069 = vmatpush.bf16.msra.mxu0 %v784
    %1070 = vmatpush.bf16.msra.mxu0 %v776
    %1071 = vmatpush.bf16.msra.mxu0 %v768
    %1072 = vmatpush.bf16.msra.mxu0 %v760
    %1073 = vmatpush.bf16.msra.mxu0 %v752
    %1074 = vmatpush.bf16.msra.mxu0 %v744
    %1075 = vmatpush.bf16.msra.mxu0 %v736
    %1076 = vmatpush.bf16.msra.mxu0 %v728
    %1077 = vmatmul.bf16.gmra.mxu0 %v272
    %v1078 = vpop.f32.mrf.mxu0
    %v1079 = vadd.f32 %v1065, %v1078
    %v1080 = vpop.f32.mrf.mxu0
    %v1081 = vadd.f32 %v1067, %v1080
    %1082 = vdwg.mxu0
    %1083 = vmatpush.bf16.msra.mxu0 %v721
    %1084 = vmatpush.bf16.msra.mxu0 %v713
    %1085 = vmatpush.bf16.msra.mxu0 %v705
    %1086 = vmatpush.bf16.msra.mxu0 %v697
    %1087 = vmatpush.bf16.msra.mxu0 %v689
    %1088 = vmatpush.bf16.msra.mxu0 %v681
    %1089 = vmatpush.bf16.msra.mxu0 %v673
    %1090 = vmatpush.bf16.msra.mxu0 %v665
    %1091 = vmatmul.bf16.gmra.mxu0 %v271
    %v1092 = vpop.f32.mrf.mxu0
    %v1093 = vadd.f32 %v255, %v1092
    %v1094 = vpop.f32.mrf.mxu0
    %v1095 = vadd.f32 %v255, %v1094
    %1096 = vdwg.mxu0
    %1097 = vmatpush.bf16.msra.mxu0 %v785
    %1098 = vmatpush.bf16.msra.mxu0 %v777
    %1099 = vmatpush.bf16.msra.mxu0 %v769
    %1100 = vmatpush.bf16.msra.mxu0 %v761
    %1101 = vmatpush.bf16.msra.mxu0 %v753
    %1102 = vmatpush.bf16.msra.mxu0 %v745
    %1103 = vmatpush.bf16.msra.mxu0 %v737
    %1104 = vmatpush.bf16.msra.mxu0 %v729
    %1105 = vmatmul.bf16.gmra.mxu0 %v272
    %v1106 = vpop.f32.mrf.mxu0
    %v1107 = vadd.f32 %v1093, %v1106
    %v1108 = vpop.f32.mrf.mxu0
    %v1109 = vadd.f32 %v1095, %v1108
    %1110 = vdwg.mxu0
    %1111 = vmatpush.bf16.msra.mxu0 %v722
    %1112 = vmatpush.bf16.msra.mxu0 %v714
    %1113 = vmatpush.bf16.msra.mxu0 %v706
    %1114 = vmatpush.bf16.msra.mxu0 %v698
    %1115 = vmatpush.bf16.msra.mxu0 %v690
    %1116 = vmatpush.bf16.msra.mxu0 %v682
    %1117 = vmatpush.bf16.msra.mxu0 %v674
    %1118 = vmatpush.bf16.msra.mxu0 %v666
    %1119 = vmatmul.bf16.gmra.mxu0 %v271
    %v1120 = vpop.f32.mrf.mxu0
    %v1121 = vadd.f32 %v256, %v1120
    %v1122 = vpop.f32.mrf.mxu0
    %v1123 = vadd.f32 %v256, %v1122
    %1124 = vdwg.mxu0
    %1125 = vmatpush.bf16.msra.mxu0 %v786
    %1126 = vmatpush.bf16.msra.mxu0 %v778
    %1127 = vmatpush.bf16.msra.mxu0 %v770
    %1128 = vmatpush.bf16.msra.mxu0 %v762
    %1129 = vmatpush.bf16.msra.mxu0 %v754
    %1130 = vmatpush.bf16.msra.mxu0 %v746
    %1131 = vmatpush.bf16.msra.mxu0 %v738
    %1132 = vmatpush.bf16.msra.mxu0 %v730
    %1133 = vmatmul.bf16.gmra.mxu0 %v272
    %v1134 = vpop.f32.mrf.mxu0
    %v1135 = vadd.f32 %v1121, %v1134
    %v1136 = vpop.f32.mrf.mxu0
    %v1137 = vadd.f32 %v1123, %v1136
    %1138 = vdwg.mxu0
    %v1139 = vmax.f32 %v939, 0.0
    %v1140 = vmax.f32 %v967, 0.0
    %v1141 = vmax.f32 %v995, 0.0
    %v1142 = vmax.f32 %v1023, 0.0
    %v1143 = vmax.f32 %v1051, 0.0
    %v1144 = vmax.f32 %v1079, 0.0
    %v1145 = vmax.f32 %v1107, 0.0
    %v1146 = vmax.f32 %v1135, 0.0
    %v1147 = vmax.f32 %v941, 0.0
    %v1148 = vmax.f32 %v969, 0.0
    %v1149 = vmax.f32 %v997, 0.0
    %v1150 = vmax.f32 %v1025, 0.0
    %v1151 = vmax.f32 %v1053, 0.0
    %v1152 = vmax.f32 %v1081, 0.0
    %v1153 = vmax.f32 %v1109, 0.0
    %v1154 = vmax.f32 %v1137, 0.0
    %v1155 = vpack.c.bf16 %v1147, %v1139
    %v1156 = vpack.c.bf16 %v1148, %v1140
    %v1157 = vpack.c.bf16 %v1149, %v1141
    %v1158 = vpack.c.bf16 %v1150, %v1142
    %v1159 = vpack.c.bf16 %v1151, %v1143
    %v1160 = vpack.c.bf16 %v1152, %v1144
    %v1161 = vpack.c.bf16 %v1153, %v1145
    %v1162 = vpack.c.bf16 %v1154, %v1146
    %v1163 = vld [vmem:[#allocation8] sm:$0xff]
    %v1164 = vld [vmem:[#allocation8 + $0x8] sm:$0xff]
    %v1165 = vld [vmem:[#allocation8 + $0x10] sm:$0xff]
    %v1166 = vld [vmem:[#allocation8 + $0x18] sm:$0xff]
    %v1167 = vld [vmem:[#allocation8 + $0x20] sm:$0xff]
    %v1168 = vld [vmem:[#allocation8 + $0x28] sm:$0xff]
    %v1169 = vld [vmem:[#allocation8 + $0x30] sm:$0xff]
    %v1170 = vld [vmem:[#allocation8 + $0x38] sm:$0xff]
    %v1171 = vld [vmem:[#allocation8 + $0x40] sm:$0xff]
    %v1172 = vld [vmem:[#allocation8 + $0x48] sm:$0xff]
    %v1173 = vld [vmem:[#allocation8 + $0x50] sm:$0xff]
    %v1174 = vld [vmem:[#allocation8 + $0x58] sm:$0xff]
    %v1175 = vld [vmem:[#allocation8 + $0x60] sm:$0xff]
    %v1176 = vld [vmem:[#allocation8 + $0x68] sm:$0xff]
    %v1177 = vld [vmem:[#allocation8 + $0x70] sm:$0xff]
    %v1178 = vld [vmem:[#allocation8 + $0x78] sm:$0xff]
    %v1179 = vld [vmem:[#allocation8 + $0x80] sm:$0xff]
    %v1180 = vld [vmem:[#allocation8 + $0x88] sm:$0xff]
    %v1181 = vld [vmem:[#allocation8 + $0x90] sm:$0xff]
    %v1182 = vld [vmem:[#allocation8 + $0x98] sm:$0xff]
    %v1183 = vld [vmem:[#allocation8 + $0xa0] sm:$0xff]
    %v1184 = vld [vmem:[#allocation8 + $0xa8] sm:$0xff]
    %v1185 = vld [vmem:[#allocation8 + $0xb0] sm:$0xff]
    %v1186 = vld [vmem:[#allocation8 + $0xb8] sm:$0xff]
    %v1187 = vld [vmem:[#allocation8 + $0xc0] sm:$0xff]
    %v1188 = vld [vmem:[#allocation8 + $0xc8] sm:$0xff]
    %v1189 = vld [vmem:[#allocation8 + $0xd0] sm:$0xff]
    %v1190 = vld [vmem:[#allocation8 + $0xd8] sm:$0xff]
    %v1191 = vld [vmem:[#allocation8 + $0xe0] sm:$0xff]
    %v1192 = vld [vmem:[#allocation8 + $0xe8] sm:$0xff]
    %v1193 = vld [vmem:[#allocation8 + $0xf0] sm:$0xff]
    %v1194 = vld [vmem:[#allocation8 + $0xf8] sm:$0xff]
    %v1195 = vld [vmem:[#allocation8 + $0x100] sm:$0xff]
    %v1196 = vld [vmem:[#allocation8 + $0x108] sm:$0xff]
    %v1197 = vld [vmem:[#allocation8 + $0x110] sm:$0xff]
    %v1198 = vld [vmem:[#allocation8 + $0x118] sm:$0xff]
    %v1199 = vld [vmem:[#allocation8 + $0x120] sm:$0xff]
    %v1200 = vld [vmem:[#allocation8 + $0x128] sm:$0xff]
    %v1201 = vld [vmem:[#allocation8 + $0x130] sm:$0xff]
    %v1202 = vld [vmem:[#allocation8 + $0x138] sm:$0xff]
    %v1203 = vld [vmem:[#allocation8 + $0x140] sm:$0xff]
    %v1204 = vld [vmem:[#allocation8 + $0x148] sm:$0xff]
    %v1205 = vld [vmem:[#allocation8 + $0x150] sm:$0xff]
    %v1206 = vld [vmem:[#allocation8 + $0x158] sm:$0xff]
    %v1207 = vld [vmem:[#allocation8 + $0x160] sm:$0xff]
    %v1208 = vld [vmem:[#allocation8 + $0x168] sm:$0xff]
    %v1209 = vld [vmem:[#allocation8 + $0x170] sm:$0xff]
    %v1210 = vld [vmem:[#allocation8 + $0x178] sm:$0xff]
    %v1211 = vld [vmem:[#allocation8 + $0x180] sm:$0xff]
    %v1212 = vld [vmem:[#allocation8 + $0x188] sm:$0xff]
    %v1213 = vld [vmem:[#allocation8 + $0x190] sm:$0xff]
    %v1214 = vld [vmem:[#allocation8 + $0x198] sm:$0xff]
    %v1215 = vld [vmem:[#allocation8 + $0x1a0] sm:$0xff]
    %v1216 = vld [vmem:[#allocation8 + $0x1a8] sm:$0xff]
    %v1217 = vld [vmem:[#allocation8 + $0x1b0] sm:$0xff]
    %v1218 = vld [vmem:[#allocation8 + $0x1b8] sm:$0xff]
    %v1219 = vld [vmem:[#allocation8 + $0x1c0] sm:$0xff]
    %v1220 = vld [vmem:[#allocation8 + $0x1c8] sm:$0xff]
    %v1221 = vld [vmem:[#allocation8 + $0x1d0] sm:$0xff]
    %v1222 = vld [vmem:[#allocation8 + $0x1d8] sm:$0xff]
    %v1223 = vld [vmem:[#allocation8 + $0x1e0] sm:$0xff]
    %v1224 = vld [vmem:[#allocation8 + $0x1e8] sm:$0xff]
    %v1225 = vld [vmem:[#allocation8 + $0x1f0] sm:$0xff]
    %v1226 = vld [vmem:[#allocation8 + $0x1f8] sm:$0xff]
    %v1227 = vld [vmem:[#allocation8 + $0x200] sm:$0xff]
    %v1228 = vld [vmem:[#allocation8 + $0x208] sm:$0xff]
    %v1229 = vld [vmem:[#allocation8 + $0x210] sm:$0xff]
    %v1230 = vld [vmem:[#allocation8 + $0x218] sm:$0xff]
    %v1231 = vld [vmem:[#allocation8 + $0x220] sm:$0xff]
    %v1232 = vld [vmem:[#allocation8 + $0x228] sm:$0xff]
    %v1233 = vld [vmem:[#allocation8 + $0x230] sm:$0xff]
    %v1234 = vld [vmem:[#allocation8 + $0x238] sm:$0xff]
    %v1235 = vld [vmem:[#allocation8 + $0x240] sm:$0xff]
    %v1236 = vld [vmem:[#allocation8 + $0x248] sm:$0xff]
    %v1237 = vld [vmem:[#allocation8 + $0x250] sm:$0xff]
    %v1238 = vld [vmem:[#allocation8 + $0x258] sm:$0xff]
    %v1239 = vld [vmem:[#allocation8 + $0x260] sm:$0xff]
    %v1240 = vld [vmem:[#allocation8 + $0x268] sm:$0xff]
    %v1241 = vld [vmem:[#allocation8 + $0x270] sm:$0xff]
    %v1242 = vld [vmem:[#allocation8 + $0x278] sm:$0xff]
    %v1243 = vld [vmem:[#allocation8 + $0x280] sm:$0xff]
    %v1244 = vld [vmem:[#allocation8 + $0x288] sm:$0xff]
    %v1245 = vld [vmem:[#allocation8 + $0x290] sm:$0xff]
    %v1246 = vld [vmem:[#allocation8 + $0x298] sm:$0xff]
    %v1247 = vld [vmem:[#allocation8 + $0x2a0] sm:$0xff]
    %v1248 = vld [vmem:[#allocation8 + $0x2a8] sm:$0xff]
    %v1249 = vld [vmem:[#allocation8 + $0x2b0] sm:$0xff]
    %v1250 = vld [vmem:[#allocation8 + $0x2b8] sm:$0xff]
    %v1251 = vld [vmem:[#allocation8 + $0x2c0] sm:$0xff]
    %v1252 = vld [vmem:[#allocation8 + $0x2c8] sm:$0xff]
    %v1253 = vld [vmem:[#allocation8 + $0x2d0] sm:$0xff]
    %v1254 = vld [vmem:[#allocation8 + $0x2d8] sm:$0xff]
    %v1255 = vld [vmem:[#allocation8 + $0x2e0] sm:$0xff]
    %v1256 = vld [vmem:[#allocation8 + $0x2e8] sm:$0xff]
    %v1257 = vld [vmem:[#allocation8 + $0x2f0] sm:$0xff]
    %v1258 = vld [vmem:[#allocation8 + $0x2f8] sm:$0xff]
    %v1259 = vld [vmem:[#allocation8 + $0x300] sm:$0xff]
    %v1260 = vld [vmem:[#allocation8 + $0x308] sm:$0xff]
    %v1261 = vld [vmem:[#allocation8 + $0x310] sm:$0xff]
    %v1262 = vld [vmem:[#allocation8 + $0x318] sm:$0xff]
    %v1263 = vld [vmem:[#allocation8 + $0x320] sm:$0xff]
    %v1264 = vld [vmem:[#allocation8 + $0x328] sm:$0xff]
    %v1265 = vld [vmem:[#allocation8 + $0x330] sm:$0xff]
    %v1266 = vld [vmem:[#allocation8 + $0x338] sm:$0xff]
    %v1267 = vld [vmem:[#allocation8 + $0x340] sm:$0xff]
    %v1268 = vld [vmem:[#allocation8 + $0x348] sm:$0xff]
    %v1269 = vld [vmem:[#allocation8 + $0x350] sm:$0xff]
    %v1270 = vld [vmem:[#allocation8 + $0x358] sm:$0xff]
    %v1271 = vld [vmem:[#allocation8 + $0x360] sm:$0xff]
    %v1272 = vld [vmem:[#allocation8 + $0x368] sm:$0xff]
    %v1273 = vld [vmem:[#allocation8 + $0x370] sm:$0xff]
    %v1274 = vld [vmem:[#allocation8 + $0x378] sm:$0xff]
    %v1275 = vld [vmem:[#allocation8 + $0x380] sm:$0xff]
    %v1276 = vld [vmem:[#allocation8 + $0x388] sm:$0xff]
    %v1277 = vld [vmem:[#allocation8 + $0x390] sm:$0xff]
    %v1278 = vld [vmem:[#allocation8 + $0x398] sm:$0xff]
    %v1279 = vld [vmem:[#allocation8 + $0x3a0] sm:$0xff]
    %v1280 = vld [vmem:[#allocation8 + $0x3a8] sm:$0xff]
    %v1281 = vld [vmem:[#allocation8 + $0x3b0] sm:$0xff]
    %v1282 = vld [vmem:[#allocation8 + $0x3b8] sm:$0xff]
    %v1283 = vld [vmem:[#allocation8 + $0x3c0] sm:$0xff]
    %v1284 = vld [vmem:[#allocation8 + $0x3c8] sm:$0xff]
    %v1285 = vld [vmem:[#allocation8 + $0x3d0] sm:$0xff]
    %v1286 = vld [vmem:[#allocation8 + $0x3d8] sm:$0xff]
    %v1287 = vld [vmem:[#allocation8 + $0x3e0] sm:$0xff]
    %v1288 = vld [vmem:[#allocation8 + $0x3e8] sm:$0xff]
    %v1289 = vld [vmem:[#allocation8 + $0x3f0] sm:$0xff]
    %v1290 = vld [vmem:[#allocation8 + $0x3f8] sm:$0xff]
    %v1291 = vld [vmem:[#allocation8 + $0x400] sm:$0xff]
    %v1292 = vld [vmem:[#allocation8 + $0x408] sm:$0xff]
    %v1293 = vld [vmem:[#allocation8 + $0x410] sm:$0xff]
    %v1294 = vld [vmem:[#allocation8 + $0x418] sm:$0xff]
    %v1295 = vld [vmem:[#allocation8 + $0x420] sm:$0xff]
    %v1296 = vld [vmem:[#allocation8 + $0x428] sm:$0xff]
    %v1297 = vld [vmem:[#allocation8 + $0x430] sm:$0xff]
    %v1298 = vld [vmem:[#allocation8 + $0x438] sm:$0xff]
    %v1299 = vld [vmem:[#allocation8 + $0x440] sm:$0xff]
    %v1300 = vld [vmem:[#allocation8 + $0x448] sm:$0xff]
    %v1301 = vld [vmem:[#allocation8 + $0x450] sm:$0xff]
    %v1302 = vld [vmem:[#allocation8 + $0x458] sm:$0xff]
    %v1303 = vld [vmem:[#allocation8 + $0x460] sm:$0xff]
    %v1304 = vld [vmem:[#allocation8 + $0x468] sm:$0xff]
    %v1305 = vld [vmem:[#allocation8 + $0x470] sm:$0xff]
    %v1306 = vld [vmem:[#allocation8 + $0x478] sm:$0xff]
    %v1307 = vld [vmem:[#allocation8 + $0x480] sm:$0xff]
    %v1308 = vld [vmem:[#allocation8 + $0x488] sm:$0xff]
    %v1309 = vld [vmem:[#allocation8 + $0x490] sm:$0xff]
    %v1310 = vld [vmem:[#allocation8 + $0x498] sm:$0xff]
    %v1311 = vld [vmem:[#allocation8 + $0x4a0] sm:$0xff]
    %v1312 = vld [vmem:[#allocation8 + $0x4a8] sm:$0xff]
    %v1313 = vld [vmem:[#allocation8 + $0x4b0] sm:$0xff]
    %v1314 = vld [vmem:[#allocation8 + $0x4b8] sm:$0xff]
    %v1315 = vld [vmem:[#allocation8 + $0x4c0] sm:$0xff]
    %v1316 = vld [vmem:[#allocation8 + $0x4c8] sm:$0xff]
    %v1317 = vld [vmem:[#allocation8 + $0x4d0] sm:$0xff]
    %v1318 = vld [vmem:[#allocation8 + $0x4d8] sm:$0xff]
    %v1319 = vld [vmem:[#allocation8 + $0x4e0] sm:$0xff]
    %v1320 = vld [vmem:[#allocation8 + $0x4e8] sm:$0xff]
    %v1321 = vld [vmem:[#allocation8 + $0x4f0] sm:$0xff]
    %v1322 = vld [vmem:[#allocation8 + $0x4f8] sm:$0xff]
    %v1323 = vld [vmem:[#allocation8 + $0x500] sm:$0xff]
    %v1324 = vld [vmem:[#allocation8 + $0x508] sm:$0xff]
    %v1325 = vld [vmem:[#allocation8 + $0x510] sm:$0xff]
    %v1326 = vld [vmem:[#allocation8 + $0x518] sm:$0xff]
    %v1327 = vld [vmem:[#allocation8 + $0x520] sm:$0xff]
    %v1328 = vld [vmem:[#allocation8 + $0x528] sm:$0xff]
    %v1329 = vld [vmem:[#allocation8 + $0x530] sm:$0xff]
    %v1330 = vld [vmem:[#allocation8 + $0x538] sm:$0xff]
    %v1331 = vld [vmem:[#allocation8 + $0x540] sm:$0xff]
    %v1332 = vld [vmem:[#allocation8 + $0x548] sm:$0xff]
    %v1333 = vld [vmem:[#allocation8 + $0x550] sm:$0xff]
    %v1334 = vld [vmem:[#allocation8 + $0x558] sm:$0xff]
    %v1335 = vld [vmem:[#allocation8 + $0x560] sm:$0xff]
    %v1336 = vld [vmem:[#allocation8 + $0x568] sm:$0xff]
    %v1337 = vld [vmem:[#allocation8 + $0x570] sm:$0xff]
    %v1338 = vld [vmem:[#allocation8 + $0x578] sm:$0xff]
    %v1339 = vld [vmem:[#allocation8 + $0x580] sm:$0xff]
    %v1340 = vld [vmem:[#allocation8 + $0x588] sm:$0xff]
    %v1341 = vld [vmem:[#allocation8 + $0x590] sm:$0xff]
    %v1342 = vld [vmem:[#allocation8 + $0x598] sm:$0xff]
    %v1343 = vld [vmem:[#allocation8 + $0x5a0] sm:$0xff]
    %v1344 = vld [vmem:[#allocation8 + $0x5a8] sm:$0xff]
    %v1345 = vld [vmem:[#allocation8 + $0x5b0] sm:$0xff]
    %v1346 = vld [vmem:[#allocation8 + $0x5b8] sm:$0xff]
    %v1347 = vld [vmem:[#allocation8 + $0x5c0] sm:$0xff]
    %v1348 = vld [vmem:[#allocation8 + $0x5c8] sm:$0xff]
    %v1349 = vld [vmem:[#allocation8 + $0x5d0] sm:$0xff]
    %v1350 = vld [vmem:[#allocation8 + $0x5d8] sm:$0xff]
    %v1351 = vld [vmem:[#allocation8 + $0x5e0] sm:$0xff]
    %v1352 = vld [vmem:[#allocation8 + $0x5e8] sm:$0xff]
    %v1353 = vld [vmem:[#allocation8 + $0x5f0] sm:$0xff]
    %v1354 = vld [vmem:[#allocation8 + $0x5f8] sm:$0xff]
    %v1355 = vld [vmem:[#allocation8 + $0x600] sm:$0xff]
    %v1356 = vld [vmem:[#allocation8 + $0x608] sm:$0xff]
    %v1357 = vld [vmem:[#allocation8 + $0x610] sm:$0xff]
    %v1358 = vld [vmem:[#allocation8 + $0x618] sm:$0xff]
    %v1359 = vld [vmem:[#allocation8 + $0x620] sm:$0xff]
    %v1360 = vld [vmem:[#allocation8 + $0x628] sm:$0xff]
    %v1361 = vld [vmem:[#allocation8 + $0x630] sm:$0xff]
    %v1362 = vld [vmem:[#allocation8 + $0x638] sm:$0xff]
    %v1363 = vld [vmem:[#allocation8 + $0x640] sm:$0xff]
    %v1364 = vld [vmem:[#allocation8 + $0x648] sm:$0xff]
    %v1365 = vld [vmem:[#allocation8 + $0x650] sm:$0xff]
    %v1366 = vld [vmem:[#allocation8 + $0x658] sm:$0xff]
    %v1367 = vld [vmem:[#allocation8 + $0x660] sm:$0xff]
    %v1368 = vld [vmem:[#allocation8 + $0x668] sm:$0xff]
    %v1369 = vld [vmem:[#allocation8 + $0x670] sm:$0xff]
    %v1370 = vld [vmem:[#allocation8 + $0x678] sm:$0xff]
    %v1371 = vld [vmem:[#allocation8 + $0x680] sm:$0xff]
    %v1372 = vld [vmem:[#allocation8 + $0x688] sm:$0xff]
    %v1373 = vld [vmem:[#allocation8 + $0x690] sm:$0xff]
    %v1374 = vld [vmem:[#allocation8 + $0x698] sm:$0xff]
    %v1375 = vld [vmem:[#allocation8 + $0x6a0] sm:$0xff]
    %v1376 = vld [vmem:[#allocation8 + $0x6a8] sm:$0xff]
    %v1377 = vld [vmem:[#allocation8 + $0x6b0] sm:$0xff]
    %v1378 = vld [vmem:[#allocation8 + $0x6b8] sm:$0xff]
    %v1379 = vld [vmem:[#allocation8 + $0x6c0] sm:$0xff]
    %v1380 = vld [vmem:[#allocation8 + $0x6c8] sm:$0xff]
    %v1381 = vld [vmem:[#allocation8 + $0x6d0] sm:$0xff]
    %v1382 = vld [vmem:[#allocation8 + $0x6d8] sm:$0xff]
    %v1383 = vld [vmem:[#allocation8 + $0x6e0] sm:$0xff]
    %v1384 = vld [vmem:[#allocation8 + $0x6e8] sm:$0xff]
    %v1385 = vld [vmem:[#allocation8 + $0x6f0] sm:$0xff]
    %v1386 = vld [vmem:[#allocation8 + $0x6f8] sm:$0xff]
    %v1387 = vld [vmem:[#allocation8 + $0x700] sm:$0xff]
    %v1388 = vld [vmem:[#allocation8 + $0x708] sm:$0xff]
    %v1389 = vld [vmem:[#allocation8 + $0x710] sm:$0xff]
    %v1390 = vld [vmem:[#allocation8 + $0x718] sm:$0xff]
    %v1391 = vld [vmem:[#allocation8 + $0x720] sm:$0xff]
    %v1392 = vld [vmem:[#allocation8 + $0x728] sm:$0xff]
    %v1393 = vld [vmem:[#allocation8 + $0x730] sm:$0xff]
    %v1394 = vld [vmem:[#allocation8 + $0x738] sm:$0xff]
    %v1395 = vld [vmem:[#allocation8 + $0x740] sm:$0xff]
    %v1396 = vld [vmem:[#allocation8 + $0x748] sm:$0xff]
    %v1397 = vld [vmem:[#allocation8 + $0x750] sm:$0xff]
    %v1398 = vld [vmem:[#allocation8 + $0x758] sm:$0xff]
    %v1399 = vld [vmem:[#allocation8 + $0x760] sm:$0xff]
    %v1400 = vld [vmem:[#allocation8 + $0x768] sm:$0xff]
    %v1401 = vld [vmem:[#allocation8 + $0x770] sm:$0xff]
    %v1402 = vld [vmem:[#allocation8 + $0x778] sm:$0xff]
    %v1403 = vld [vmem:[#allocation8 + $0x780] sm:$0xff]
    %v1404 = vld [vmem:[#allocation8 + $0x788] sm:$0xff]
    %v1405 = vld [vmem:[#allocation8 + $0x790] sm:$0xff]
    %v1406 = vld [vmem:[#allocation8 + $0x798] sm:$0xff]
    %v1407 = vld [vmem:[#allocation8 + $0x7a0] sm:$0xff]
    %v1408 = vld [vmem:[#allocation8 + $0x7a8] sm:$0xff]
    %v1409 = vld [vmem:[#allocation8 + $0x7b0] sm:$0xff]
    %v1410 = vld [vmem:[#allocation8 + $0x7b8] sm:$0xff]
    %v1411 = vld [vmem:[#allocation8 + $0x7c0] sm:$0xff]
    %v1412 = vld [vmem:[#allocation8 + $0x7c8] sm:$0xff]
    %v1413 = vld [vmem:[#allocation8 + $0x7d0] sm:$0xff]
    %v1414 = vld [vmem:[#allocation8 + $0x7d8] sm:$0xff]
    %v1415 = vld [vmem:[#allocation8 + $0x7e0] sm:$0xff]
    %v1416 = vld [vmem:[#allocation8 + $0x7e8] sm:$0xff]
    %v1417 = vld [vmem:[#allocation8 + $0x7f0] sm:$0xff]
    %v1418 = vld [vmem:[#allocation8 + $0x7f8] sm:$0xff]
    %v1419 = vld [vmem:[#allocation10] sm:$0xf]
    %v1421 = vperm.slane %v1419, 0
    %v1422 = vperm.slane %v1419, 1
    %v1423 = vperm.slane %v1419, 2
    %v1424 = vperm.slane %v1419, 3
    %v1685 = vunpack.c.l.b16 %v1163
    %v1686 = vunpack.c.h.b16 %v1163
    %v1687 = vunpack.c.l.b16 %v1164
    %v1688 = vunpack.c.h.b16 %v1164
    %v1689 = vunpack.c.l.b16 %v1165
    %v1690 = vunpack.c.h.b16 %v1165
    %v1691 = vunpack.c.l.b16 %v1166
    %v1692 = vunpack.c.h.b16 %v1166
    %v1693 = vunpack.c.l.b16 %v1167
    %v1694 = vunpack.c.h.b16 %v1167
    %v1695 = vunpack.c.l.b16 %v1168
    %v1696 = vunpack.c.h.b16 %v1168
    %v1697 = vunpack.c.l.b16 %v1169
    %v1698 = vunpack.c.h.b16 %v1169
    %v1699 = vunpack.c.l.b16 %v1170
    %v1700 = vunpack.c.h.b16 %v1170
    %v1701 = vunpack.c.l.b16 %v1171
    %v1702 = vunpack.c.h.b16 %v1171
    %v1703 = vunpack.c.l.b16 %v1172
    %v1704 = vunpack.c.h.b16 %v1172
    %v1705 = vunpack.c.l.b16 %v1173
    %v1706 = vunpack.c.h.b16 %v1173
    %v1707 = vunpack.c.l.b16 %v1174
    %v1708 = vunpack.c.h.b16 %v1174
    %v1709 = vunpack.c.l.b16 %v1175
    %v1710 = vunpack.c.h.b16 %v1175
    %v1711 = vunpack.c.l.b16 %v1176
    %v1712 = vunpack.c.h.b16 %v1176
    %v1713 = vunpack.c.l.b16 %v1177
    %v1714 = vunpack.c.h.b16 %v1177
    %v1715 = vunpack.c.l.b16 %v1178
    %v1716 = vunpack.c.h.b16 %v1178
    %v1717 = vunpack.c.l.b16 %v1179
    %v1718 = vunpack.c.h.b16 %v1179
    %v1719 = vunpack.c.l.b16 %v1180
    %v1720 = vunpack.c.h.b16 %v1180
    %v1721 = vunpack.c.l.b16 %v1181
    %v1722 = vunpack.c.h.b16 %v1181
    %v1723 = vunpack.c.l.b16 %v1182
    %v1724 = vunpack.c.h.b16 %v1182
    %v1725 = vunpack.c.l.b16 %v1183
    %v1726 = vunpack.c.h.b16 %v1183
    %v1727 = vunpack.c.l.b16 %v1184
    %v1728 = vunpack.c.h.b16 %v1184
    %v1729 = vunpack.c.l.b16 %v1185
    %v1730 = vunpack.c.h.b16 %v1185
    %v1731 = vunpack.c.l.b16 %v1186
    %v1732 = vunpack.c.h.b16 %v1186
    %v1733 = vunpack.c.l.b16 %v1187
    %v1734 = vunpack.c.h.b16 %v1187
    %v1735 = vunpack.c.l.b16 %v1188
    %v1736 = vunpack.c.h.b16 %v1188
    %v1737 = vunpack.c.l.b16 %v1189
    %v1738 = vunpack.c.h.b16 %v1189
    %v1739 = vunpack.c.l.b16 %v1190
    %v1740 = vunpack.c.h.b16 %v1190
    %v1741 = vunpack.c.l.b16 %v1191
    %v1742 = vunpack.c.h.b16 %v1191
    %v1743 = vunpack.c.l.b16 %v1192
    %v1744 = vunpack.c.h.b16 %v1192
    %v1745 = vunpack.c.l.b16 %v1193
    %v1746 = vunpack.c.h.b16 %v1193
    %v1747 = vunpack.c.l.b16 %v1194
    %v1748 = vunpack.c.h.b16 %v1194
    %v1749 = vunpack.c.l.b16 %v1195
    %v1750 = vunpack.c.h.b16 %v1195
    %v1751 = vunpack.c.l.b16 %v1196
    %v1752 = vunpack.c.h.b16 %v1196
    %v1753 = vunpack.c.l.b16 %v1197
    %v1754 = vunpack.c.h.b16 %v1197
    %v1755 = vunpack.c.l.b16 %v1198
    %v1756 = vunpack.c.h.b16 %v1198
    %v1757 = vunpack.c.l.b16 %v1199
    %v1758 = vunpack.c.h.b16 %v1199
    %v1759 = vunpack.c.l.b16 %v1200
    %v1760 = vunpack.c.h.b16 %v1200
    %v1761 = vunpack.c.l.b16 %v1201
    %v1762 = vunpack.c.h.b16 %v1201
    %v1763 = vunpack.c.l.b16 %v1202
    %v1764 = vunpack.c.h.b16 %v1202
    %v1765 = vunpack.c.l.b16 %v1203
    %v1766 = vunpack.c.h.b16 %v1203
    %v1767 = vunpack.c.l.b16 %v1204
    %v1768 = vunpack.c.h.b16 %v1204
    %v1769 = vunpack.c.l.b16 %v1205
    %v1770 = vunpack.c.h.b16 %v1205
    %v1771 = vunpack.c.l.b16 %v1206
    %v1772 = vunpack.c.h.b16 %v1206
    %v1773 = vunpack.c.l.b16 %v1207
    %v1774 = vunpack.c.h.b16 %v1207
    %v1775 = vunpack.c.l.b16 %v1208
    %v1776 = vunpack.c.h.b16 %v1208
    %v1777 = vunpack.c.l.b16 %v1209
    %v1778 = vunpack.c.h.b16 %v1209
    %v1779 = vunpack.c.l.b16 %v1210
    %v1780 = vunpack.c.h.b16 %v1210
    %v1781 = vunpack.c.l.b16 %v1211
    %v1782 = vunpack.c.h.b16 %v1211
    %v1783 = vunpack.c.l.b16 %v1212
    %v1784 = vunpack.c.h.b16 %v1212
    %v1785 = vunpack.c.l.b16 %v1213
    %v1786 = vunpack.c.h.b16 %v1213
    %v1787 = vunpack.c.l.b16 %v1214
    %v1788 = vunpack.c.h.b16 %v1214
    %v1789 = vunpack.c.l.b16 %v1215
    %v1790 = vunpack.c.h.b16 %v1215
    %v1791 = vunpack.c.l.b16 %v1216
    %v1792 = vunpack.c.h.b16 %v1216
    %v1793 = vunpack.c.l.b16 %v1217
    %v1794 = vunpack.c.h.b16 %v1217
    %v1795 = vunpack.c.l.b16 %v1218
    %v1796 = vunpack.c.h.b16 %v1218
    %v1797 = vunpack.c.l.b16 %v1219
    %v1798 = vunpack.c.h.b16 %v1219
    %v1799 = vunpack.c.l.b16 %v1220
    %v1800 = vunpack.c.h.b16 %v1220
    %v1801 = vunpack.c.l.b16 %v1221
    %v1802 = vunpack.c.h.b16 %v1221
    %v1803 = vunpack.c.l.b16 %v1222
    %v1804 = vunpack.c.h.b16 %v1222
    %v1805 = vunpack.c.l.b16 %v1223
    %v1806 = vunpack.c.h.b16 %v1223
    %v1807 = vunpack.c.l.b16 %v1224
    %v1808 = vunpack.c.h.b16 %v1224
    %v1809 = vunpack.c.l.b16 %v1225
    %v1810 = vunpack.c.h.b16 %v1225
    %v1811 = vunpack.c.l.b16 %v1226
    %v1812 = vunpack.c.h.b16 %v1226
    %v1813 = vunpack.c.l.b16 %v1227
    %v1814 = vunpack.c.h.b16 %v1227
    %v1815 = vunpack.c.l.b16 %v1228
    %v1816 = vunpack.c.h.b16 %v1228
    %v1817 = vunpack.c.l.b16 %v1229
    %v1818 = vunpack.c.h.b16 %v1229
    %v1819 = vunpack.c.l.b16 %v1230
    %v1820 = vunpack.c.h.b16 %v1230
    %v1821 = vunpack.c.l.b16 %v1231
    %v1822 = vunpack.c.h.b16 %v1231
    %v1823 = vunpack.c.l.b16 %v1232
    %v1824 = vunpack.c.h.b16 %v1232
    %v1825 = vunpack.c.l.b16 %v1233
    %v1826 = vunpack.c.h.b16 %v1233
    %v1827 = vunpack.c.l.b16 %v1234
    %v1828 = vunpack.c.h.b16 %v1234
    %v1829 = vunpack.c.l.b16 %v1235
    %v1830 = vunpack.c.h.b16 %v1235
    %v1831 = vunpack.c.l.b16 %v1236
    %v1832 = vunpack.c.h.b16 %v1236
    %v1833 = vunpack.c.l.b16 %v1237
    %v1834 = vunpack.c.h.b16 %v1237
    %v1835 = vunpack.c.l.b16 %v1238
    %v1836 = vunpack.c.h.b16 %v1238
    %v1837 = vunpack.c.l.b16 %v1239
    %v1838 = vunpack.c.h.b16 %v1239
    %v1839 = vunpack.c.l.b16 %v1240
    %v1840 = vunpack.c.h.b16 %v1240
    %v1841 = vunpack.c.l.b16 %v1241
    %v1842 = vunpack.c.h.b16 %v1241
    %v1843 = vunpack.c.l.b16 %v1242
    %v1844 = vunpack.c.h.b16 %v1242
    %v1845 = vunpack.c.l.b16 %v1243
    %v1846 = vunpack.c.h.b16 %v1243
    %v1847 = vunpack.c.l.b16 %v1244
    %v1848 = vunpack.c.h.b16 %v1244
    %v1849 = vunpack.c.l.b16 %v1245
    %v1850 = vunpack.c.h.b16 %v1245
    %v1851 = vunpack.c.l.b16 %v1246
    %v1852 = vunpack.c.h.b16 %v1246
    %v1853 = vunpack.c.l.b16 %v1247
    %v1854 = vunpack.c.h.b16 %v1247
    %v1855 = vunpack.c.l.b16 %v1248
    %v1856 = vunpack.c.h.b16 %v1248
    %v1857 = vunpack.c.l.b16 %v1249
    %v1858 = vunpack.c.h.b16 %v1249
    %v1859 = vunpack.c.l.b16 %v1250
    %v1860 = vunpack.c.h.b16 %v1250
    %v1861 = vunpack.c.l.b16 %v1251
    %v1862 = vunpack.c.h.b16 %v1251
    %v1863 = vunpack.c.l.b16 %v1252
    %v1864 = vunpack.c.h.b16 %v1252
    %v1865 = vunpack.c.l.b16 %v1253
    %v1866 = vunpack.c.h.b16 %v1253
    %v1867 = vunpack.c.l.b16 %v1254
    %v1868 = vunpack.c.h.b16 %v1254
    %v1869 = vunpack.c.l.b16 %v1255
    %v1870 = vunpack.c.h.b16 %v1255
    %v1871 = vunpack.c.l.b16 %v1256
    %v1872 = vunpack.c.h.b16 %v1256
    %v1873 = vunpack.c.l.b16 %v1257
    %v1874 = vunpack.c.h.b16 %v1257
    %v1875 = vunpack.c.l.b16 %v1258
    %v1876 = vunpack.c.h.b16 %v1258
    %v1877 = vunpack.c.l.b16 %v1259
    %v1878 = vunpack.c.h.b16 %v1259
    %v1879 = vunpack.c.l.b16 %v1260
    %v1880 = vunpack.c.h.b16 %v1260
    %v1881 = vunpack.c.l.b16 %v1261
    %v1882 = vunpack.c.h.b16 %v1261
    %v1883 = vunpack.c.l.b16 %v1262
    %v1884 = vunpack.c.h.b16 %v1262
    %v1885 = vunpack.c.l.b16 %v1263
    %v1886 = vunpack.c.h.b16 %v1263
    %v1887 = vunpack.c.l.b16 %v1264
    %v1888 = vunpack.c.h.b16 %v1264
    %v1889 = vunpack.c.l.b16 %v1265
    %v1890 = vunpack.c.h.b16 %v1265
    %v1891 = vunpack.c.l.b16 %v1266
    %v1892 = vunpack.c.h.b16 %v1266
    %v1893 = vunpack.c.l.b16 %v1267
    %v1894 = vunpack.c.h.b16 %v1267
    %v1895 = vunpack.c.l.b16 %v1268
    %v1896 = vunpack.c.h.b16 %v1268
    %v1897 = vunpack.c.l.b16 %v1269
    %v1898 = vunpack.c.h.b16 %v1269
    %v1899 = vunpack.c.l.b16 %v1270
    %v1900 = vunpack.c.h.b16 %v1270
    %v1901 = vunpack.c.l.b16 %v1271
    %v1902 = vunpack.c.h.b16 %v1271
    %v1903 = vunpack.c.l.b16 %v1272
    %v1904 = vunpack.c.h.b16 %v1272
    %v1905 = vunpack.c.l.b16 %v1273
    %v1906 = vunpack.c.h.b16 %v1273
    %v1907 = vunpack.c.l.b16 %v1274
    %v1908 = vunpack.c.h.b16 %v1274
    %v1909 = vunpack.c.l.b16 %v1275
    %v1910 = vunpack.c.h.b16 %v1275
    %v1911 = vunpack.c.l.b16 %v1276
    %v1912 = vunpack.c.h.b16 %v1276
    %v1913 = vunpack.c.l.b16 %v1277
    %v1914 = vunpack.c.h.b16 %v1277
    %v1915 = vunpack.c.l.b16 %v1278
    %v1916 = vunpack.c.h.b16 %v1278
    %v1917 = vunpack.c.l.b16 %v1279
    %v1918 = vunpack.c.h.b16 %v1279
    %v1919 = vunpack.c.l.b16 %v1280
    %v1920 = vunpack.c.h.b16 %v1280
    %v1921 = vunpack.c.l.b16 %v1281
    %v1922 = vunpack.c.h.b16 %v1281
    %v1923 = vunpack.c.l.b16 %v1282
    %v1924 = vunpack.c.h.b16 %v1282
    %v1925 = vunpack.c.l.b16 %v1283
    %v1926 = vunpack.c.h.b16 %v1283
    %v1927 = vunpack.c.l.b16 %v1284
    %v1928 = vunpack.c.h.b16 %v1284
    %v1929 = vunpack.c.l.b16 %v1285
    %v1930 = vunpack.c.h.b16 %v1285
    %v1931 = vunpack.c.l.b16 %v1286
    %v1932 = vunpack.c.h.b16 %v1286
    %v1933 = vunpack.c.l.b16 %v1287
    %v1934 = vunpack.c.h.b16 %v1287
    %v1935 = vunpack.c.l.b16 %v1288
    %v1936 = vunpack.c.h.b16 %v1288
    %v1937 = vunpack.c.l.b16 %v1289
    %v1938 = vunpack.c.h.b16 %v1289
    %v1939 = vunpack.c.l.b16 %v1290
    %v1940 = vunpack.c.h.b16 %v1290
    %v1941 = vunpack.c.l.b16 %v1291
    %v1942 = vunpack.c.h.b16 %v1291
    %v1943 = vunpack.c.l.b16 %v1292
    %v1944 = vunpack.c.h.b16 %v1292
    %v1945 = vunpack.c.l.b16 %v1293
    %v1946 = vunpack.c.h.b16 %v1293
    %v1947 = vunpack.c.l.b16 %v1294
    %v1948 = vunpack.c.h.b16 %v1294
    %v1949 = vunpack.c.l.b16 %v1295
    %v1950 = vunpack.c.h.b16 %v1295
    %v1951 = vunpack.c.l.b16 %v1296
    %v1952 = vunpack.c.h.b16 %v1296
    %v1953 = vunpack.c.l.b16 %v1297
    %v1954 = vunpack.c.h.b16 %v1297
    %v1955 = vunpack.c.l.b16 %v1298
    %v1956 = vunpack.c.h.b16 %v1298
    %v1957 = vunpack.c.l.b16 %v1299
    %v1958 = vunpack.c.h.b16 %v1299
    %v1959 = vunpack.c.l.b16 %v1300
    %v1960 = vunpack.c.h.b16 %v1300
    %v1961 = vunpack.c.l.b16 %v1301
    %v1962 = vunpack.c.h.b16 %v1301
    %v1963 = vunpack.c.l.b16 %v1302
    %v1964 = vunpack.c.h.b16 %v1302
    %v1965 = vunpack.c.l.b16 %v1303
    %v1966 = vunpack.c.h.b16 %v1303
    %v1967 = vunpack.c.l.b16 %v1304
    %v1968 = vunpack.c.h.b16 %v1304
    %v1969 = vunpack.c.l.b16 %v1305
    %v1970 = vunpack.c.h.b16 %v1305
    %v1971 = vunpack.c.l.b16 %v1306
    %v1972 = vunpack.c.h.b16 %v1306
    %v1973 = vunpack.c.l.b16 %v1307
    %v1974 = vunpack.c.h.b16 %v1307
    %v1975 = vunpack.c.l.b16 %v1308
    %v1976 = vunpack.c.h.b16 %v1308
    %v1977 = vunpack.c.l.b16 %v1309
    %v1978 = vunpack.c.h.b16 %v1309
    %v1979 = vunpack.c.l.b16 %v1310
    %v1980 = vunpack.c.h.b16 %v1310
    %v1981 = vunpack.c.l.b16 %v1311
    %v1982 = vunpack.c.h.b16 %v1311
    %v1983 = vunpack.c.l.b16 %v1312
    %v1984 = vunpack.c.h.b16 %v1312
    %v1985 = vunpack.c.l.b16 %v1313
    %v1986 = vunpack.c.h.b16 %v1313
    %v1987 = vunpack.c.l.b16 %v1314
    %v1988 = vunpack.c.h.b16 %v1314
    %v1989 = vunpack.c.l.b16 %v1315
    %v1990 = vunpack.c.h.b16 %v1315
    %v1991 = vunpack.c.l.b16 %v1316
    %v1992 = vunpack.c.h.b16 %v1316
    %v1993 = vunpack.c.l.b16 %v1317
    %v1994 = vunpack.c.h.b16 %v1317
    %v1995 = vunpack.c.l.b16 %v1318
    %v1996 = vunpack.c.h.b16 %v1318
    %v1997 = vunpack.c.l.b16 %v1319
    %v1998 = vunpack.c.h.b16 %v1319
    %v1999 = vunpack.c.l.b16 %v1320
    %v2000 = vunpack.c.h.b16 %v1320
    %v2001 = vunpack.c.l.b16 %v1321
    %v2002 = vunpack.c.h.b16 %v1321
    %v2003 = vunpack.c.l.b16 %v1322
    %v2004 = vunpack.c.h.b16 %v1322
    %v2005 = vunpack.c.l.b16 %v1323
    %v2006 = vunpack.c.h.b16 %v1323
    %v2007 = vunpack.c.l.b16 %v1324
    %v2008 = vunpack.c.h.b16 %v1324
    %v2009 = vunpack.c.l.b16 %v1325
    %v2010 = vunpack.c.h.b16 %v1325
    %v2011 = vunpack.c.l.b16 %v1326
    %v2012 = vunpack.c.h.b16 %v1326
    %v2013 = vunpack.c.l.b16 %v1327
    %v2014 = vunpack.c.h.b16 %v1327
    %v2015 = vunpack.c.l.b16 %v1328
    %v2016 = vunpack.c.h.b16 %v1328
    %v2017 = vunpack.c.l.b16 %v1329
    %v2018 = vunpack.c.h.b16 %v1329
    %v2019 = vunpack.c.l.b16 %v1330
    %v2020 = vunpack.c.h.b16 %v1330
    %v2021 = vunpack.c.l.b16 %v1331
    %v2022 = vunpack.c.h.b16 %v1331
    %v2023 = vunpack.c.l.b16 %v1332
    %v2024 = vunpack.c.h.b16 %v1332
    %v2025 = vunpack.c.l.b16 %v1333
    %v2026 = vunpack.c.h.b16 %v1333
    %v2027 = vunpack.c.l.b16 %v1334
    %v2028 = vunpack.c.h.b16 %v1334
    %v2029 = vunpack.c.l.b16 %v1335
    %v2030 = vunpack.c.h.b16 %v1335
    %v2031 = vunpack.c.l.b16 %v1336
    %v2032 = vunpack.c.h.b16 %v1336
    %v2033 = vunpack.c.l.b16 %v1337
    %v2034 = vunpack.c.h.b16 %v1337
    %v2035 = vunpack.c.l.b16 %v1338
    %v2036 = vunpack.c.h.b16 %v1338
    %v2037 = vunpack.c.l.b16 %v1339
    %v2038 = vunpack.c.h.b16 %v1339
    %v2039 = vunpack.c.l.b16 %v1340
    %v2040 = vunpack.c.h.b16 %v1340
    %v2041 = vunpack.c.l.b16 %v1341
    %v2042 = vunpack.c.h.b16 %v1341
    %v2043 = vunpack.c.l.b16 %v1342
    %v2044 = vunpack.c.h.b16 %v1342
    %v2045 = vunpack.c.l.b16 %v1343
    %v2046 = vunpack.c.h.b16 %v1343
    %v2047 = vunpack.c.l.b16 %v1344
    %v2048 = vunpack.c.h.b16 %v1344
    %v2049 = vunpack.c.l.b16 %v1345
    %v2050 = vunpack.c.h.b16 %v1345
    %v2051 = vunpack.c.l.b16 %v1346
    %v2052 = vunpack.c.h.b16 %v1346
    %v2053 = vunpack.c.l.b16 %v1347
    %v2054 = vunpack.c.h.b16 %v1347
    %v2055 = vunpack.c.l.b16 %v1348
    %v2056 = vunpack.c.h.b16 %v1348
    %v2057 = vunpack.c.l.b16 %v1349
    %v2058 = vunpack.c.h.b16 %v1349
    %v2059 = vunpack.c.l.b16 %v1350
    %v2060 = vunpack.c.h.b16 %v1350
    %v2061 = vunpack.c.l.b16 %v1351
    %v2062 = vunpack.c.h.b16 %v1351
    %v2063 = vunpack.c.l.b16 %v1352
    %v2064 = vunpack.c.h.b16 %v1352
    %v2065 = vunpack.c.l.b16 %v1353
    %v2066 = vunpack.c.h.b16 %v1353
    %v2067 = vunpack.c.l.b16 %v1354
    %v2068 = vunpack.c.h.b16 %v1354
    %v2069 = vunpack.c.l.b16 %v1355
    %v2070 = vunpack.c.h.b16 %v1355
    %v2071 = vunpack.c.l.b16 %v1356
    %v2072 = vunpack.c.h.b16 %v1356
    %v2073 = vunpack.c.l.b16 %v1357
    %v2074 = vunpack.c.h.b16 %v1357
    %v2075 = vunpack.c.l.b16 %v1358
    %v2076 = vunpack.c.h.b16 %v1358
    %v2077 = vunpack.c.l.b16 %v1359
    %v2078 = vunpack.c.h.b16 %v1359
    %v2079 = vunpack.c.l.b16 %v1360
    %v2080 = vunpack.c.h.b16 %v1360
    %v2081 = vunpack.c.l.b16 %v1361
    %v2082 = vunpack.c.h.b16 %v1361
    %v2083 = vunpack.c.l.b16 %v1362
    %v2084 = vunpack.c.h.b16 %v1362
    %v2085 = vunpack.c.l.b16 %v1363
    %v2086 = vunpack.c.h.b16 %v1363
    %v2087 = vunpack.c.l.b16 %v1364
    %v2088 = vunpack.c.h.b16 %v1364
    %v2089 = vunpack.c.l.b16 %v1365
    %v2090 = vunpack.c.h.b16 %v1365
    %v2091 = vunpack.c.l.b16 %v1366
    %v2092 = vunpack.c.h.b16 %v1366
    %v2093 = vunpack.c.l.b16 %v1367
    %v2094 = vunpack.c.h.b16 %v1367
    %v2095 = vunpack.c.l.b16 %v1368
    %v2096 = vunpack.c.h.b16 %v1368
    %v2097 = vunpack.c.l.b16 %v1369
    %v2098 = vunpack.c.h.b16 %v1369
    %v2099 = vunpack.c.l.b16 %v1370
    %v2100 = vunpack.c.h.b16 %v1370
    %v2101 = vunpack.c.l.b16 %v1371
    %v2102 = vunpack.c.h.b16 %v1371
    %v2103 = vunpack.c.l.b16 %v1372
    %v2104 = vunpack.c.h.b16 %v1372
    %v2105 = vunpack.c.l.b16 %v1373
    %v2106 = vunpack.c.h.b16 %v1373
    %v2107 = vunpack.c.l.b16 %v1374
    %v2108 = vunpack.c.h.b16 %v1374
    %v2109 = vunpack.c.l.b16 %v1375
    %v2110 = vunpack.c.h.b16 %v1375
    %v2111 = vunpack.c.l.b16 %v1376
    %v2112 = vunpack.c.h.b16 %v1376
    %v2113 = vunpack.c.l.b16 %v1377
    %v2114 = vunpack.c.h.b16 %v1377
    %v2115 = vunpack.c.l.b16 %v1378
    %v2116 = vunpack.c.h.b16 %v1378
    %v2117 = vunpack.c.l.b16 %v1379
    %v2118 = vunpack.c.h.b16 %v1379
    %v2119 = vunpack.c.l.b16 %v1380
    %v2120 = vunpack.c.h.b16 %v1380
    %v2121 = vunpack.c.l.b16 %v1381
    %v2122 = vunpack.c.h.b16 %v1381
    %v2123 = vunpack.c.l.b16 %v1382
    %v2124 = vunpack.c.h.b16 %v1382
    %v2125 = vunpack.c.l.b16 %v1383
    %v2126 = vunpack.c.h.b16 %v1383
    %v2127 = vunpack.c.l.b16 %v1384
    %v2128 = vunpack.c.h.b16 %v1384
    %v2129 = vunpack.c.l.b16 %v1385
    %v2130 = vunpack.c.h.b16 %v1385
    %v2131 = vunpack.c.l.b16 %v1386
    %v2132 = vunpack.c.h.b16 %v1386
    %v2133 = vunpack.c.l.b16 %v1387
    %v2134 = vunpack.c.h.b16 %v1387
    %v2135 = vunpack.c.l.b16 %v1388
    %v2136 = vunpack.c.h.b16 %v1388
    %v2137 = vunpack.c.l.b16 %v1389
    %v2138 = vunpack.c.h.b16 %v1389
    %v2139 = vunpack.c.l.b16 %v1390
    %v2140 = vunpack.c.h.b16 %v1390
    %v2141 = vunpack.c.l.b16 %v1391
    %v2142 = vunpack.c.h.b16 %v1391
    %v2143 = vunpack.c.l.b16 %v1392
    %v2144 = vunpack.c.h.b16 %v1392
    %v2145 = vunpack.c.l.b16 %v1393
    %v2146 = vunpack.c.h.b16 %v1393
    %v2147 = vunpack.c.l.b16 %v1394
    %v2148 = vunpack.c.h.b16 %v1394
    %v2149 = vunpack.c.l.b16 %v1395
    %v2150 = vunpack.c.h.b16 %v1395
    %v2151 = vunpack.c.l.b16 %v1396
    %v2152 = vunpack.c.h.b16 %v1396
    %v2153 = vunpack.c.l.b16 %v1397
    %v2154 = vunpack.c.h.b16 %v1397
    %v2155 = vunpack.c.l.b16 %v1398
    %v2156 = vunpack.c.h.b16 %v1398
    %v2157 = vunpack.c.l.b16 %v1399
    %v2158 = vunpack.c.h.b16 %v1399
    %v2159 = vunpack.c.l.b16 %v1400
    %v2160 = vunpack.c.h.b16 %v1400
    %v2161 = vunpack.c.l.b16 %v1401
    %v2162 = vunpack.c.h.b16 %v1401
    %v2163 = vunpack.c.l.b16 %v1402
    %v2164 = vunpack.c.h.b16 %v1402
    %v2165 = vunpack.c.l.b16 %v1403
    %v2166 = vunpack.c.h.b16 %v1403
    %v2167 = vunpack.c.l.b16 %v1404
    %v2168 = vunpack.c.h.b16 %v1404
    %v2169 = vunpack.c.l.b16 %v1405
    %v2170 = vunpack.c.h.b16 %v1405
    %v2171 = vunpack.c.l.b16 %v1406
    %v2172 = vunpack.c.h.b16 %v1406
    %v2173 = vunpack.c.l.b16 %v1407
    %v2174 = vunpack.c.h.b16 %v1407
    %v2175 = vunpack.c.l.b16 %v1408
    %v2176 = vunpack.c.h.b16 %v1408
    %v2177 = vunpack.c.l.b16 %v1409
    %v2178 = vunpack.c.h.b16 %v1409
    %v2179 = vunpack.c.l.b16 %v1410
    %v2180 = vunpack.c.h.b16 %v1410
    %v2181 = vunpack.c.l.b16 %v1411
    %v2182 = vunpack.c.h.b16 %v1411
    %v2183 = vunpack.c.l.b16 %v1412
    %v2184 = vunpack.c.h.b16 %v1412
    %v2185 = vunpack.c.l.b16 %v1413
    %v2186 = vunpack.c.h.b16 %v1413
    %v2187 = vunpack.c.l.b16 %v1414
    %v2188 = vunpack.c.h.b16 %v1414
    %v2189 = vunpack.c.l.b16 %v1415
    %v2190 = vunpack.c.h.b16 %v1415
    %v2191 = vunpack.c.l.b16 %v1416
    %v2192 = vunpack.c.h.b16 %v1416
    %v2193 = vunpack.c.l.b16 %v1417
    %v2194 = vunpack.c.h.b16 %v1417
    %v2195 = vunpack.c.l.b16 %v1418
    %v2196 = vunpack.c.h.b16 %v1418
    %v2197 = vpack.c.b16 %v1689, %v1685
    %v2198 = vpack.c.b16 %v1690, %v1686
    %v2199 = vpack.c.b16 %v1691, %v1687
    %v2200 = vpack.c.b16 %v1692, %v1688
    %v2201 = vpack.c.b16 %v1697, %v1693
    %v2202 = vpack.c.b16 %v1698, %v1694
    %v2203 = vpack.c.b16 %v1699, %v1695
    %v2204 = vpack.c.b16 %v1700, %v1696
    %v2205 = vpack.c.b16 %v1705, %v1701
    %v2206 = vpack.c.b16 %v1706, %v1702
    %v2207 = vpack.c.b16 %v1707, %v1703
    %v2208 = vpack.c.b16 %v1708, %v1704
    %v2209 = vpack.c.b16 %v1713, %v1709
    %v2210 = vpack.c.b16 %v1714, %v1710
    %v2211 = vpack.c.b16 %v1715, %v1711
    %v2212 = vpack.c.b16 %v1716, %v1712
    %v2213 = vpack.c.b16 %v1721, %v1717
    %v2214 = vpack.c.b16 %v1722, %v1718
    %v2215 = vpack.c.b16 %v1723, %v1719
    %v2216 = vpack.c.b16 %v1724, %v1720
    %v2217 = vpack.c.b16 %v1729, %v1725
    %v2218 = vpack.c.b16 %v1730, %v1726
    %v2219 = vpack.c.b16 %v1731, %v1727
    %v2220 = vpack.c.b16 %v1732, %v1728
    %v2221 = vpack.c.b16 %v1737, %v1733
    %v2222 = vpack.c.b16 %v1738, %v1734
    %v2223 = vpack.c.b16 %v1739, %v1735
    %v2224 = vpack.c.b16 %v1740, %v1736
    %v2225 = vpack.c.b16 %v1745, %v1741
    %v2226 = vpack.c.b16 %v1746, %v1742
    %v2227 = vpack.c.b16 %v1747, %v1743
    %v2228 = vpack.c.b16 %v1748, %v1744
    %v2229 = vpack.c.b16 %v1753, %v1749
    %v2230 = vpack.c.b16 %v1754, %v1750
    %v2231 = vpack.c.b16 %v1755, %v1751
    %v2232 = vpack.c.b16 %v1756, %v1752
    %v2233 = vpack.c.b16 %v1761, %v1757
    %v2234 = vpack.c.b16 %v1762, %v1758
    %v2235 = vpack.c.b16 %v1763, %v1759
    %v2236 = vpack.c.b16 %v1764, %v1760
    %v2237 = vpack.c.b16 %v1769, %v1765
    %v2238 = vpack.c.b16 %v1770, %v1766
    %v2239 = vpack.c.b16 %v1771, %v1767
    %v2240 = vpack.c.b16 %v1772, %v1768
    %v2241 = vpack.c.b16 %v1777, %v1773
    %v2242 = vpack.c.b16 %v1778, %v1774
    %v2243 = vpack.c.b16 %v1779, %v1775
    %v2244 = vpack.c.b16 %v1780, %v1776
    %v2245 = vpack.c.b16 %v1785, %v1781
    %v2246 = vpack.c.b16 %v1786, %v1782
    %v2247 = vpack.c.b16 %v1787, %v1783
    %v2248 = vpack.c.b16 %v1788, %v1784
    %v2249 = vpack.c.b16 %v1793, %v1789
    %v2250 = vpack.c.b16 %v1794, %v1790
    %v2251 = vpack.c.b16 %v1795, %v1791
    %v2252 = vpack.c.b16 %v1796, %v1792
    %v2253 = vpack.c.b16 %v1801, %v1797
    %v2254 = vpack.c.b16 %v1802, %v1798
    %v2255 = vpack.c.b16 %v1803, %v1799
    %v2256 = vpack.c.b16 %v1804, %v1800
    %v2257 = vpack.c.b16 %v1809, %v1805
    %v2258 = vpack.c.b16 %v1810, %v1806
    %v2259 = vpack.c.b16 %v1811, %v1807
    %v2260 = vpack.c.b16 %v1812, %v1808
    %v2261 = vpack.c.b16 %v1817, %v1813
    %v2262 = vpack.c.b16 %v1818, %v1814
    %v2263 = vpack.c.b16 %v1819, %v1815
    %v2264 = vpack.c.b16 %v1820, %v1816
    %v2265 = vpack.c.b16 %v1825, %v1821
    %v2266 = vpack.c.b16 %v1826, %v1822
    %v2267 = vpack.c.b16 %v1827, %v1823
    %v2268 = vpack.c.b16 %v1828, %v1824
    %v2269 = vpack.c.b16 %v1833, %v1829
    %v2270 = vpack.c.b16 %v1834, %v1830
    %v2271 = vpack.c.b16 %v1835, %v1831
    %v2272 = vpack.c.b16 %v1836, %v1832
    %v2273 = vpack.c.b16 %v1841, %v1837
    %v2274 = vpack.c.b16 %v1842, %v1838
    %v2275 = vpack.c.b16 %v1843, %v1839
    %v2276 = vpack.c.b16 %v1844, %v1840
    %v2277 = vpack.c.b16 %v1849, %v1845
    %v2278 = vpack.c.b16 %v1850, %v1846
    %v2279 = vpack.c.b16 %v1851, %v1847
    %v2280 = vpack.c.b16 %v1852, %v1848
    %v2281 = vpack.c.b16 %v1857, %v1853
    %v2282 = vpack.c.b16 %v1858, %v1854
    %v2283 = vpack.c.b16 %v1859, %v1855
    %v2284 = vpack.c.b16 %v1860, %v1856
    %v2285 = vpack.c.b16 %v1865, %v1861
    %v2286 = vpack.c.b16 %v1866, %v1862
    %v2287 = vpack.c.b16 %v1867, %v1863
    %v2288 = vpack.c.b16 %v1868, %v1864
    %v2289 = vpack.c.b16 %v1873, %v1869
    %v2290 = vpack.c.b16 %v1874, %v1870
    %v2291 = vpack.c.b16 %v1875, %v1871
    %v2292 = vpack.c.b16 %v1876, %v1872
    %v2293 = vpack.c.b16 %v1881, %v1877
    %v2294 = vpack.c.b16 %v1882, %v1878
    %v2295 = vpack.c.b16 %v1883, %v1879
    %v2296 = vpack.c.b16 %v1884, %v1880
    %v2297 = vpack.c.b16 %v1889, %v1885
    %v2298 = vpack.c.b16 %v1890, %v1886
    %v2299 = vpack.c.b16 %v1891, %v1887
    %v2300 = vpack.c.b16 %v1892, %v1888
    %v2301 = vpack.c.b16 %v1897, %v1893
    %v2302 = vpack.c.b16 %v1898, %v1894
    %v2303 = vpack.c.b16 %v1899, %v1895
    %v2304 = vpack.c.b16 %v1900, %v1896
    %v2305 = vpack.c.b16 %v1905, %v1901
    %v2306 = vpack.c.b16 %v1906, %v1902
    %v2307 = vpack.c.b16 %v1907, %v1903
    %v2308 = vpack.c.b16 %v1908, %v1904
    %v2309 = vpack.c.b16 %v1913, %v1909
    %v2310 = vpack.c.b16 %v1914, %v1910
    %v2311 = vpack.c.b16 %v1915, %v1911
    %v2312 = vpack.c.b16 %v1916, %v1912
    %v2313 = vpack.c.b16 %v1921, %v1917
    %v2314 = vpack.c.b16 %v1922, %v1918
    %v2315 = vpack.c.b16 %v1923, %v1919
    %v2316 = vpack.c.b16 %v1924, %v1920
    %v2317 = vpack.c.b16 %v1929, %v1925
    %v2318 = vpack.c.b16 %v1930, %v1926
    %v2319 = vpack.c.b16 %v1931, %v1927
    %v2320 = vpack.c.b16 %v1932, %v1928
    %v2321 = vpack.c.b16 %v1937, %v1933
    %v2322 = vpack.c.b16 %v1938, %v1934
    %v2323 = vpack.c.b16 %v1939, %v1935
    %v2324 = vpack.c.b16 %v1940, %v1936
    %v2325 = vpack.c.b16 %v1945, %v1941
    %v2326 = vpack.c.b16 %v1946, %v1942
    %v2327 = vpack.c.b16 %v1947, %v1943
    %v2328 = vpack.c.b16 %v1948, %v1944
    %v2329 = vpack.c.b16 %v1953, %v1949
    %v2330 = vpack.c.b16 %v1954, %v1950
    %v2331 = vpack.c.b16 %v1955, %v1951
    %v2332 = vpack.c.b16 %v1956, %v1952
    %v2333 = vpack.c.b16 %v1961, %v1957
    %v2334 = vpack.c.b16 %v1962, %v1958
    %v2335 = vpack.c.b16 %v1963, %v1959
    %v2336 = vpack.c.b16 %v1964, %v1960
    %v2337 = vpack.c.b16 %v1969, %v1965
    %v2338 = vpack.c.b16 %v1970, %v1966
    %v2339 = vpack.c.b16 %v1971, %v1967
    %v2340 = vpack.c.b16 %v1972, %v1968
    %v2341 = vpack.c.b16 %v1977, %v1973
    %v2342 = vpack.c.b16 %v1978, %v1974
    %v2343 = vpack.c.b16 %v1979, %v1975
    %v2344 = vpack.c.b16 %v1980, %v1976
    %v2345 = vpack.c.b16 %v1985, %v1981
    %v2346 = vpack.c.b16 %v1986, %v1982
    %v2347 = vpack.c.b16 %v1987, %v1983
    %v2348 = vpack.c.b16 %v1988, %v1984
    %v2349 = vpack.c.b16 %v1993, %v1989
    %v2350 = vpack.c.b16 %v1994, %v1990
    %v2351 = vpack.c.b16 %v1995, %v1991
    %v2352 = vpack.c.b16 %v1996, %v1992
    %v2353 = vpack.c.b16 %v2001, %v1997
    %v2354 = vpack.c.b16 %v2002, %v1998
    %v2355 = vpack.c.b16 %v2003, %v1999
    %v2356 = vpack.c.b16 %v2004, %v2000
    %v2357 = vpack.c.b16 %v2009, %v2005
    %v2358 = vpack.c.b16 %v2010, %v2006
    %v2359 = vpack.c.b16 %v2011, %v2007
    %v2360 = vpack.c.b16 %v2012, %v2008
    %v2361 = vpack.c.b16 %v2017, %v2013
    %v2362 = vpack.c.b16 %v2018, %v2014
    %v2363 = vpack.c.b16 %v2019, %v2015
    %v2364 = vpack.c.b16 %v2020, %v2016
    %v2365 = vpack.c.b16 %v2025, %v2021
    %v2366 = vpack.c.b16 %v2026, %v2022
    %v2367 = vpack.c.b16 %v2027, %v2023
    %v2368 = vpack.c.b16 %v2028, %v2024
    %v2369 = vpack.c.b16 %v2033, %v2029
    %v2370 = vpack.c.b16 %v2034, %v2030
    %v2371 = vpack.c.b16 %v2035, %v2031
    %v2372 = vpack.c.b16 %v2036, %v2032
    %v2373 = vpack.c.b16 %v2041, %v2037
    %v2374 = vpack.c.b16 %v2042, %v2038
    %v2375 = vpack.c.b16 %v2043, %v2039
    %v2376 = vpack.c.b16 %v2044, %v2040
    %v2377 = vpack.c.b16 %v2049, %v2045
    %v2378 = vpack.c.b16 %v2050, %v2046
    %v2379 = vpack.c.b16 %v2051, %v2047
    %v2380 = vpack.c.b16 %v2052, %v2048
    %v2381 = vpack.c.b16 %v2057, %v2053
    %v2382 = vpack.c.b16 %v2058, %v2054
    %v2383 = vpack.c.b16 %v2059, %v2055
    %v2384 = vpack.c.b16 %v2060, %v2056
    %v2385 = vpack.c.b16 %v2065, %v2061
    %v2386 = vpack.c.b16 %v2066, %v2062
    %v2387 = vpack.c.b16 %v2067, %v2063
    %v2388 = vpack.c.b16 %v2068, %v2064
    %v2389 = vpack.c.b16 %v2073, %v2069
    %v2390 = vpack.c.b16 %v2074, %v2070
    %v2391 = vpack.c.b16 %v2075, %v2071
    %v2392 = vpack.c.b16 %v2076, %v2072
    %v2393 = vpack.c.b16 %v2081, %v2077
    %v2394 = vpack.c.b16 %v2082, %v2078
    %v2395 = vpack.c.b16 %v2083, %v2079
    %v2396 = vpack.c.b16 %v2084, %v2080
    %v2397 = vpack.c.b16 %v2089, %v2085
    %v2398 = vpack.c.b16 %v2090, %v2086
    %v2399 = vpack.c.b16 %v2091, %v2087
    %v2400 = vpack.c.b16 %v2092, %v2088
    %v2401 = vpack.c.b16 %v2097, %v2093
    %v2402 = vpack.c.b16 %v2098, %v2094
    %v2403 = vpack.c.b16 %v2099, %v2095
    %v2404 = vpack.c.b16 %v2100, %v2096
    %v2405 = vpack.c.b16 %v2105, %v2101
    %v2406 = vpack.c.b16 %v2106, %v2102
    %v2407 = vpack.c.b16 %v2107, %v2103
    %v2408 = vpack.c.b16 %v2108, %v2104
    %v2409 = vpack.c.b16 %v2113, %v2109
    %v2410 = vpack.c.b16 %v2114, %v2110
    %v2411 = vpack.c.b16 %v2115, %v2111
    %v2412 = vpack.c.b16 %v2116, %v2112
    %v2413 = vpack.c.b16 %v2121, %v2117
    %v2414 = vpack.c.b16 %v2122, %v2118
    %v2415 = vpack.c.b16 %v2123, %v2119
    %v2416 = vpack.c.b16 %v2124, %v2120
    %v2417 = vpack.c.b16 %v2129, %v2125
    %v2418 = vpack.c.b16 %v2130, %v2126
    %v2419 = vpack.c.b16 %v2131, %v2127
    %v2420 = vpack.c.b16 %v2132, %v2128
    %v2421 = vpack.c.b16 %v2137, %v2133
    %v2422 = vpack.c.b16 %v2138, %v2134
    %v2423 = vpack.c.b16 %v2139, %v2135
    %v2424 = vpack.c.b16 %v2140, %v2136
    %v2425 = vpack.c.b16 %v2145, %v2141
    %v2426 = vpack.c.b16 %v2146, %v2142
    %v2427 = vpack.c.b16 %v2147, %v2143
    %v2428 = vpack.c.b16 %v2148, %v2144
    %v2429 = vpack.c.b16 %v2153, %v2149
    %v2430 = vpack.c.b16 %v2154, %v2150
    %v2431 = vpack.c.b16 %v2155, %v2151
    %v2432 = vpack.c.b16 %v2156, %v2152
    %v2433 = vpack.c.b16 %v2161, %v2157
    %v2434 = vpack.c.b16 %v2162, %v2158
    %v2435 = vpack.c.b16 %v2163, %v2159
    %v2436 = vpack.c.b16 %v2164, %v2160
    %v2437 = vpack.c.b16 %v2169, %v2165
    %v2438 = vpack.c.b16 %v2170, %v2166
    %v2439 = vpack.c.b16 %v2171, %v2167
    %v2440 = vpack.c.b16 %v2172, %v2168
    %v2441 = vpack.c.b16 %v2177, %v2173
    %v2442 = vpack.c.b16 %v2178, %v2174
    %v2443 = vpack.c.b16 %v2179, %v2175
    %v2444 = vpack.c.b16 %v2180, %v2176
    %v2445 = vpack.c.b16 %v2185, %v2181
    %v2446 = vpack.c.b16 %v2186, %v2182
    %v2447 = vpack.c.b16 %v2187, %v2183
    %v2448 = vpack.c.b16 %v2188, %v2184
    %v2449 = vpack.c.b16 %v2193, %v2189
    %v2450 = vpack.c.b16 %v2194, %v2190
    %v2451 = vpack.c.b16 %v2195, %v2191
    %v2452 = vpack.c.b16 %v2196, %v2192
    %2709 = vmatpush.bf16.msra.mxu0 %v2225
    %2710 = vmatpush.bf16.msra.mxu0 %v2221
    %2711 = vmatpush.bf16.msra.mxu0 %v2217
    %2712 = vmatpush.bf16.msra.mxu0 %v2213
    %2713 = vmatpush.bf16.msra.mxu0 %v2209
    %2714 = vmatpush.bf16.msra.mxu0 %v2205
    %2715 = vmatpush.bf16.msra.mxu0 %v2201
    %2716 = vmatpush.bf16.msra.mxu0 %v2197
    %2717 = vmatmul.bf16.gmra.mxu0 %v1155
    %v2718 = vpop.f32.mrf.mxu0
    %v2719 = vadd.f32 %v1421, %v2718
    %v2720 = vpop.f32.mrf.mxu0
    %v2721 = vadd.f32 %v1421, %v2720
    %2722 = vdwg.mxu0
    %2723 = vmatpush.bf16.msra.mxu0 %v2257
    %2724 = vmatpush.bf16.msra.mxu0 %v2253
    %2725 = vmatpush.bf16.msra.mxu0 %v2249
    %2726 = vmatpush.bf16.msra.mxu0 %v2245
    %2727 = vmatpush.bf16.msra.mxu0 %v2241
    %2728 = vmatpush.bf16.msra.mxu0 %v2237
    %2729 = vmatpush.bf16.msra.mxu0 %v2233
    %2730 = vmatpush.bf16.msra.mxu0 %v2229
    %2731 = vmatmul.bf16.gmra.mxu0 %v1156
    %v2732 = vpop.f32.mrf.mxu0
    %v2733 = vadd.f32 %v2719, %v2732
    %v2734 = vpop.f32.mrf.mxu0
    %v2735 = vadd.f32 %v2721, %v2734
    %2736 = vdwg.mxu0
    %2737 = vmatpush.bf16.msra.mxu0 %v2289
    %2738 = vmatpush.bf16.msra.mxu0 %v2285
    %2739 = vmatpush.bf16.msra.mxu0 %v2281
    %2740 = vmatpush.bf16.msra.mxu0 %v2277
    %2741 = vmatpush.bf16.msra.mxu0 %v2273
    %2742 = vmatpush.bf16.msra.mxu0 %v2269
    %2743 = vmatpush.bf16.msra.mxu0 %v2265
    %2744 = vmatpush.bf16.msra.mxu0 %v2261
    %2745 = vmatmul.bf16.gmra.mxu0 %v1157
    %v2746 = vpop.f32.mrf.mxu0
    %v2747 = vadd.f32 %v2733, %v2746
    %v2748 = vpop.f32.mrf.mxu0
    %v2749 = vadd.f32 %v2735, %v2748
    %2750 = vdwg.mxu0
    %2751 = vmatpush.bf16.msra.mxu0 %v2321
    %2752 = vmatpush.bf16.msra.mxu0 %v2317
    %2753 = vmatpush.bf16.msra.mxu0 %v2313
    %2754 = vmatpush.bf16.msra.mxu0 %v2309
    %2755 = vmatpush.bf16.msra.mxu0 %v2305
    %2756 = vmatpush.bf16.msra.mxu0 %v2301
    %2757 = vmatpush.bf16.msra.mxu0 %v2297
    %2758 = vmatpush.bf16.msra.mxu0 %v2293
    %2759 = vmatmul.bf16.gmra.mxu0 %v1158
    %v2760 = vpop.f32.mrf.mxu0
    %v2761 = vadd.f32 %v2747, %v2760
    %v2762 = vpop.f32.mrf.mxu0
    %v2763 = vadd.f32 %v2749, %v2762
    %2764 = vdwg.mxu0
    %2765 = vmatpush.bf16.msra.mxu0 %v2353
    %2766 = vmatpush.bf16.msra.mxu0 %v2349
    %2767 = vmatpush.bf16.msra.mxu0 %v2345
    %2768 = vmatpush.bf16.msra.mxu0 %v2341
    %2769 = vmatpush.bf16.msra.mxu0 %v2337
    %2770 = vmatpush.bf16.msra.mxu0 %v2333
    %2771 = vmatpush.bf16.msra.mxu0 %v2329
    %2772 = vmatpush.bf16.msra.mxu0 %v2325
    %2773 = vmatmul.bf16.gmra.mxu0 %v1159
    %v2774 = vpop.f32.mrf.mxu0
    %v2775 = vadd.f32 %v2761, %v2774
    %v2776 = vpop.f32.mrf.mxu0
    %v2777 = vadd.f32 %v2763, %v2776
    %2778 = vdwg.mxu0
    %2779 = vmatpush.bf16.msra.mxu0 %v2385
    %2780 = vmatpush.bf16.msra.mxu0 %v2381
    %2781 = vmatpush.bf16.msra.mxu0 %v2377
    %2782 = vmatpush.bf16.msra.mxu0 %v2373
    %2783 = vmatpush.bf16.msra.mxu0 %v2369
    %2784 = vmatpush.bf16.msra.mxu0 %v2365
    %2785 = vmatpush.bf16.msra.mxu0 %v2361
    %2786 = vmatpush.bf16.msra.mxu0 %v2357
    %2787 = vmatmul.bf16.gmra.mxu0 %v1160
    %v2788 = vpop.f32.mrf.mxu0
    %v2789 = vadd.f32 %v2775, %v2788
    %v2790 = vpop.f32.mrf.mxu0
    %v2791 = vadd.f32 %v2777, %v2790
    %2792 = vdwg.mxu0
    %2793 = vmatpush.bf16.msra.mxu0 %v2417
    %2794 = vmatpush.bf16.msra.mxu0 %v2413
    %2795 = vmatpush.bf16.msra.mxu0 %v2409
    %2796 = vmatpush.bf16.msra.mxu0 %v2405
    %2797 = vmatpush.bf16.msra.mxu0 %v2401
    %2798 = vmatpush.bf16.msra.mxu0 %v2397
    %2799 = vmatpush.bf16.msra.mxu0 %v2393
    %2800 = vmatpush.bf16.msra.mxu0 %v2389
    %2801 = vmatmul.bf16.gmra.mxu0 %v1161
    %v2802 = vpop.f32.mrf.mxu0
    %v2803 = vadd.f32 %v2789, %v2802
    %v2804 = vpop.f32.mrf.mxu0
    %v2805 = vadd.f32 %v2791, %v2804
    %2806 = vdwg.mxu0
    %2807 = vmatpush.bf16.msra.mxu0 %v2449
    %2808 = vmatpush.bf16.msra.mxu0 %v2445
    %2809 = vmatpush.bf16.msra.mxu0 %v2441
    %2810 = vmatpush.bf16.msra.mxu0 %v2437
    %2811 = vmatpush.bf16.msra.mxu0 %v2433
    %2812 = vmatpush.bf16.msra.mxu0 %v2429
    %2813 = vmatpush.bf16.msra.mxu0 %v2425
    %2814 = vmatpush.bf16.msra.mxu0 %v2421
    %2815 = vmatmul.bf16.gmra.mxu0 %v1162
    %v2816 = vpop.f32.mrf.mxu0
    %v2817 = vadd.f32 %v2803, %v2816
    %v2818 = vpop.f32.mrf.mxu0
    %v2819 = vadd.f32 %v2805, %v2818
    %2820 = vdwg.mxu0
    %2821 = vmatpush.bf16.msra.mxu0 %v2226
    %2822 = vmatpush.bf16.msra.mxu0 %v2222
    %2823 = vmatpush.bf16.msra.mxu0 %v2218
    %2824 = vmatpush.bf16.msra.mxu0 %v2214
    %2825 = vmatpush.bf16.msra.mxu0 %v2210
    %2826 = vmatpush.bf16.msra.mxu0 %v2206
    %2827 = vmatpush.bf16.msra.mxu0 %v2202
    %2828 = vmatpush.bf16.msra.mxu0 %v2198
    %2829 = vmatmul.bf16.gmra.mxu0 %v1155
    %v2830 = vpop.f32.mrf.mxu0
    %v2831 = vadd.f32 %v1422, %v2830
    %v2832 = vpop.f32.mrf.mxu0
    %v2833 = vadd.f32 %v1422, %v2832
    %2834 = vdwg.mxu0
    %2835 = vmatpush.bf16.msra.mxu0 %v2258
    %2836 = vmatpush.bf16.msra.mxu0 %v2254
    %2837 = vmatpush.bf16.msra.mxu0 %v2250
    %2838 = vmatpush.bf16.msra.mxu0 %v2246
    %2839 = vmatpush.bf16.msra.mxu0 %v2242
    %2840 = vmatpush.bf16.msra.mxu0 %v2238
    %2841 = vmatpush.bf16.msra.mxu0 %v2234
    %2842 = vmatpush.bf16.msra.mxu0 %v2230
    %2843 = vmatmul.bf16.gmra.mxu0 %v1156
    %v2844 = vpop.f32.mrf.mxu0
    %v2845 = vadd.f32 %v2831, %v2844
    %v2846 = vpop.f32.mrf.mxu0
    %v2847 = vadd.f32 %v2833, %v2846
    %2848 = vdwg.mxu0
    %2849 = vmatpush.bf16.msra.mxu0 %v2290
    %2850 = vmatpush.bf16.msra.mxu0 %v2286
    %2851 = vmatpush.bf16.msra.mxu0 %v2282
    %2852 = vmatpush.bf16.msra.mxu0 %v2278
    %2853 = vmatpush.bf16.msra.mxu0 %v2274
    %2854 = vmatpush.bf16.msra.mxu0 %v2270
    %2855 = vmatpush.bf16.msra.mxu0 %v2266
    %2856 = vmatpush.bf16.msra.mxu0 %v2262
    %2857 = vmatmul.bf16.gmra.mxu0 %v1157
    %v2858 = vpop.f32.mrf.mxu0
    %v2859 = vadd.f32 %v2845, %v2858
    %v2860 = vpop.f32.mrf.mxu0
    %v2861 = vadd.f32 %v2847, %v2860
    %2862 = vdwg.mxu0
    %2863 = vmatpush.bf16.msra.mxu0 %v2322
    %2864 = vmatpush.bf16.msra.mxu0 %v2318
    %2865 = vmatpush.bf16.msra.mxu0 %v2314
    %2866 = vmatpush.bf16.msra.mxu0 %v2310
    %2867 = vmatpush.bf16.msra.mxu0 %v2306
    %2868 = vmatpush.bf16.msra.mxu0 %v2302
    %2869 = vmatpush.bf16.msra.mxu0 %v2298
    %2870 = vmatpush.bf16.msra.mxu0 %v2294
    %2871 = vmatmul.bf16.gmra.mxu0 %v1158
    %v2872 = vpop.f32.mrf.mxu0
    %v2873 = vadd.f32 %v2859, %v2872
    %v2874 = vpop.f32.mrf.mxu0
    %v2875 = vadd.f32 %v2861, %v2874
    %2876 = vdwg.mxu0
    %2877 = vmatpush.bf16.msra.mxu0 %v2354
    %2878 = vmatpush.bf16.msra.mxu0 %v2350
    %2879 = vmatpush.bf16.msra.mxu0 %v2346
    %2880 = vmatpush.bf16.msra.mxu0 %v2342
    %2881 = vmatpush.bf16.msra.mxu0 %v2338
    %2882 = vmatpush.bf16.msra.mxu0 %v2334
    %2883 = vmatpush.bf16.msra.mxu0 %v2330
    %2884 = vmatpush.bf16.msra.mxu0 %v2326
    %2885 = vmatmul.bf16.gmra.mxu0 %v1159
    %v2886 = vpop.f32.mrf.mxu0
    %v2887 = vadd.f32 %v2873, %v2886
    %v2888 = vpop.f32.mrf.mxu0
    %v2889 = vadd.f32 %v2875, %v2888
    %2890 = vdwg.mxu0
    %2891 = vmatpush.bf16.msra.mxu0 %v2386
    %2892 = vmatpush.bf16.msra.mxu0 %v2382
    %2893 = vmatpush.bf16.msra.mxu0 %v2378
    %2894 = vmatpush.bf16.msra.mxu0 %v2374
    %2895 = vmatpush.bf16.msra.mxu0 %v2370
    %2896 = vmatpush.bf16.msra.mxu0 %v2366
    %2897 = vmatpush.bf16.msra.mxu0 %v2362
    %2898 = vmatpush.bf16.msra.mxu0 %v2358
    %2899 = vmatmul.bf16.gmra.mxu0 %v1160
    %v2900 = vpop.f32.mrf.mxu0
    %v2901 = vadd.f32 %v2887, %v2900
    %v2902 = vpop.f32.mrf.mxu0
    %v2903 = vadd.f32 %v2889, %v2902
    %2904 = vdwg.mxu0
    %2905 = vmatpush.bf16.msra.mxu0 %v2418
    %2906 = vmatpush.bf16.msra.mxu0 %v2414
    %2907 = vmatpush.bf16.msra.mxu0 %v2410
    %2908 = vmatpush.bf16.msra.mxu0 %v2406
    %2909 = vmatpush.bf16.msra.mxu0 %v2402
    %2910 = vmatpush.bf16.msra.mxu0 %v2398
    %2911 = vmatpush.bf16.msra.mxu0 %v2394
    %2912 = vmatpush.bf16.msra.mxu0 %v2390
    %2913 = vmatmul.bf16.gmra.mxu0 %v1161
    %v2914 = vpop.f32.mrf.mxu0
    %v2915 = vadd.f32 %v2901, %v2914
    %v2916 = vpop.f32.mrf.mxu0
    %v2917 = vadd.f32 %v2903, %v2916
    %2918 = vdwg.mxu0
    %2919 = vmatpush.bf16.msra.mxu0 %v2450
    %2920 = vmatpush.bf16.msra.mxu0 %v2446
    %2921 = vmatpush.bf16.msra.mxu0 %v2442
    %2922 = vmatpush.bf16.msra.mxu0 %v2438
    %2923 = vmatpush.bf16.msra.mxu0 %v2434
    %2924 = vmatpush.bf16.msra.mxu0 %v2430
    %2925 = vmatpush.bf16.msra.mxu0 %v2426
    %2926 = vmatpush.bf16.msra.mxu0 %v2422
    %2927 = vmatmul.bf16.gmra.mxu0 %v1162
    %v2928 = vpop.f32.mrf.mxu0
    %v2929 = vadd.f32 %v2915, %v2928
    %v2930 = vpop.f32.mrf.mxu0
    %v2931 = vadd.f32 %v2917, %v2930
    %2932 = vdwg.mxu0
    %2933 = vmatpush.bf16.msra.mxu0 %v2227
    %2934 = vmatpush.bf16.msra.mxu0 %v2223
    %2935 = vmatpush.bf16.msra.mxu0 %v2219
    %2936 = vmatpush.bf16.msra.mxu0 %v2215
    %2937 = vmatpush.bf16.msra.mxu0 %v2211
    %2938 = vmatpush.bf16.msra.mxu0 %v2207
    %2939 = vmatpush.bf16.msra.mxu0 %v2203
    %2940 = vmatpush.bf16.msra.mxu0 %v2199
    %2941 = vmatmul.bf16.gmra.mxu0 %v1155
    %v2942 = vpop.f32.mrf.mxu0
    %v2943 = vadd.f32 %v1423, %v2942
    %v2944 = vpop.f32.mrf.mxu0
    %v2945 = vadd.f32 %v1423, %v2944
    %2946 = vdwg.mxu0
    %2947 = vmatpush.bf16.msra.mxu0 %v2259
    %2948 = vmatpush.bf16.msra.mxu0 %v2255
    %2949 = vmatpush.bf16.msra.mxu0 %v2251
    %2950 = vmatpush.bf16.msra.mxu0 %v2247
    %2951 = vmatpush.bf16.msra.mxu0 %v2243
    %2952 = vmatpush.bf16.msra.mxu0 %v2239
    %2953 = vmatpush.bf16.msra.mxu0 %v2235
    %2954 = vmatpush.bf16.msra.mxu0 %v2231
    %2955 = vmatmul.bf16.gmra.mxu0 %v1156
    %v2956 = vpop.f32.mrf.mxu0
    %v2957 = vadd.f32 %v2943, %v2956
    %v2958 = vpop.f32.mrf.mxu0
    %v2959 = vadd.f32 %v2945, %v2958
    %2960 = vdwg.mxu0
    %2961 = vmatpush.bf16.msra.mxu0 %v2291
    %2962 = vmatpush.bf16.msra.mxu0 %v2287
    %2963 = vmatpush.bf16.msra.mxu0 %v2283
    %2964 = vmatpush.bf16.msra.mxu0 %v2279
    %2965 = vmatpush.bf16.msra.mxu0 %v2275
    %2966 = vmatpush.bf16.msra.mxu0 %v2271
    %2967 = vmatpush.bf16.msra.mxu0 %v2267
    %2968 = vmatpush.bf16.msra.mxu0 %v2263
    %2969 = vmatmul.bf16.gmra.mxu0 %v1157
    %v2970 = vpop.f32.mrf.mxu0
    %v2971 = vadd.f32 %v2957, %v2970
    %v2972 = vpop.f32.mrf.mxu0
    %v2973 = vadd.f32 %v2959, %v2972
    %2974 = vdwg.mxu0
    %2975 = vmatpush.bf16.msra.mxu0 %v2323
    %2976 = vmatpush.bf16.msra.mxu0 %v2319
    %2977 = vmatpush.bf16.msra.mxu0 %v2315
    %2978 = vmatpush.bf16.msra.mxu0 %v2311
    %2979 = vmatpush.bf16.msra.mxu0 %v2307
    %2980 = vmatpush.bf16.msra.mxu0 %v2303
    %2981 = vmatpush.bf16.msra.mxu0 %v2299
    %2982 = vmatpush.bf16.msra.mxu0 %v2295
    %2983 = vmatmul.bf16.gmra.mxu0 %v1158
    %v2984 = vpop.f32.mrf.mxu0
    %v2985 = vadd.f32 %v2971, %v2984
    %v2986 = vpop.f32.mrf.mxu0
    %v2987 = vadd.f32 %v2973, %v2986
    %2988 = vdwg.mxu0
    %2989 = vmatpush.bf16.msra.mxu0 %v2355
    %2990 = vmatpush.bf16.msra.mxu0 %v2351
    %2991 = vmatpush.bf16.msra.mxu0 %v2347
    %2992 = vmatpush.bf16.msra.mxu0 %v2343
    %2993 = vmatpush.bf16.msra.mxu0 %v2339
    %2994 = vmatpush.bf16.msra.mxu0 %v2335
    %2995 = vmatpush.bf16.msra.mxu0 %v2331
    %2996 = vmatpush.bf16.msra.mxu0 %v2327
    %2997 = vmatmul.bf16.gmra.mxu0 %v1159
    %v2998 = vpop.f32.mrf.mxu0
    %v2999 = vadd.f32 %v2985, %v2998
    %v3000 = vpop.f32.mrf.mxu0
    %v3001 = vadd.f32 %v2987, %v3000
    %3002 = vdwg.mxu0
    %3003 = vmatpush.bf16.msra.mxu0 %v2387
    %3004 = vmatpush.bf16.msra.mxu0 %v2383
    %3005 = vmatpush.bf16.msra.mxu0 %v2379
    %3006 = vmatpush.bf16.msra.mxu0 %v2375
    %3007 = vmatpush.bf16.msra.mxu0 %v2371
    %3008 = vmatpush.bf16.msra.mxu0 %v2367
    %3009 = vmatpush.bf16.msra.mxu0 %v2363
    %3010 = vmatpush.bf16.msra.mxu0 %v2359
    %3011 = vmatmul.bf16.gmra.mxu0 %v1160
    %v3012 = vpop.f32.mrf.mxu0
    %v3013 = vadd.f32 %v2999, %v3012
    %v3014 = vpop.f32.mrf.mxu0
    %v3015 = vadd.f32 %v3001, %v3014
    %3016 = vdwg.mxu0
    %3017 = vmatpush.bf16.msra.mxu0 %v2419
    %3018 = vmatpush.bf16.msra.mxu0 %v2415
    %3019 = vmatpush.bf16.msra.mxu0 %v2411
    %3020 = vmatpush.bf16.msra.mxu0 %v2407
    %3021 = vmatpush.bf16.msra.mxu0 %v2403
    %3022 = vmatpush.bf16.msra.mxu0 %v2399
    %3023 = vmatpush.bf16.msra.mxu0 %v2395
    %3024 = vmatpush.bf16.msra.mxu0 %v2391
    %3025 = vmatmul.bf16.gmra.mxu0 %v1161
    %v3026 = vpop.f32.mrf.mxu0
    %v3027 = vadd.f32 %v3013, %v3026
    %v3028 = vpop.f32.mrf.mxu0
    %v3029 = vadd.f32 %v3015, %v3028
    %3030 = vdwg.mxu0
    %3031 = vmatpush.bf16.msra.mxu0 %v2451
    %3032 = vmatpush.bf16.msra.mxu0 %v2447
    %3033 = vmatpush.bf16.msra.mxu0 %v2443
    %3034 = vmatpush.bf16.msra.mxu0 %v2439
    %3035 = vmatpush.bf16.msra.mxu0 %v2435
    %3036 = vmatpush.bf16.msra.mxu0 %v2431
    %3037 = vmatpush.bf16.msra.mxu0 %v2427
    %3038 = vmatpush.bf16.msra.mxu0 %v2423
    %3039 = vmatmul.bf16.gmra.mxu0 %v1162
    %v3040 = vpop.f32.mrf.mxu0
    %v3041 = vadd.f32 %v3027, %v3040
    %v3042 = vpop.f32.mrf.mxu0
    %v3043 = vadd.f32 %v3029, %v3042
    %3044 = vdwg.mxu0
    %3045 = vmatpush.bf16.msra.mxu0 %v2228
    %3046 = vmatpush.bf16.msra.mxu0 %v2224
    %3047 = vmatpush.bf16.msra.mxu0 %v2220
    %3048 = vmatpush.bf16.msra.mxu0 %v2216
    %3049 = vmatpush.bf16.msra.mxu0 %v2212
    %3050 = vmatpush.bf16.msra.mxu0 %v2208
    %3051 = vmatpush.bf16.msra.mxu0 %v2204
    %3052 = vmatpush.bf16.msra.mxu0 %v2200
    %3053 = vmatmul.bf16.gmra.mxu0 %v1155
    %v3054 = vpop.f32.mrf.mxu0
    %v3055 = vadd.f32 %v1424, %v3054
    %v3056 = vpop.f32.mrf.mxu0
    %v3057 = vadd.f32 %v1424, %v3056
    %3058 = vdwg.mxu0
    %3059 = vmatpush.bf16.msra.mxu0 %v2260
    %3060 = vmatpush.bf16.msra.mxu0 %v2256
    %3061 = vmatpush.bf16.msra.mxu0 %v2252
    %3062 = vmatpush.bf16.msra.mxu0 %v2248
    %3063 = vmatpush.bf16.msra.mxu0 %v2244
    %3064 = vmatpush.bf16.msra.mxu0 %v2240
    %3065 = vmatpush.bf16.msra.mxu0 %v2236
    %3066 = vmatpush.bf16.msra.mxu0 %v2232
    %3067 = vmatmul.bf16.gmra.mxu0 %v1156
    %v3068 = vpop.f32.mrf.mxu0
    %v3069 = vadd.f32 %v3055, %v3068
    %v3070 = vpop.f32.mrf.mxu0
    %v3071 = vadd.f32 %v3057, %v3070
    %3072 = vdwg.mxu0
    %3073 = vmatpush.bf16.msra.mxu0 %v2292
    %3074 = vmatpush.bf16.msra.mxu0 %v2288
    %3075 = vmatpush.bf16.msra.mxu0 %v2284
    %3076 = vmatpush.bf16.msra.mxu0 %v2280
    %3077 = vmatpush.bf16.msra.mxu0 %v2276
    %3078 = vmatpush.bf16.msra.mxu0 %v2272
    %3079 = vmatpush.bf16.msra.mxu0 %v2268
    %3080 = vmatpush.bf16.msra.mxu0 %v2264
    %3081 = vmatmul.bf16.gmra.mxu0 %v1157
    %v3082 = vpop.f32.mrf.mxu0
    %v3083 = vadd.f32 %v3069, %v3082
    %v3084 = vpop.f32.mrf.mxu0
    %v3085 = vadd.f32 %v3071, %v3084
    %3086 = vdwg.mxu0
    %3087 = vmatpush.bf16.msra.mxu0 %v2324
    %3088 = vmatpush.bf16.msra.mxu0 %v2320
    %3089 = vmatpush.bf16.msra.mxu0 %v2316
    %3090 = vmatpush.bf16.msra.mxu0 %v2312
    %3091 = vmatpush.bf16.msra.mxu0 %v2308
    %3092 = vmatpush.bf16.msra.mxu0 %v2304
    %3093 = vmatpush.bf16.msra.mxu0 %v2300
    %3094 = vmatpush.bf16.msra.mxu0 %v2296
    %3095 = vmatmul.bf16.gmra.mxu0 %v1158
    %v3096 = vpop.f32.mrf.mxu0
    %v3097 = vadd.f32 %v3083, %v3096
    %v3098 = vpop.f32.mrf.mxu0
    %v3099 = vadd.f32 %v3085, %v3098
    %3100 = vdwg.mxu0
    %3101 = vmatpush.bf16.msra.mxu0 %v2356
    %3102 = vmatpush.bf16.msra.mxu0 %v2352
    %3103 = vmatpush.bf16.msra.mxu0 %v2348
    %3104 = vmatpush.bf16.msra.mxu0 %v2344
    %3105 = vmatpush.bf16.msra.mxu0 %v2340
    %3106 = vmatpush.bf16.msra.mxu0 %v2336
    %3107 = vmatpush.bf16.msra.mxu0 %v2332
    %3108 = vmatpush.bf16.msra.mxu0 %v2328
    %3109 = vmatmul.bf16.gmra.mxu0 %v1159
    %v3110 = vpop.f32.mrf.mxu0
    %v3111 = vadd.f32 %v3097, %v3110
    %v3112 = vpop.f32.mrf.mxu0
    %v3113 = vadd.f32 %v3099, %v3112
    %3114 = vdwg.mxu0
    %3115 = vmatpush.bf16.msra.mxu0 %v2388
    %3116 = vmatpush.bf16.msra.mxu0 %v2384
    %3117 = vmatpush.bf16.msra.mxu0 %v2380
    %3118 = vmatpush.bf16.msra.mxu0 %v2376
    %3119 = vmatpush.bf16.msra.mxu0 %v2372
    %3120 = vmatpush.bf16.msra.mxu0 %v2368
    %3121 = vmatpush.bf16.msra.mxu0 %v2364
    %3122 = vmatpush.bf16.msra.mxu0 %v2360
    %3123 = vmatmul.bf16.gmra.mxu0 %v1160
    %v3124 = vpop.f32.mrf.mxu0
    %v3125 = vadd.f32 %v3111, %v3124
    %v3126 = vpop.f32.mrf.mxu0
    %v3127 = vadd.f32 %v3113, %v3126
    %3128 = vdwg.mxu0
    %3129 = vmatpush.bf16.msra.mxu0 %v2420
    %3130 = vmatpush.bf16.msra.mxu0 %v2416
    %3131 = vmatpush.bf16.msra.mxu0 %v2412
    %3132 = vmatpush.bf16.msra.mxu0 %v2408
    %3133 = vmatpush.bf16.msra.mxu0 %v2404
    %3134 = vmatpush.bf16.msra.mxu0 %v2400
    %3135 = vmatpush.bf16.msra.mxu0 %v2396
    %3136 = vmatpush.bf16.msra.mxu0 %v2392
    %3137 = vmatmul.bf16.gmra.mxu0 %v1161
    %v3138 = vpop.f32.mrf.mxu0
    %v3139 = vadd.f32 %v3125, %v3138
    %v3140 = vpop.f32.mrf.mxu0
    %v3141 = vadd.f32 %v3127, %v3140
    %3142 = vdwg.mxu0
    %3143 = vmatpush.bf16.msra.mxu0 %v2452
    %3144 = vmatpush.bf16.msra.mxu0 %v2448
    %3145 = vmatpush.bf16.msra.mxu0 %v2444
    %3146 = vmatpush.bf16.msra.mxu0 %v2440
    %3147 = vmatpush.bf16.msra.mxu0 %v2436
    %3148 = vmatpush.bf16.msra.mxu0 %v2432
    %3149 = vmatpush.bf16.msra.mxu0 %v2428
    %3150 = vmatpush.bf16.msra.mxu0 %v2424
    %3151 = vmatmul.bf16.gmra.mxu0 %v1162
    %v3152 = vpop.f32.mrf.mxu0
    %v3153 = vadd.f32 %v3139, %v3152
    %v3154 = vpop.f32.mrf.mxu0
    %v3155 = vadd.f32 %v3141, %v3154
    %3156 = vdwg.mxu0
    %v3157 = vmax.f32 %v2817, 0.0
    %v3158 = vmax.f32 %v2929, 0.0
    %v3159 = vmax.f32 %v3041, 0.0
    %v3160 = vmax.f32 %v3153, 0.0
    %v3161 = vmax.f32 %v2819, 0.0
    %v3162 = vmax.f32 %v2931, 0.0
    %v3163 = vmax.f32 %v3043, 0.0
    %v3164 = vmax.f32 %v3155, 0.0
    %v3165 = vpack.c.bf16 %v3161, %v3157
    %v3166 = vpack.c.bf16 %v3162, %v3158
    %v3167 = vpack.c.bf16 %v3163, %v3159
    %v3168 = vpack.c.bf16 %v3164, %v3160
    %v3169 = vld [vmem:[#allocation11] sm:$0xf]
    %v3170 = vld [vmem:[#allocation11 + $0x4] sm:$0xf]
    %v3171 = vld [vmem:[#allocation11 + $0x8] sm:$0xf]
    %v3172 = vld [vmem:[#allocation11 + $0xc] sm:$0xf]
    %v3173 = vld [vmem:[#allocation11 + $0x10] sm:$0xf]
    %v3174 = vld [vmem:[#allocation11 + $0x14] sm:$0xf]
    %v3175 = vld [vmem:[#allocation11 + $0x18] sm:$0xf]
    %v3176 = vld [vmem:[#allocation11 + $0x1c] sm:$0xf]
    %v3177 = vld [vmem:[#allocation11 + $0x20] sm:$0xf]
    %v3178 = vld [vmem:[#allocation11 + $0x24] sm:$0xf]
    %v3179 = vld [vmem:[#allocation11 + $0x28] sm:$0xf]
    %v3180 = vld [vmem:[#allocation11 + $0x2c] sm:$0xf]
    %v3181 = vld [vmem:[#allocation11 + $0x30] sm:$0xf]
    %v3182 = vld [vmem:[#allocation11 + $0x34] sm:$0xf]
    %v3183 = vld [vmem:[#allocation11 + $0x38] sm:$0xf]
    %v3184 = vld [vmem:[#allocation11 + $0x3c] sm:$0xf]
    %v3185 = vld [vmem:[#allocation11 + $0x40] sm:$0xf]
    %v3186 = vld [vmem:[#allocation11 + $0x44] sm:$0xf]
    %v3187 = vld [vmem:[#allocation11 + $0x48] sm:$0xf]
    %v3188 = vld [vmem:[#allocation11 + $0x4c] sm:$0xf]
    %v3189 = vld [vmem:[#allocation11 + $0x50] sm:$0xf]
    %v3190 = vld [vmem:[#allocation11 + $0x54] sm:$0xf]
    %v3191 = vld [vmem:[#allocation11 + $0x58] sm:$0xf]
    %v3192 = vld [vmem:[#allocation11 + $0x5c] sm:$0xf]
    %v3193 = vld [vmem:[#allocation11 + $0x60] sm:$0xf]
    %v3194 = vld [vmem:[#allocation11 + $0x64] sm:$0xf]
    %v3195 = vld [vmem:[#allocation11 + $0x68] sm:$0xf]
    %v3196 = vld [vmem:[#allocation11 + $0x6c] sm:$0xf]
    %v3197 = vld [vmem:[#allocation11 + $0x70] sm:$0xf]
    %v3198 = vld [vmem:[#allocation11 + $0x74] sm:$0xf]
    %v3199 = vld [vmem:[#allocation11 + $0x78] sm:$0xf]
    %v3200 = vld [vmem:[#allocation11 + $0x7c] sm:$0xf]
    %v3201 = vld [vmem:[#allocation11 + $0x80] sm:$0xf]
    %v3202 = vld [vmem:[#allocation11 + $0x84] sm:$0xf]
    %v3203 = vld [vmem:[#allocation11 + $0x88] sm:$0xf]
    %v3204 = vld [vmem:[#allocation11 + $0x8c] sm:$0xf]
    %v3205 = vld [vmem:[#allocation11 + $0x90] sm:$0xf]
    %v3206 = vld [vmem:[#allocation11 + $0x94] sm:$0xf]
    %v3207 = vld [vmem:[#allocation11 + $0x98] sm:$0xf]
    %v3208 = vld [vmem:[#allocation11 + $0x9c] sm:$0xf]
    %v3209 = vld [vmem:[#allocation11 + $0xa0] sm:$0xf]
    %v3210 = vld [vmem:[#allocation11 + $0xa4] sm:$0xf]
    %v3211 = vld [vmem:[#allocation11 + $0xa8] sm:$0xf]
    %v3212 = vld [vmem:[#allocation11 + $0xac] sm:$0xf]
    %v3213 = vld [vmem:[#allocation11 + $0xb0] sm:$0xf]
    %v3214 = vld [vmem:[#allocation11 + $0xb4] sm:$0xf]
    %v3215 = vld [vmem:[#allocation11 + $0xb8] sm:$0xf]
    %v3216 = vld [vmem:[#allocation11 + $0xbc] sm:$0xf]
    %v3217 = vld [vmem:[#allocation11 + $0xc0] sm:$0xf]
    %v3218 = vld [vmem:[#allocation11 + $0xc4] sm:$0xf]
    %v3219 = vld [vmem:[#allocation11 + $0xc8] sm:$0xf]
    %v3220 = vld [vmem:[#allocation11 + $0xcc] sm:$0xf]
    %v3221 = vld [vmem:[#allocation11 + $0xd0] sm:$0xf]
    %v3222 = vld [vmem:[#allocation11 + $0xd4] sm:$0xf]
    %v3223 = vld [vmem:[#allocation11 + $0xd8] sm:$0xf]
    %v3224 = vld [vmem:[#allocation11 + $0xdc] sm:$0xf]
    %v3225 = vld [vmem:[#allocation11 + $0xe0] sm:$0xf]
    %v3226 = vld [vmem:[#allocation11 + $0xe4] sm:$0xf]
    %v3227 = vld [vmem:[#allocation11 + $0xe8] sm:$0xf]
    %v3228 = vld [vmem:[#allocation11 + $0xec] sm:$0xf]
    %v3229 = vld [vmem:[#allocation11 + $0xf0] sm:$0xf]
    %v3230 = vld [vmem:[#allocation11 + $0xf4] sm:$0xf]
    %v3231 = vld [vmem:[#allocation11 + $0xf8] sm:$0xf]
    %v3232 = vld [vmem:[#allocation11 + $0xfc] sm:$0xf]
    %v3233 = vld [vmem:[%s6] sm:$0x1]
    %v3235 = vperm.slane %v3233, 0
    %v3301 = vunpack.c.l.b16 %v3169
    %v3302 = vunpack.c.l.b16 %v3170
    %v3303 = vunpack.c.l.b16 %v3171
    %v3304 = vunpack.c.l.b16 %v3172
    %v3305 = vunpack.c.l.b16 %v3173
    %v3306 = vunpack.c.l.b16 %v3174
    %v3307 = vunpack.c.l.b16 %v3175
    %v3308 = vunpack.c.l.b16 %v3176
    %v3309 = vunpack.c.l.b16 %v3177
    %v3310 = vunpack.c.l.b16 %v3178
    %v3311 = vunpack.c.l.b16 %v3179
    %v3312 = vunpack.c.l.b16 %v3180
    %v3313 = vunpack.c.l.b16 %v3181
    %v3314 = vunpack.c.l.b16 %v3182
    %v3315 = vunpack.c.l.b16 %v3183
    %v3316 = vunpack.c.l.b16 %v3184
    %v3317 = vunpack.c.l.b16 %v3185
    %v3318 = vunpack.c.l.b16 %v3186
    %v3319 = vunpack.c.l.b16 %v3187
    %v3320 = vunpack.c.l.b16 %v3188
    %v3321 = vunpack.c.l.b16 %v3189
    %v3322 = vunpack.c.l.b16 %v3190
    %v3323 = vunpack.c.l.b16 %v3191
    %v3324 = vunpack.c.l.b16 %v3192
    %v3325 = vunpack.c.l.b16 %v3193
    %v3326 = vunpack.c.l.b16 %v3194
    %v3327 = vunpack.c.l.b16 %v3195
    %v3328 = vunpack.c.l.b16 %v3196
    %v3329 = vunpack.c.l.b16 %v3197
    %v3330 = vunpack.c.l.b16 %v3198
    %v3331 = vunpack.c.l.b16 %v3199
    %v3332 = vunpack.c.l.b16 %v3200
    %v3333 = vunpack.c.l.b16 %v3201
    %v3334 = vunpack.c.l.b16 %v3202
    %v3335 = vunpack.c.l.b16 %v3203
    %v3336 = vunpack.c.l.b16 %v3204
    %v3337 = vunpack.c.l.b16 %v3205
    %v3338 = vunpack.c.l.b16 %v3206
    %v3339 = vunpack.c.l.b16 %v3207
    %v3340 = vunpack.c.l.b16 %v3208
    %v3341 = vunpack.c.l.b16 %v3209
    %v3342 = vunpack.c.l.b16 %v3210
    %v3343 = vunpack.c.l.b16 %v3211
    %v3344 = vunpack.c.l.b16 %v3212
    %v3345 = vunpack.c.l.b16 %v3213
    %v3346 = vunpack.c.l.b16 %v3214
    %v3347 = vunpack.c.l.b16 %v3215
    %v3348 = vunpack.c.l.b16 %v3216
    %v3349 = vunpack.c.l.b16 %v3217
    %v3350 = vunpack.c.l.b16 %v3218
    %v3351 = vunpack.c.l.b16 %v3219
    %v3352 = vunpack.c.l.b16 %v3220
    %v3353 = vunpack.c.l.b16 %v3221
    %v3354 = vunpack.c.l.b16 %v3222
    %v3355 = vunpack.c.l.b16 %v3223
    %v3356 = vunpack.c.l.b16 %v3224
    %v3357 = vunpack.c.l.b16 %v3225
    %v3358 = vunpack.c.l.b16 %v3226
    %v3359 = vunpack.c.l.b16 %v3227
    %v3360 = vunpack.c.l.b16 %v3228
    %v3361 = vunpack.c.l.b16 %v3229
    %v3362 = vunpack.c.l.b16 %v3230
    %v3363 = vunpack.c.l.b16 %v3231
    %v3364 = vunpack.c.l.b16 %v3232
    %v3365 = vpack.c.b16 %v3302, %v3301
    %v3366 = vpack.c.b16 %v3304, %v3303
    %v3367 = vpack.c.b16 %v3306, %v3305
    %v3368 = vpack.c.b16 %v3308, %v3307
    %v3369 = vpack.c.b16 %v3310, %v3309
    %v3370 = vpack.c.b16 %v3312, %v3311
    %v3371 = vpack.c.b16 %v3314, %v3313
    %v3372 = vpack.c.b16 %v3316, %v3315
    %v3373 = vpack.c.b16 %v3318, %v3317
    %v3374 = vpack.c.b16 %v3320, %v3319
    %v3375 = vpack.c.b16 %v3322, %v3321
    %v3376 = vpack.c.b16 %v3324, %v3323
    %v3377 = vpack.c.b16 %v3326, %v3325
    %v3378 = vpack.c.b16 %v3328, %v3327
    %v3379 = vpack.c.b16 %v3330, %v3329
    %v3380 = vpack.c.b16 %v3332, %v3331
    %v3381 = vpack.c.b16 %v3334, %v3333
    %v3382 = vpack.c.b16 %v3336, %v3335
    %v3383 = vpack.c.b16 %v3338, %v3337
    %v3384 = vpack.c.b16 %v3340, %v3339
    %v3385 = vpack.c.b16 %v3342, %v3341
    %v3386 = vpack.c.b16 %v3344, %v3343
    %v3387 = vpack.c.b16 %v3346, %v3345
    %v3388 = vpack.c.b16 %v3348, %v3347
    %v3389 = vpack.c.b16 %v3350, %v3349
    %v3390 = vpack.c.b16 %v3352, %v3351
    %v3391 = vpack.c.b16 %v3354, %v3353
    %v3392 = vpack.c.b16 %v3356, %v3355
    %v3393 = vpack.c.b16 %v3358, %v3357
    %v3394 = vpack.c.b16 %v3360, %v3359
    %v3395 = vpack.c.b16 %v3362, %v3361
    %v3396 = vpack.c.b16 %v3364, %v3363
    %3429 = vmatpush.bf16.msra.mxu0 %v3372
    %3430 = vmatpush.bf16.msra.mxu0 %v3371
    %3431 = vmatpush.bf16.msra.mxu0 %v3370
    %3432 = vmatpush.bf16.msra.mxu0 %v3369
    %3433 = vmatpush.bf16.msra.mxu0 %v3368
    %3434 = vmatpush.bf16.msra.mxu0 %v3367
    %3435 = vmatpush.bf16.msra.mxu0 %v3366
    %3436 = vmatpush.bf16.msra.mxu0 %v3365
    %3437 = vmatmul.bf16.gmra.mxu0 %v3165
    %v3438 = vpop.f32.mrf.mxu0
    %v3439 = vadd.f32 %v3235, %v3438
    %v3440 = vpop.f32.mrf.mxu0
    %v3441 = vadd.f32 %v3235, %v3440
    %3442 = vdwg.mxu0
    %3443 = vmatpush.bf16.msra.mxu0 %v3380
    %3444 = vmatpush.bf16.msra.mxu0 %v3379
    %3445 = vmatpush.bf16.msra.mxu0 %v3378
    %3446 = vmatpush.bf16.msra.mxu0 %v3377
    %3447 = vmatpush.bf16.msra.mxu0 %v3376
    %3448 = vmatpush.bf16.msra.mxu0 %v3375
    %3449 = vmatpush.bf16.msra.mxu0 %v3374
    %3450 = vmatpush.bf16.msra.mxu0 %v3373
    %3451 = vmatmul.bf16.gmra.mxu0 %v3166
    %v3452 = vpop.f32.mrf.mxu0
    %v3453 = vadd.f32 %v3439, %v3452
    %v3454 = vpop.f32.mrf.mxu0
    %v3455 = vadd.f32 %v3441, %v3454
    %3456 = vdwg.mxu0
    %3457 = vmatpush.bf16.msra.mxu0 %v3388
    %3458 = vmatpush.bf16.msra.mxu0 %v3387
    %3459 = vmatpush.bf16.msra.mxu0 %v3386
    %3460 = vmatpush.bf16.msra.mxu0 %v3385
    %3461 = vmatpush.bf16.msra.mxu0 %v3384
    %3462 = vmatpush.bf16.msra.mxu0 %v3383
    %3463 = vmatpush.bf16.msra.mxu0 %v3382
    %3464 = vmatpush.bf16.msra.mxu0 %v3381
    %3465 = vmatmul.bf16.gmra.mxu0 %v3167
    %v3466 = vpop.f32.mrf.mxu0
    %v3467 = vadd.f32 %v3453, %v3466
    %v3468 = vpop.f32.mrf.mxu0
    %v3469 = vadd.f32 %v3455, %v3468
    %3470 = vdwg.mxu0
    %3471 = vmatpush.bf16.msra.mxu0 %v3396
    %3472 = vmatpush.bf16.msra.mxu0 %v3395
    %3473 = vmatpush.bf16.msra.mxu0 %v3394
    %3474 = vmatpush.bf16.msra.mxu0 %v3393
    %3475 = vmatpush.bf16.msra.mxu0 %v3392
    %3476 = vmatpush.bf16.msra.mxu0 %v3391
    %3477 = vmatpush.bf16.msra.mxu0 %v3390
    %3478 = vmatpush.bf16.msra.mxu0 %v3389
    %3479 = vmatmul.bf16.gmra.mxu0 %v3168
    %v3480 = vpop.f32.mrf.mxu0
    %v3481 = vadd.f32 %v3467, %v3480
    %v3482 = vpop.f32.mrf.mxu0
    %v3483 = vadd.f32 %v3469, %v3482
    %3484 = vdwg.mxu0
    %3485 = vst [vmem:[#allocation13] sm:$0xff] %v3481
    %3486 = vst [vmem:[#allocation13 + $0x8] sm:$0xff] %v3483
    // Predicated region
    $region54: #{tpu_custom_call.1} parent=1 // pred_check
      _
    $region55: #{tpu_custom_call.1} parent=1 // pred_check_branch
      %3488 = sbr.rel (0) target = $region57
    $region56: #{tpu_custom_call.1} parent=1 // pred_region
      %3490 = vsyncadd [#allocation4], 0
      %s3491 = sshll.u32 [#allocation13], 4
      %s3492 = int_to_ptr.vmem [resolvable:$true] %s3491
      %s3493 = sshll.u32 %s7, 4
      %s3494 = int_to_ptr.hbm [resolvable:$true] %s3493
      %3499 = dma.vmem_to_hbm [thread:$0]  %s3492, 256, %s3494, [#allocation4], 128, 128, 8
    $region57: #{tpu_custom_call.1} parent=1 // pred_fallthru
      _
    // Predicated region
    $region58: #{tpu_custom_call.1} parent=1 // pred_check
      _
    $region59: #{tpu_custom_call.1} parent=1 // pred_check_branch
      %3501 = sbr.rel (0) target = $region61
    $region60: #{tpu_custom_call.1} parent=1 // pred_region
      %3503 = dma.done [#allocation4], 256
    $region61: #{tpu_custom_call.1} parent=1 // pred_fallthru
      _
    %3504 = vsyncpa [#allocation3], 1
    %3505 = vsyncpa [#allocation6], 1
    %3506 = vsyncpa [#allocation9], 1
    %3507 = vsyncpa [#allocation12], 1
    %3508 = vsyncpa [#allocation4], 1

</llo_original>
